<compile_context>
chip_gen: v7x
topology: tpu7x:2x2x1
jax: 0.10.0
libtpu: 0.0.40
codegen_flags: <defaults>
</compile_context>

<pallas_src>
import math
from functools import partial

import jax
import jax.numpy as jnp
from jax import lax
from jax.experimental import pallas as pl
from jax.experimental.pallas import tpu as pltpu


_LN_EPS = 1e-5
_NORM_EPS = 1e-12


# --------------------------------------------------------------------------------------
# Small helpers (row padding / tiling)
# --------------------------------------------------------------------------------------

def _round_up(x, m):
    return ((x + m - 1) // m) * m


def _row_tile(m, max_tile):
    # largest row tile <= max_tile, always a multiple of 8 (f32 sublane granularity)
    return min(max_tile, _round_up(m, 8))


def _pad_rows(x, mult):
    m = x.shape[0]
    mp = _round_up(m, mult)
    if mp == m:
        return x
    return jnp.pad(x, ((0, mp - m),) + ((0, 0),) * (x.ndim - 1))


# --------------------------------------------------------------------------------------
# Generic row-tiled linear (weights pre-cast to bf16 at the JAX level)
# --------------------------------------------------------------------------------------

def _linear_kernel(x_ref, w_ref, b_ref, o_ref, *, relu):
    y = jnp.dot(x_ref[...].astype(jnp.bfloat16), w_ref[...],
                preferred_element_type=jnp.float32) + b_ref[...]
    if relu:
        y = jnp.maximum(y, 0.0)
    o_ref[...] = y.astype(o_ref.dtype)


def linear(x, w, b, relu=False, out_dtype=jnp.float32, row_tile=512):
    """y = x @ w + b over the last axis (leading axes flattened, row-tiled, parallel grid)."""
    lead = x.shape[:-1]
    K = x.shape[-1]
    Nout = w.shape[-1]
    x2 = x.reshape(-1, K)
    M = x2.shape[0]
    tm = _row_tile(M, row_tile)
    x2p = _pad_rows(x2, tm)
    Mp = x2p.shape[0]
    out = pl.pallas_call(
        partial(_linear_kernel, relu=relu),
        out_shape=jax.ShapeDtypeStruct((Mp, Nout), out_dtype),
        grid=(Mp // tm,),
        in_specs=[
            pl.BlockSpec((tm, K), lambda i: (i, 0)),
            pl.BlockSpec((K, Nout), lambda i: (0, 0)),
            pl.BlockSpec((1, Nout), lambda i: (0, 0)),
        ],
        out_specs=pl.BlockSpec((tm, Nout), lambda i: (i, 0)),
        compiler_params=pltpu.CompilerParams(dimension_semantics=("parallel",)),
    )(x2p, w, b.reshape(1, Nout))
    return out[:M].reshape(*lead, Nout)


# --------------------------------------------------------------------------------------
# Fused geometric structure embedding kernel:
#   sinusoidal(d)/proj_d + max_k( sinusoidal(a_k)/proj_a ) in one pass, bf16 output.
# --------------------------------------------------------------------------------------

def _geo_embed_kernel(d_ref, a_ref, div_ref, phase_ref, wd_ref, bd_ref, wa_ref, ba_ref,
                      o_ref, acc_ref):
    kk = pl.program_id(1)

    @pl.when(kk == 0)
    def _():
        acc_ref[...] = jnp.full(acc_ref.shape, -jnp.inf, dtype=acc_ref.dtype)

    # angle embedding for the k-th neighbor: single sin(omega + phase) (cos = sin(x + pi/2))
    omega_a = a_ref[0] * div_ref[...] + phase_ref[...]          # (tm, H)
    emb_a = jnp.sin(omega_a).astype(jnp.bfloat16)
    ya = jnp.dot(emb_a, wa_ref[...], preferred_element_type=jnp.float32) + ba_ref[...]
    acc_ref[...] = jnp.maximum(acc_ref[...], ya)                # max over k (reduction_a = 'max')

    @pl.when(kk == pl.num_programs(1) - 1)
    def _():
        omega_d = d_ref[...] * div_ref[...] + phase_ref[...]
        emb_d = jnp.sin(omega_d).astype(jnp.bfloat16)
        yd = jnp.dot(emb_d, wd_ref[...], preferred_element_type=jnp.float32) + bd_ref[...]
        o_ref[...] = (yd + acc_ref[...]).astype(o_ref.dtype)


def geo_embed_fused(d_idx, a_idx, eparams, hidden_dim, row_tile=512):
    """d_idx: (M, 1) f32, a_idx: (k, M, 1) f32 -> (M, hidden) bf16 fused embedding."""
    M = d_idx.shape[0]
    k = a_idx.shape[0]
    half = hidden_dim // 2
    div_term = jnp.exp(jnp.arange(0, hidden_dim, 2, dtype=jnp.float32)
                       * (-math.log(10000.0) / hidden_dim))
    div_full = jnp.repeat(div_term, 2).reshape(1, hidden_dim)
    phase = jnp.tile(jnp.array([0.0, math.pi / 2.0], jnp.float32), half).reshape(1, hidden_dim)

    tm = _row_tile(M, row_tile)
    d_p = _pad_rows(d_idx, tm)
    Mp = d_p.shape[0]
    a_p = a_idx if Mp == M else jnp.pad(a_idx, ((0, 0), (0, Mp - M), (0, 0)))

    out = pl.pallas_call(
        _geo_embed_kernel,
        out_shape=jax.ShapeDtypeStruct((Mp, hidden_dim), jnp.bfloat16),
        grid=(Mp // tm, k),
        in_specs=[
            pl.BlockSpec((tm, 1), lambda i, kk: (i, 0)),
            pl.BlockSpec((1, tm, 1), lambda i, kk: (kk, i, 0)),
            pl.BlockSpec((1, hidden_dim), lambda i, kk: (0, 0)),
            pl.BlockSpec((1, hidden_dim), lambda i, kk: (0, 0)),
            pl.BlockSpec((hidden_dim, hidden_dim), lambda i, kk: (0, 0)),
            pl.BlockSpec((1, hidden_dim), lambda i, kk: (0, 0)),
            pl.BlockSpec((hidden_dim, hidden_dim), lambda i, kk: (0, 0)),
            pl.BlockSpec((1, hidden_dim), lambda i, kk: (0, 0)),
        ],
        out_specs=pl.BlockSpec((tm, hidden_dim), lambda i, kk: (i, 0)),
        scratch_shapes=[pltpu.VMEM((tm, hidden_dim), jnp.float32)],
        compiler_params=pltpu.CompilerParams(
            dimension_semantics=("parallel", "arbitrary")),
    )(d_p, a_p, div_full, phase,
      eparams["proj_d_w"], eparams["proj_d_b"].reshape(1, hidden_dim),
      eparams["proj_a_w"], eparams["proj_a_b"].reshape(1, hidden_dim))
    return out[:M]


def geometric_structure_embedding(points, eparams, hidden_dim, sigma_d, sigma_a, angle_k):
    """Geometric structure embedding (distance + max-reduced angle embeddings), (N, N, H) bf16."""
    N = points.shape[0]
    k = angle_k
    sq = jnp.sum(points * points, axis=-1)
    sqd = sq[:, None] - 2.0 * (points @ points.T) + sq[None, :]
    dist = jnp.sqrt(jnp.maximum(sqd, 0.0))                 # (N, N)
    d_indices = dist / sigma_d

    # TODO(synk): kNN + point gather is data-dependent indexing; kept as XLA glue (no dense Pallas form).
    _, knn_idx = lax.top_k(-dist, k + 1)                   # smallest distances
    knn_idx = knn_idx[:, 1:]                               # (N, k) exclude self
    knn_points = points[knn_idx]                           # (N, k, 3)
    ref_vectors = knn_points - points[:, None, :]          # (N, k, 3)
    anc_vectors = points[None, :, :] - points[:, None, :]  # (N, N, 3)
    ref_e = jnp.broadcast_to(ref_vectors[:, None, :, :], (N, N, k, 3))
    anc_e = jnp.broadcast_to(anc_vectors[:, :, None, :], (N, N, k, 3))
    sin_values = jnp.linalg.norm(jnp.cross(ref_e, anc_e, axis=-1), axis=-1)
    cos_values = jnp.sum(ref_e * anc_e, axis=-1)
    angles = jnp.arctan2(sin_values, cos_values)           # (N, N, k)
    a_indices = angles * (180.0 / (sigma_a * math.pi))

    emb = geo_embed_fused(
        d_indices.reshape(N * N, 1),
        a_indices.transpose(2, 0, 1).reshape(k, N * N, 1),
        eparams, hidden_dim)
    return emb.reshape(N, N, hidden_dim)                   # bf16


# --------------------------------------------------------------------------------------
# Fused transformer-block kernels (q-proj + MHA [+ RPE] + out-proj + LN1 + FFN + LN2)
# --------------------------------------------------------------------------------------

def _mha_core(q_bf, kv, num_heads, scale, sp_all, qpb_list):
    """Per-head attention with in-kernel (lane) head splitting. Returns (tq, D) f32."""
    D = q_bf.shape[-1]
    dh = D // num_heads
    k = kv[:, :D]
    v = kv[:, D:]
    outs = []
    for h in range(num_heads):
        q_h = q_bf[:, h * dh:(h + 1) * dh]
        k_h = k[:, h * dh:(h + 1) * dh]
        v_h = v[:, h * dh:(h + 1) * dh]
        s = lax.dot_general(q_h, k_h, (((1,), (1,)), ((), ())),
                            preferred_element_type=jnp.float32)          # (tq, Nk)
        if sp_all is not None:
            s = s + sp_all[:, h, :] + qpb_list[h]
        s = s * scale
        s = s - jnp.max(s, axis=-1, keepdims=True)
        e = jnp.exp(s)
        inv = pl.reciprocal(jnp.sum(e, axis=-1, keepdims=True), approx=True)
        attn = (e * inv).astype(jnp.bfloat16)
        outs.append(lax.dot_general(attn, v_h, (((1,), (0,)), ((), ())),
                                    preferred_element_type=jnp.float32))  # (tq, dh)
    return jnp.concatenate(outs, axis=-1)                                 # (tq, D)


def _post_attention(attn_out, xq, wo_ref, bo_ref, g1_ref, b1_ref,
                    w1_ref, bb1_ref, w2_ref, bb2_ref, g2_ref, b2_ref, o_ref, ln_eps):
    # out-proj + residual + LN1
    y = jnp.dot(attn_out.astype(jnp.bfloat16), wo_ref[...],
                preferred_element_type=jnp.float32) + bo_ref[...] + xq
    mu = jnp.mean(y, axis=-1, keepdims=True)
    var = jnp.mean((y - mu) ** 2, axis=-1, keepdims=True)
    x1 = (y - mu) * lax.rsqrt(var + ln_eps) * g1_ref[...] + b1_ref[...]
    # FFN(ReLU) + residual + LN2
    h = jnp.dot(x1.astype(jnp.bfloat16), w1_ref[...],
                preferred_element_type=jnp.float32) + bb1_ref[...]
    h = jnp.maximum(h, 0.0)
    y2 = jnp.dot(h.astype(jnp.bfloat16), w2_ref[...],
                 preferred_element_type=jnp.float32) + bb2_ref[...] + x1
    mu2 = jnp.mean(y2, axis=-1, keepdims=True)
    var2 = jnp.mean((y2 - mu2) ** 2, axis=-1, keepdims=True)
    o_ref[...] = (y2 - mu2) * lax.rsqrt(var2 + ln_eps) * g2_ref[...] + b2_ref[...]


def _attn_block_kernel(xq_ref, kv_ref, wq_ref, bq_ref,
                       wo_ref, bo_ref, g1_ref, b1_ref,
                       w1_ref, bb1_ref, w2_ref, bb2_ref, g2_ref, b2_ref,
                       o_ref, *, num_heads, scale, ln_eps):
    xq = xq_ref[...]
    q = jnp.dot(xq.astype(jnp.bfloat16), wq_ref[...],
                preferred_element_type=jnp.float32) + bq_ref[...]
    attn_out = _mha_core(q.astype(jnp.bfloat16), kv_ref[...], num_heads, scale, None, None)
    _post_attention(attn_out, xq, wo_ref, bo_ref, g1_ref, b1_ref,
                    w1_ref, bb1_ref, w2_ref, bb2_ref, g2_ref, b2_ref, o_ref, ln_eps)


def _rpe_attn_block_kernel(xq_ref, kv_ref, emb_ref, wq_ref, bq_ref, pwr_ref, pb_ref,
                           wo_ref, bo_ref, g1_ref, b1_ref,
                           w1_ref, bb1_ref, w2_ref, bb2_ref, g2_ref, b2_ref,
                           o_ref, *, num_heads, scale, ln_eps):
    xq = xq_ref[...]
    D = xq.shape[-1]
    dh = D // num_heads
    q = jnp.dot(xq.astype(jnp.bfloat16), wq_ref[...],
                preferred_element_type=jnp.float32) + bq_ref[...]
    q_bf = q.astype(jnp.bfloat16)

    pwr = pwr_ref[...]                        # (D, hidden) bf16 : pwr[h*dh+c, j] = p_w[j, h*dh+c]
    pb = pb_ref[...]                          # (1, D) f32
    emb = emb_ref[...]                        # (tq, Nk, hidden) bf16

    # RPE factorization: never materialize p = emb @ p_w.
    #   r[n, h, :] = q_h[n] @ pwr_h          (tiny, (tq, nh, hidden))
    #   sp[n, h, m] = <emb[n, m, :], r[n, h, :]>   -- one batched MXU matmul, K = hidden
    r_list, qpb_list = [], []
    for h in range(num_heads):
        r_h = jnp.dot(q_bf[:, h * dh:(h + 1) * dh], pwr[h * dh:(h + 1) * dh, :],
                      preferred_element_type=jnp.float32)             # (tq, hidden)
        r_list.append(r_h[:, None, :])
        qpb_list.append(jnp.sum(q[:, h * dh:(h + 1) * dh] * pb[:, h * dh:(h + 1) * dh],
                                axis=-1, keepdims=True))              # (tq, 1) bias term <q_h, p_b_h>
    r_all = jnp.concatenate(r_list, axis=1).astype(jnp.bfloat16)      # (tq, nh, hidden)
    sp_all = lax.dot_general(r_all, emb, (((2,), (2,)), ((0,), (0,))),
                             preferred_element_type=jnp.float32)      # (tq, nh, Nk)

    attn_out = _mha_core(q_bf, kv_ref[...], num_heads, scale, sp_all, qpb_list)
    _post_attention(attn_out, xq, wo_ref, bo_ref, g1_ref, b1_ref,
                    w1_ref, bb1_ref, w2_ref, bb2_ref, g2_ref, b2_ref, o_ref, ln_eps)


def attention_block(feats_q, kv, bp, num_heads, emb=None, row_tile=128):
    """One full transformer block (self w/ RPE if emb is not None, else cross) in one pallas_call."""
    N, D = feats_q.shape
    Nk = kv.shape[0]
    dh = D // num_heads
    scale = 1.0 / math.sqrt(dh)
    tm = _row_tile(N, row_tile)
    xq = _pad_rows(feats_q, tm)
    Mp = xq.shape[0]

    common_w = [
        bp["out_w"], bp["out_b"].reshape(1, D),
        bp["ln1_g"].reshape(1, D), bp["ln1_b"].reshape(1, D),
        bp["ffn1_w"], bp["ffn1_b"].reshape(1, -1),
        bp["ffn2_w"], bp["ffn2_b"].reshape(1, D),
        bp["ln2_g"].reshape(1, D), bp["ln2_b"].reshape(1, D),
    ]

    if emb is not None:
        hid = emb.shape[-1]
        embp = _pad_rows(emb, tm)
        args = [xq, kv, embp,
                bp["q_w"], bp["q_b"].reshape(1, D),
                bp["pw_r"], bp["p_b"].reshape(1, D)] + common_w
        in_specs = [
            pl.BlockSpec((tm, D), lambda i: (i, 0)),
            pl.BlockSpec((Nk, 2 * D), lambda i: (0, 0)),
            pl.BlockSpec((tm, Nk, hid), lambda i: (i, 0, 0)),
        ] + [pl.BlockSpec(a.shape, lambda i: (0, 0)) for a in args[3:]]
        kernel = partial(_rpe_attn_block_kernel, num_heads=num_heads, scale=scale, ln_eps=_LN_EPS)
    else:
        args = [xq, kv, bp["q_w"], bp["q_b"].reshape(1, D)] + common_w
        in_specs = [
            pl.BlockSpec((tm, D), lambda i: (i, 0)),
            pl.BlockSpec((Nk, 2 * D), lambda i: (0, 0)),
        ] + [pl.BlockSpec(a.shape, lambda i: (0, 0)) for a in args[2:]]
        kernel = partial(_attn_block_kernel, num_heads=num_heads, scale=scale, ln_eps=_LN_EPS)

    out = pl.pallas_call(
        kernel,
        out_shape=jax.ShapeDtypeStruct((Mp, D), jnp.float32),
        grid=(Mp // tm,),
        in_specs=in_specs,
        out_specs=pl.BlockSpec((tm, D), lambda i: (i, 0)),
        compiler_params=pltpu.CompilerParams(dimension_semantics=("parallel",)),
    )(*args)
    return out[:N]


# --------------------------------------------------------------------------------------
# Final out-projection + L2 normalize (fused)
# --------------------------------------------------------------------------------------

def _proj_l2norm_kernel(x_ref, w_ref, b_ref, o_ref, *, eps):
    y = jnp.dot(x_ref[...].astype(jnp.bfloat16), w_ref[...],
                preferred_element_type=jnp.float32) + b_ref[...]
    inv = lax.rsqrt(jnp.maximum(jnp.sum(y * y, axis=-1, keepdims=True), eps * eps))
    o_ref[...] = y * inv


def proj_l2_normalize(x, w, b, row_tile=256):
    M, K = x.shape
    D = w.shape[-1]
    tm = _row_tile(M, row_tile)
    xp = _pad_rows(x, tm)
    Mp = xp.shape[0]
    out = pl.pallas_call(
        partial(_proj_l2norm_kernel, eps=_NORM_EPS),
        out_shape=jax.ShapeDtypeStruct((Mp, D), jnp.float32),
        grid=(Mp // tm,),
        in_specs=[
            pl.BlockSpec((tm, K), lambda i: (i, 0)),
            pl.BlockSpec((K, D), lambda i: (0, 0)),
            pl.BlockSpec((1, D), lambda i: (0, 0)),
        ],
        out_specs=pl.BlockSpec((tm, D), lambda i: (i, 0)),
        compiler_params=pltpu.CompilerParams(dimension_semantics=("parallel",)),
    )(xp, w, b.reshape(1, D))
    return out[:M]


# --------------------------------------------------------------------------------------
# Full GeoTransformer forward
# --------------------------------------------------------------------------------------

def geotransformer_forward(data_dict, params, cfg):
    feats = data_dict["features"]
    ref_length_c = int(data_dict["lengths"][-1][0])
    points_c = data_dict["points"][-1]
    ref_points_c = points_c[:ref_length_c]
    src_points_c = points_c[ref_length_c:]

    # TODO(synk): KPConvFPN backbone needs data-dependent radius-neighbor / subsampling graph lists
    # from data_dict; it is not reproduced here -- `features` is taken as the coarse output feats_c.
    feats_c = feats

    H = cfg["hidden_dim"]
    nh = cfg["num_heads"]

    ref_embed = geometric_structure_embedding(
        ref_points_c, params["embed"], H, cfg["sigma_d"], cfg["sigma_a"], cfg["angle_k"])
    src_embed = geometric_structure_embedding(
        src_points_c, params["embed"], H, cfg["sigma_d"], cfg["sigma_a"], cfg["angle_k"])

    # in_proj is row-wise with shared weights -> run once on the concatenated clouds.
    f_all = linear(feats_c, params["in_proj_w"], params["in_proj_b"])
    ref_f = f_all[:ref_length_c]
    src_f = f_all[ref_length_c:]
    n_ref = ref_f.shape[0]

    for i, blk in enumerate(cfg["blocks"]):
        bp = params["blocks"][i]
        if blk == "self":
            # self blocks of ref/src are independent -> one fused KV projection on both clouds.
            kv_all = linear(jnp.concatenate([ref_f, src_f], axis=0),
                            bp["kv_w"], bp["kv_b"], out_dtype=jnp.bfloat16)
            ref_f = attention_block(ref_f, kv_all[:n_ref], bp, nh, emb=ref_embed)
            src_f = attention_block(src_f, kv_all[n_ref:], bp, nh, emb=src_embed)
        else:  # 'cross' (sequential, matching the non-parallel RPEConditionalTransformer)
            kv_src = linear(src_f, bp["kv_w"], bp["kv_b"], out_dtype=jnp.bfloat16)
            ref_f = attention_block(ref_f, kv_src, bp, nh)
            kv_ref = linear(ref_f, bp["kv_w"], bp["kv_b"], out_dtype=jnp.bfloat16)
            src_f = attention_block(src_f, kv_ref, bp, nh)

    # final out-proj + F.normalize, shared weights -> single fused call on concatenated clouds.
    norm_all = proj_l2_normalize(jnp.concatenate([ref_f, src_f], axis=0),
                                 params["out_proj_w"], params["out_proj_b"])
    return norm_all[:n_ref], norm_all[n_ref:]


# --------------------------------------------------------------------------------------
# Deterministic parameter init (weights pre-cast to bf16 once; biases / LN params in f32)
# --------------------------------------------------------------------------------------

def init_params(key, cfg):
    keys = iter(jax.random.split(key, 256))
    H = cfg["hidden_dim"]

    def lin(i, o):
        k = next(keys)
        w = jax.random.normal(k, (i, o), jnp.float32) * (1.0 / math.sqrt(i))
        return w, jnp.zeros((o,), jnp.float32)

    params = {}
    w, b = lin(cfg["input_dim"], H)
    params["in_proj_w"], params["in_proj_b"] = w.astype(jnp.bfloat16), b
    w, b = lin(H, cfg["output_dim"])
    params["out_proj_w"], params["out_proj_b"] = w.astype(jnp.bfloat16), b

    emb = {}
    w, b = lin(H, H)
    emb["proj_d_w"], emb["proj_d_b"] = w.astype(jnp.bfloat16), b
    w, b = lin(H, H)
    emb["proj_a_w"], emb["proj_a_b"] = w.astype(jnp.bfloat16), b
    params["embed"] = emb

    blocks = []
    for blk in cfg["blocks"]:
        bp = {}
        qw, qb = lin(H, H)
        kw, kb = lin(H, H)
        vw, vb = lin(H, H)
        bp["q_w"] = qw.astype(jnp.bfloat16)
        bp["q_b"] = qb
        bp["kv_w"] = jnp.concatenate([kw, vw], axis=1).astype(jnp.bfloat16)   # fused (H, 2H)
        bp["kv_b"] = jnp.concatenate([kb, vb], axis=0)
        if blk == "self":
            pw, pb = lin(H, H)                       # RPE projection (hidden -> D)
            bp["pw_r"] = pw.T.astype(jnp.bfloat16)   # (D, hidden) for the q-folded factorization
            bp["p_b"] = pb
        ow, ob = lin(H, H)
        bp["out_w"], bp["out_b"] = ow.astype(jnp.bfloat16), ob
        bp["ln1_g"] = jnp.ones((H,), jnp.float32)
        bp["ln1_b"] = jnp.zeros((H,), jnp.float32)
        w1, b1 = lin(H, 2 * H)
        w2, b2 = lin(2 * H, H)
        bp["ffn1_w"], bp["ffn1_b"] = w1.astype(jnp.bfloat16), b1
        bp["ffn2_w"], bp["ffn2_b"] = w2.astype(jnp.bfloat16), b2
        bp["ln2_g"] = jnp.ones((H,), jnp.float32)
        bp["ln2_b"] = jnp.zeros((H,), jnp.float32)
        blocks.append(bp)
    params["blocks"] = blocks
    return params


# --------------------------------------------------------------------------------------
# Main
# --------------------------------------------------------------------------------------

if __name__ == "__main__":
    cfg = dict(
        input_dim=32, output_dim=32, hidden_dim=32, num_heads=4,
        blocks=("self", "cross", "self", "cross"),
        sigma_d=0.2, sigma_a=15.0, angle_k=3,
    )
    n_ref, n_src = 12, 20

    key = jax.random.PRNGKey(0)
    k_pts, k_feat, k_param = jax.random.split(key, 3)

    points_c = jax.random.uniform(k_pts, (n_ref + n_src, 3), jnp.float32)
    feats_c = jax.random.normal(k_feat, (n_ref + n_src, cfg["input_dim"]), jnp.float32)

    data_dict = {
        "features": feats_c,
        "points": [points_c],
        "lengths": [jnp.array([n_ref, n_src], jnp.int32)],
    }

    params = init_params(k_param, cfg)

    ref_norm, src_norm = geotransformer_forward(data_dict, params, cfg)
    jax.block_until_ready((ref_norm, src_norm))

    assert ref_norm.shape == (n_ref, cfg["output_dim"])
    assert src_norm.shape == (n_src, cfg["output_dim"])
    print("KERNEL_OK")
</pallas_src>

<mosaic_0001>
module attributes {stable_mosaic.version = 11 : i64} {
  func.func @_geo_embed_kernel(%arg0: i32, %arg1: i32, %arg2: memref<144x1xf32, #tpu.memory_space<vmem>>, %arg3: memref<1x144x1xf32, #tpu.memory_space<vmem>>, %arg4: memref<1x32xf32, #tpu.memory_space<vmem>>, %arg5: memref<1x32xf32, #tpu.memory_space<vmem>>, %arg6: memref<32x32xbf16, #tpu.memory_space<vmem>>, %arg7: memref<1x32xf32, #tpu.memory_space<vmem>>, %arg8: memref<32x32xbf16, #tpu.memory_space<vmem>>, %arg9: memref<1x32xf32, #tpu.memory_space<vmem>>, %arg10: memref<144x32xbf16, #tpu.memory_space<vmem>>, %arg11: memref<144x32xf32, #tpu.memory_space<vmem>>) attributes {dimension_semantics = [#tpu.dimension_semantics<parallel>, #tpu.dimension_semantics<arbitrary>], iteration_bounds = array<i64: 1, 3>, scalar_prefetch = 0 : i64, scratch_operands = 1 : i64, tpu.core_type = #tpu.core_type<tc>, window_params = [{transform_indices = @transform_0, window_bounds = array<i64: 144, 1>}, {transform_indices = @transform_1, window_bounds = array<i64: 1, 144, 1>}, {pipeline_mode = #tpu.pipeline_mode<synchronous>, transform_indices = @transform_2, window_bounds = array<i64: 1, 32>}, {pipeline_mode = #tpu.pipeline_mode<synchronous>, transform_indices = @transform_3, window_bounds = array<i64: 1, 32>}, {pipeline_mode = #tpu.pipeline_mode<synchronous>, transform_indices = @transform_4, window_bounds = array<i64: 32, 32>}, {pipeline_mode = #tpu.pipeline_mode<synchronous>, transform_indices = @transform_5, window_bounds = array<i64: 1, 32>}, {pipeline_mode = #tpu.pipeline_mode<synchronous>, transform_indices = @transform_6, window_bounds = array<i64: 32, 32>}, {pipeline_mode = #tpu.pipeline_mode<synchronous>, transform_indices = @transform_7, window_bounds = array<i64: 1, 32>}, {transform_indices = @transform_8, window_bounds = array<i64: 144, 32>}]} {
    %c0_i32 = arith.constant 0 : i32
    %0 = arith.cmpi eq, %arg1, %c0_i32 : i32
    %1 = arith.extui %0 : i1 to i32
    %c0_i32_0 = arith.constant 0 : i32
    %2 = arith.cmpi ne, %1, %c0_i32_0 : i32
    scf.if %2 {
      %cst_16 = arith.constant 0xFF800000 : f32
      %25 = vector.broadcast %cst_16 : f32 to vector<144x32xf32>
      %c0_17 = arith.constant 0 : index
      %c0_18 = arith.constant 0 : index
      %26 = vector.load %arg11[%c0_17, %c0_18] : memref<144x32xf32, #tpu.memory_space<vmem>>, vector<144x32xf32>
      tpu.vector_store %arg11[%c0_17, %c0_18], %25 {strides = array<i32>} : memref<144x32xf32, #tpu.memory_space<vmem>>, vector<144x32xf32>,
    } else {
    }
    %c0 = arith.constant 0 : index
    %c0_1 = arith.constant 0 : index
    %c0_2 = arith.constant 0 : index
    %3 = vector.load %arg3[%c0, %c0_1, %c0_2] : memref<1x144x1xf32, #tpu.memory_space<vmem>>, vector<1x144x1xf32>
    %4 = vector.shape_cast %3 : vector<1x144x1xf32> to vector<144x1xf32>
    %c0_3 = arith.constant 0 : index
    %c0_4 = arith.constant 0 : index
    %5 = vector.load %arg4[%c0_3, %c0_4] : memref<1x32xf32, #tpu.memory_space<vmem>>, vector<1x32xf32>
    %6 = vector.broadcast %4 : vector<144x1xf32> to vector<144x32xf32>
    %7 = vector.broadcast %5 : vector<1x32xf32> to vector<144x32xf32>
    %8 = arith.mulf %6, %7 : vector<144x32xf32>
    %c0_5 = arith.constant 0 : index
    %c0_6 = arith.constant 0 : index
    %9 = vector.load %arg5[%c0_5, %c0_6] : memref<1x32xf32, #tpu.memory_space<vmem>>, vector<1x32xf32>
    %10 = vector.broadcast %9 : vector<1x32xf32> to vector<144x32xf32>
    %11 = arith.addf %8, %10 : vector<144x32xf32>
    %12 = math.sin %11 : vector<144x32xf32>
    %13 = arith.truncf %12 : vector<144x32xf32> to vector<144x32xbf16>
    %c0_7 = arith.constant 0 : index
    %c0_8 = arith.constant 0 : index
    %14 = vector.load %arg8[%c0_7, %c0_8] : memref<32x32xbf16, #tpu.memory_space<vmem>>, vector<32x32xbf16>
    %cst = arith.constant dense<0.000000e+00> : vector<144x32xf32>
    %15 = tpu.matmul %13, %14, %cst {dimension_numbers = #tpu.dot_dimension_numbers<[1], [0], [0], [1], [0, 0, 1, 1], [], []>} : vector<144x32xbf16>, vector<32x32xbf16>, vector<144x32xf32> -> vector<144x32xf32>
    %c0_9 = arith.constant 0 : index
    %c0_10 = arith.constant 0 : index
    %16 = vector.load %arg9[%c0_9, %c0_10] : memref<1x32xf32, #tpu.memory_space<vmem>>, vector<1x32xf32>
    %17 = vector.broadcast %16 : vector<1x32xf32> to vector<144x32xf32>
    %18 = arith.addf %15, %17 : vector<144x32xf32>
    %c0_11 = arith.constant 0 : index
    %c0_12 = arith.constant 0 : index
    %19 = vector.load %arg11[%c0_11, %c0_12] : memref<144x32xf32, #tpu.memory_space<vmem>>, vector<144x32xf32>
    %20 = arith.maximumf %19, %18 : vector<144x32xf32>
    %c0_13 = arith.constant 0 : index
    %c0_14 = arith.constant 0 : index
    %21 = vector.load %arg11[%c0_13, %c0_14] : memref<144x32xf32, #tpu.memory_space<vmem>>, vector<144x32xf32>
    tpu.vector_store %arg11[%c0_13, %c0_14], %20 {strides = array<i32>} : memref<144x32xf32, #tpu.memory_space<vmem>>, vector<144x32xf32>,
    %c2_i32 = arith.constant 2 : i32
    %22 = arith.cmpi eq, %arg1, %c2_i32 : i32
    %23 = arith.extui %22 : i1 to i32
    %c0_i32_15 = arith.constant 0 : i32
    %24 = arith.cmpi ne, %23, %c0_i32_15 : i32
    scf.if %24 {
      %c0_16 = arith.constant 0 : index
      %c0_17 = arith.constant 0 : index
      %25 = vector.load %arg2[%c0_16, %c0_17] : memref<144x1xf32, #tpu.memory_space<vmem>>, vector<144x1xf32>
      %c0_18 = arith.constant 0 : index
      %c0_19 = arith.constant 0 : index
      %26 = vector.load %arg4[%c0_18, %c0_19] : memref<1x32xf32, #tpu.memory_space<vmem>>, vector<1x32xf32>
      %27 = vector.broadcast %25 : vector<144x1xf32> to vector<144x32xf32>
      %28 = vector.broadcast %26 : vector<1x32xf32> to vector<144x32xf32>
      %29 = arith.mulf %27, %28 : vector<144x32xf32>
      %c0_20 = arith.constant 0 : index
      %c0_21 = arith.constant 0 : index
      %30 = vector.load %arg5[%c0_20, %c0_21] : memref<1x32xf32, #tpu.memory_space<vmem>>, vector<1x32xf32>
      %31 = vector.broadcast %30 : vector<1x32xf32> to vector<144x32xf32>
      %32 = arith.addf %29, %31 : vector<144x32xf32>
      %33 = math.sin %32 : vector<144x32xf32>
      %34 = arith.truncf %33 : vector<144x32xf32> to vector<144x32xbf16>
      %c0_22 = arith.constant 0 : index
      %c0_23 = arith.constant 0 : index
      %35 = vector.load %arg6[%c0_22, %c0_23] : memref<32x32xbf16, #tpu.memory_space<vmem>>, vector<32x32xbf16>
      %cst_24 = arith.constant dense<0.000000e+00> : vector<144x32xf32>
      %36 = tpu.matmul %34, %35, %cst_24 {dimension_numbers = #tpu.dot_dimension_numbers<[1], [0], [0], [1], [0, 0, 1, 1], [], []>} : vector<144x32xbf16>, vector<32x32xbf16>, vector<144x32xf32> -> vector<144x32xf32>
      %c0_25 = arith.constant 0 : index
      %c0_26 = arith.constant 0 : index
      %37 = vector.load %arg7[%c0_25, %c0_26] : memref<1x32xf32, #tpu.memory_space<vmem>>, vector<1x32xf32>
      %38 = vector.broadcast %37 : vector<1x32xf32> to vector<144x32xf32>
      %39 = arith.addf %36, %38 : vector<144x32xf32>
      %c0_27 = arith.constant 0 : index
      %c0_28 = arith.constant 0 : index
      %40 = vector.load %arg11[%c0_27, %c0_28] : memref<144x32xf32, #tpu.memory_space<vmem>>, vector<144x32xf32>
      %41 = arith.addf %39, %40 : vector<144x32xf32>
      %42 = arith.truncf %41 : vector<144x32xf32> to vector<144x32xbf16>
      %c0_29 = arith.constant 0 : index
      %c0_30 = arith.constant 0 : index
      %43 = vector.load %arg10[%c0_29, %c0_30] : memref<144x32xbf16, #tpu.memory_space<vmem>>, vector<144x32xbf16>
      tpu.vector_store %arg10[%c0_29, %c0_30], %42 {strides = array<i32>} : memref<144x32xbf16, #tpu.memory_space<vmem>>, vector<144x32xbf16>,
    } else {
    }
    return
  }
  func.func @transform_0(%arg0: i32, %arg1: i32) -> (i32, i32) {
    %c0_i32 = arith.constant 0 : i32
    %c0_i32_0 = arith.constant 0 : i32
    return %arg0, %c0_i32 : i32, i32
  }
  func.func @transform_1(%arg0: i32, %arg1: i32) -> (i32, i32, i32) {
    %c0_i32 = arith.constant 0 : i32
    %c0_i32_0 = arith.constant 0 : i32
    return %arg1, %arg0, %c0_i32 : i32, i32, i32
  }
  func.func @transform_2(%arg0: i32, %arg1: i32) -> (i32, i32) {
    %c0_i32 = arith.constant 0 : i32
    %c0_i32_0 = arith.constant 0 : i32
    %c0_i32_1 = arith.constant 0 : i32
    return %c0_i32, %c0_i32_0 : i32, i32
  }
  func.func @transform_3(%arg0: i32, %arg1: i32) -> (i32, i32) {
    %c0_i32 = arith.constant 0 : i32
    %c0_i32_0 = arith.constant 0 : i32
    %c0_i32_1 = arith.constant 0 : i32
    return %c0_i32, %c0_i32_0 : i32, i32
  }
  func.func @transform_4(%arg0: i32, %arg1: i32) -> (i32, i32) {
    %c0_i32 = arith.constant 0 : i32
    %c0_i32_0 = arith.constant 0 : i32
    %c0_i32_1 = arith.constant 0 : i32
    return %c0_i32, %c0_i32_0 : i32, i32
  }
  func.func @transform_5(%arg0: i32, %arg1: i32) -> (i32, i32) {
    %c0_i32 = arith.constant 0 : i32
    %c0_i32_0 = arith.constant 0 : i32
    %c0_i32_1 = arith.constant 0 : i32
    return %c0_i32, %c0_i32_0 : i32, i32
  }
  func.func @transform_6(%arg0: i32, %arg1: i32) -> (i32, i32) {
    %c0_i32 = arith.constant 0 : i32
    %c0_i32_0 = arith.constant 0 : i32
    %c0_i32_1 = arith.constant 0 : i32
    return %c0_i32, %c0_i32_0 : i32, i32
  }
  func.func @transform_7(%arg0: i32, %arg1: i32) -> (i32, i32) {
    %c0_i32 = arith.constant 0 : i32
    %c0_i32_0 = arith.constant 0 : i32
    %c0_i32_1 = arith.constant 0 : i32
    return %c0_i32, %c0_i32_0 : i32, i32
  }
  func.func @transform_8(%arg0: i32, %arg1: i32) -> (i32, i32) {
    %c0_i32 = arith.constant 0 : i32
    %c0_i32_0 = arith.constant 0 : i32
    return %arg0, %c0_i32 : i32, i32
  }
}

</mosaic_0001>

<llo_original>
// kernel: tpu_custom_call.1
$region0: #{tpu_custom_call.1}
  #allocation0 [shape = 'u32[]', space=smem, size = 0x4, offset = 0x4, fixed_abs, tag = 'smem constant byte address 0x4 - core index']
  #allocation1 [shape = 'u32[144,128]{1,0:T(1,128)}', space=vmem, size = 0x12000, scoped, tag = 'internal scratch']
  #allocation2 [shape = 'f32[144,32]{1,0:T(8,128)}', space=vmem, size = 0x12000, scoped, tag = 'scratch operand']
  %s0 = inlined_call_operand.vmem [shape: f32[144,1], index: 0, kind: input, shape index: {}]
  %s1 = inlined_call_operand.vmem [shape: f32[3,144,1], index: 1, kind: input, shape index: {}]
  %s2 = inlined_call_operand.vmem [shape: f32[1,32], index: 2, kind: input, shape index: {}]
  %s3 = inlined_call_operand.vmem [shape: f32[1,32], index: 3, kind: input, shape index: {}]
  %s4 = inlined_call_operand.vmem [shape: bf16[32,32], index: 4, kind: input, shape index: {}]
  %s5 = inlined_call_operand.vmem [shape: f32[1,32], index: 5, kind: input, shape index: {}]
  %s6 = inlined_call_operand.vmem [shape: bf16[32,32], index: 6, kind: input, shape index: {}]
  %s7 = inlined_call_operand.vmem [shape: f32[1,32], index: 7, kind: input, shape index: {}]
  %s8 = inlined_call_operand.vmem [shape: bf16[144,32], index: 8, kind: output, shape index: {}]
  %s9 = sld [smem:[#allocation0]]
  $region73: #{tpu_custom_call.1} parent=0
    _
  %s11 = ssub.s32 1, %s9
  %s12 = scalar_select 0, %s11, %s9
  loop: start=0, step=1, limit=5
  $region2: #{tpu_custom_call.1} parent=0 // loop_pre_header
    _
  $region3: #{tpu_custom_call.1} parent=0 // loop_header
    %s14 = sphi 0, %s18
    %p15 = scmp.ge.s32.totalorder %s14, 5
    %s21 = sphi 0, %s33
    %s22 = sphi 0, %s29
    %s23 = sphi 0, %s21
    %s24 = sphi 0, %s22
    %s25 = sphi 0, %s23
    %s26 = sphi 0, %s24
    %s36 = sphi 0, %s38
    %s39 = sphi 0, %s36
    %s40 = sphi 0, %s39
    %s56 = sphi 0, %s40
    %s64 = sphi 0, %s66
    %s67 = sphi 0, %s64
    %s68 = sphi 0, %s67
    %s84 = sphi 0, %s68
    %s88 = sphi 0, %s88
    %s90 = sphi 0, %s88
    %s91 = sphi 0, %s90
    %s105 = sphi 0, %s91
    %s109 = sphi 0, %s109
    %s111 = sphi 0, %s109
    %s112 = sphi 0, %s111
    %s126 = sphi 0, %s112
    %s130 = sphi 0, %s130
    %s132 = sphi 0, %s130
    %s133 = sphi 0, %s132
    %s147 = sphi 0, %s133
    %s151 = sphi 0, %s151
    %s153 = sphi 0, %s151
    %s154 = sphi 0, %s153
    %s168 = sphi 0, %s154
    %s172 = sphi 0, %s172
    %s174 = sphi 0, %s172
    %s175 = sphi 0, %s174
    %s189 = sphi 0, %s175
    %s193 = sphi 0, %s193
    %s195 = sphi 0, %s193
    %s196 = sphi 0, %s195
    %s210 = sphi 0, %s196
    %s216 = sphi 0, %s218
    %s219 = sphi 0, %s216
    %s220 = sphi 0, %s219
    %s236 = sphi 0, %s220
  $region4: #{tpu_custom_call.1} parent=0 // loop_header_branch
    %17 = sbr.rel (%p15) target = $region8
  $region5: #{tpu_custom_call.1} parent=0 // loop_body
    %s19 = ssub.s32 %s14, 1
    %s20 = ssub.s32 %s14, 2
    %s27 = sadd.s32 1, %s22
    %p28 = scmp.ge.s32.totalorder %s27, 3
    %s29 = scalar_select %p28, 0, %s27
    %s30 = sadd.s32 1, %s21
    %s31 = scalar_select %p28, %s30, %s21
    %p32 = scmp.ge.s32.totalorder %s31, 1
    %s33 = scalar_select %p32, 0, %s31
    %s34 = ssub.s32 %s21, %s33
    %p35 = scmp.eq.s32.totalorder %s34, 0
    %s37 = sadd.s32 %s36, 1
    %s38 = scalar_select %p35, %s36, %s37
    %p41 = pneg %p35
    %p42 = scmp.eq.s32.totalorder %s14, 2
    %p43 = por %p41, %p42
    %p44 = scmp.ne.s32.totalorder %s36, %s39
    %p45 = scmp.eq.s32.totalorder %s14, 0
    %p46 = por %p44, %p45
    %p47 = scmp.ne.s32.totalorder %s36, %s39
    %p48 = scmp.eq.s32.totalorder %s19, 2
    %p49 = por %p47, %p48
    %p50 = scmp.ne.s32.totalorder %s39, %s40
    %p51 = scmp.eq.s32.totalorder %s19, 0
    %p52 = por %p50, %p51
    %p53 = scmp.ne.s32.totalorder %s39, %s40
    %p54 = scmp.eq.s32.totalorder %s20, 2
    %p55 = por %p53, %p54
    %p57 = scmp.ne.s32.totalorder %s40, %s56
    %p58 = scmp.eq.s32.totalorder %s20, 0
    %p59 = por %p57, %p58
    %s60 = ssub.s32 %s22, %s29
    %s61 = ssub.s32 %s21, %s33
    %s62 = sor.u32 %s60, %s61
    %p63 = scmp.eq.s32.totalorder %s62, 0
    %s65 = sadd.s32 %s64, 1
    %s66 = scalar_select %p63, %s64, %s65
    %p69 = pneg %p63
    %p70 = scmp.eq.s32.totalorder %s14, 2
    %p71 = por %p69, %p70
    %p72 = scmp.ne.s32.totalorder %s64, %s67
    %p73 = scmp.eq.s32.totalorder %s14, 0
    %p74 = por %p72, %p73
    %p75 = scmp.ne.s32.totalorder %s64, %s67
    %p76 = scmp.eq.s32.totalorder %s19, 2
    %p77 = por %p75, %p76
    %p78 = scmp.ne.s32.totalorder %s67, %s68
    %p79 = scmp.eq.s32.totalorder %s19, 0
    %p80 = por %p78, %p79
    %p81 = scmp.ne.s32.totalorder %s67, %s68
    %p82 = scmp.eq.s32.totalorder %s20, 2
    %p83 = por %p81, %p82
    %p85 = scmp.ne.s32.totalorder %s68, %s84
    %p86 = scmp.eq.s32.totalorder %s20, 0
    %p87 = por %p85, %p86
    %s89 = sadd.s32 %s88, 1
    %p92 = scmp.eq.s32.totalorder %s14, 2
    %p93 = scmp.ne.s32.totalorder %s88, %s90
    %p94 = scmp.eq.s32.totalorder %s14, 0
    %p95 = por %p93, %p94
    %p96 = scmp.ne.s32.totalorder %s88, %s90
    %p97 = scmp.eq.s32.totalorder %s19, 2
    %p98 = por %p96, %p97
    %p99 = scmp.ne.s32.totalorder %s90, %s91
    %p100 = scmp.eq.s32.totalorder %s19, 0
    %p101 = por %p99, %p100
    %p102 = scmp.ne.s32.totalorder %s90, %s91
    %p103 = scmp.eq.s32.totalorder %s20, 2
    %p104 = por %p102, %p103
    %p106 = scmp.ne.s32.totalorder %s91, %s105
    %p107 = scmp.eq.s32.totalorder %s20, 0
    %p108 = por %p106, %p107
    %s110 = sadd.s32 %s109, 1
    %p113 = scmp.eq.s32.totalorder %s14, 2
    %p114 = scmp.ne.s32.totalorder %s109, %s111
    %p115 = scmp.eq.s32.totalorder %s14, 0
    %p116 = por %p114, %p115
    %p117 = scmp.ne.s32.totalorder %s109, %s111
    %p118 = scmp.eq.s32.totalorder %s19, 2
    %p119 = por %p117, %p118
    %p120 = scmp.ne.s32.totalorder %s111, %s112
    %p121 = scmp.eq.s32.totalorder %s19, 0
    %p122 = por %p120, %p121
    %p123 = scmp.ne.s32.totalorder %s111, %s112
    %p124 = scmp.eq.s32.totalorder %s20, 2
    %p125 = por %p123, %p124
    %p127 = scmp.ne.s32.totalorder %s112, %s126
    %p128 = scmp.eq.s32.totalorder %s20, 0
    %p129 = por %p127, %p128
    %s131 = sadd.s32 %s130, 1
    %p134 = scmp.eq.s32.totalorder %s14, 2
    %p135 = scmp.ne.s32.totalorder %s130, %s132
    %p136 = scmp.eq.s32.totalorder %s14, 0
    %p137 = por %p135, %p136
    %p138 = scmp.ne.s32.totalorder %s130, %s132
    %p139 = scmp.eq.s32.totalorder %s19, 2
    %p140 = por %p138, %p139
    %p141 = scmp.ne.s32.totalorder %s132, %s133
    %p142 = scmp.eq.s32.totalorder %s19, 0
    %p143 = por %p141, %p142
    %p144 = scmp.ne.s32.totalorder %s132, %s133
    %p145 = scmp.eq.s32.totalorder %s20, 2
    %p146 = por %p144, %p145
    %p148 = scmp.ne.s32.totalorder %s133, %s147
    %p149 = scmp.eq.s32.totalorder %s20, 0
    %p150 = por %p148, %p149
    %s152 = sadd.s32 %s151, 1
    %p155 = scmp.eq.s32.totalorder %s14, 2
    %p156 = scmp.ne.s32.totalorder %s151, %s153
    %p157 = scmp.eq.s32.totalorder %s14, 0
    %p158 = por %p156, %p157
    %p159 = scmp.ne.s32.totalorder %s151, %s153
    %p160 = scmp.eq.s32.totalorder %s19, 2
    %p161 = por %p159, %p160
    %p162 = scmp.ne.s32.totalorder %s153, %s154
    %p163 = scmp.eq.s32.totalorder %s19, 0
    %p164 = por %p162, %p163
    %p165 = scmp.ne.s32.totalorder %s153, %s154
    %p166 = scmp.eq.s32.totalorder %s20, 2
    %p167 = por %p165, %p166
    %p169 = scmp.ne.s32.totalorder %s154, %s168
    %p170 = scmp.eq.s32.totalorder %s20, 0
    %p171 = por %p169, %p170
    %s173 = sadd.s32 %s172, 1
    %p176 = scmp.eq.s32.totalorder %s14, 2
    %p177 = scmp.ne.s32.totalorder %s172, %s174
    %p178 = scmp.eq.s32.totalorder %s14, 0
    %p179 = por %p177, %p178
    %p180 = scmp.ne.s32.totalorder %s172, %s174
    %p181 = scmp.eq.s32.totalorder %s19, 2
    %p182 = por %p180, %p181
    %p183 = scmp.ne.s32.totalorder %s174, %s175
    %p184 = scmp.eq.s32.totalorder %s19, 0
    %p185 = por %p183, %p184
    %p186 = scmp.ne.s32.totalorder %s174, %s175
    %p187 = scmp.eq.s32.totalorder %s20, 2
    %p188 = por %p186, %p187
    %p190 = scmp.ne.s32.totalorder %s175, %s189
    %p191 = scmp.eq.s32.totalorder %s20, 0
    %p192 = por %p190, %p191
    %s194 = sadd.s32 %s193, 1
    %p197 = scmp.eq.s32.totalorder %s14, 2
    %p198 = scmp.ne.s32.totalorder %s193, %s195
    %p199 = scmp.eq.s32.totalorder %s14, 0
    %p200 = por %p198, %p199
    %p201 = scmp.ne.s32.totalorder %s193, %s195
    %p202 = scmp.eq.s32.totalorder %s19, 2
    %p203 = por %p201, %p202
    %p204 = scmp.ne.s32.totalorder %s195, %s196
    %p205 = scmp.eq.s32.totalorder %s19, 0
    %p206 = por %p204, %p205
    %p207 = scmp.ne.s32.totalorder %s195, %s196
    %p208 = scmp.eq.s32.totalorder %s20, 2
    %p209 = por %p207, %p208
    %p211 = scmp.ne.s32.totalorder %s196, %s210
    %p212 = scmp.eq.s32.totalorder %s20, 0
    %p213 = por %p211, %p212
    %s214 = ssub.s32 %s21, %s33
    %p215 = scmp.eq.s32.totalorder %s214, 0
    %s217 = sadd.s32 %s216, 1
    %s218 = scalar_select %p215, %s216, %s217
    %p221 = pneg %p215
    %p222 = scmp.eq.s32.totalorder %s14, 2
    %p223 = por %p221, %p222
    %p224 = scmp.ne.s32.totalorder %s216, %s219
    %p225 = scmp.eq.s32.totalorder %s14, 0
    %p226 = por %p224, %p225
    %p227 = scmp.ne.s32.totalorder %s216, %s219
    %p228 = scmp.eq.s32.totalorder %s19, 2
    %p229 = por %p227, %p228
    %p230 = scmp.ne.s32.totalorder %s219, %s220
    %p231 = scmp.eq.s32.totalorder %s19, 0
    %p232 = por %p230, %p231
    %p233 = scmp.ne.s32.totalorder %s219, %s220
    %p234 = scmp.eq.s32.totalorder %s20, 2
    %p235 = por %p233, %p234
    %p237 = scmp.ne.s32.totalorder %s220, %s236
    %p238 = scmp.eq.s32.totalorder %s20, 0
    %p239 = por %p237, %p238
    %p240 = scmp.le.s32.totalorder 1, %s14
    %p241 = scmp.lt.s32.totalorder %s14, 4
    %p242 = pnand %p240, %p241
    %p243 = pneg %p242
    // Predicated region
    $region9: #{tpu_custom_call.1} parent=5 // pred_check
      _
    $region10: #{tpu_custom_call.1} parent=5 // pred_check_branch
      %245 = sbr.rel (%p242) target = $region12
    $region11: #{tpu_custom_call.1} parent=5 // pred_region
      %s246 = ssub.s32 %s14, 1
      // Predicated region
      $region13: #{tpu_custom_call.1} parent=11 // pred_check
        %p247 = pneg %p52
      $region14: #{tpu_custom_call.1} parent=11 // pred_check_branch
        %249 = sbr.rel (%p247) target = $region16
      $region15: #{tpu_custom_call.1} parent=11 // pred_region
        %s250 = smul.u32 18, %s23
        %p251 = scmp.lt.s32.totalorder %s250, 17
        %s252 = scalar_select %p251, %s250, 17
        %s253 = smul.addr %s252, 8
        %s254 = scalar_lea.vmem %s0, %s253
        %s255 = smul.u32 18, %s23
      $region16: #{tpu_custom_call.1} parent=11 // pred_fallthru
        _
      // Predicated region
      $region17: #{tpu_custom_call.1} parent=11 // pred_check
        %p256 = pneg %p101
      $region18: #{tpu_custom_call.1} parent=11 // pred_check_branch
        %258 = sbr.rel (%p256) target = $region20
      $region19: #{tpu_custom_call.1} parent=11 // pred_region
        _
      $region20: #{tpu_custom_call.1} parent=11 // pred_fallthru
        _
      // Predicated region
      $region21: #{tpu_custom_call.1} parent=11 // pred_check
        %p259 = pneg %p122
      $region22: #{tpu_custom_call.1} parent=11 // pred_check_branch
        %261 = sbr.rel (%p259) target = $region24
      $region23: #{tpu_custom_call.1} parent=11 // pred_region
        _
      $region24: #{tpu_custom_call.1} parent=11 // pred_fallthru
        _
      // Predicated region
      $region25: #{tpu_custom_call.1} parent=11 // pred_check
        %p262 = pneg %p143
      $region26: #{tpu_custom_call.1} parent=11 // pred_check_branch
        %264 = sbr.rel (%p262) target = $region28
      $region27: #{tpu_custom_call.1} parent=11 // pred_region
        _
      $region28: #{tpu_custom_call.1} parent=11 // pred_fallthru
        _
      // Predicated region
      $region29: #{tpu_custom_call.1} parent=11 // pred_check
        %p265 = pneg %p164
      $region30: #{tpu_custom_call.1} parent=11 // pred_check_branch
        %267 = sbr.rel (%p265) target = $region32
      $region31: #{tpu_custom_call.1} parent=11 // pred_region
        _
      $region32: #{tpu_custom_call.1} parent=11 // pred_fallthru
        _
      // Predicated region
      $region33: #{tpu_custom_call.1} parent=11 // pred_check
        %p268 = pneg %p185
      $region34: #{tpu_custom_call.1} parent=11 // pred_check_branch
        %270 = sbr.rel (%p268) target = $region36
      $region35: #{tpu_custom_call.1} parent=11 // pred_region
        _
      $region36: #{tpu_custom_call.1} parent=11 // pred_fallthru
        _
      // Predicated region
      $region37: #{tpu_custom_call.1} parent=11 // pred_check
        %p271 = pneg %p206
      $region38: #{tpu_custom_call.1} parent=11 // pred_check_branch
        %273 = sbr.rel (%p271) target = $region40
      $region39: #{tpu_custom_call.1} parent=11 // pred_region
        _
      $region40: #{tpu_custom_call.1} parent=11 // pred_fallthru
        _
    $region12: #{tpu_custom_call.1} parent=5 // pred_fallthru
      _
    %p274 = scmp.lt.s32.totalorder %s14, 3
    // Predicated region
    $region41: #{tpu_custom_call.1} parent=5 // pred_check
      %p275 = pneg %p274
    $region42: #{tpu_custom_call.1} parent=5 // pred_check_branch
      %277 = sbr.rel (%p275) target = $region44
    $region43: #{tpu_custom_call.1} parent=5 // pred_region
      // Predicated region
      $region45: #{tpu_custom_call.1} parent=43 // pred_check
        %p278 = pneg %p74
      $region46: #{tpu_custom_call.1} parent=43 // pred_check_branch
        %280 = sbr.rel (%p278) target = $region48
      $region47: #{tpu_custom_call.1} parent=43 // pred_region
        %s281 = smul.u32 18, %s21
        %p282 = scmp.lt.s32.totalorder %s22, 2
        %s283 = scalar_select %p282, %s22, 2
        %p284 = scmp.lt.s32.totalorder %s281, 17
        %s285 = scalar_select %p284, %s281, 17
        %s286 = smul.addr %s283, 18
        %s287 = sadd.s32 %s285, %s286
        %s288 = smul.addr %s287, 8
        %s289 = scalar_lea.vmem %s1, %s288
        %s290 = smul.u32 18, %s21
      $region48: #{tpu_custom_call.1} parent=43 // pred_fallthru
        _
    $region44: #{tpu_custom_call.1} parent=5 // pred_fallthru
      _
    %p291 = scmp.le.s32.totalorder 1, %s14
    %p292 = scmp.lt.s32.totalorder %s14, 4
    %p293 = pnand %p291, %p292
    %p294 = pneg %p293
    // Predicated region
    $region49: #{tpu_custom_call.1} parent=5 // pred_check
      _
    $region50: #{tpu_custom_call.1} parent=5 // pred_check_branch
      %296 = sbr.rel (%p293) target = $region52
    $region51: #{tpu_custom_call.1} parent=5 // pred_region
      %s297 = ssub.s32 %s14, 1
      %s298 = smul.u32 18, %s23
      %p299 = scmp.lt.s32.totalorder %s298, 17
      %s300 = scalar_select %p299, %s298, 17
      %s301 = smul.addr %s300, 8
      %s302 = scalar_lea.vmem %s0, %s301
      %p303 = pneg %p52
      %p304 = pneg %p49
      %s305 = smul.u32 18, %s23
      %p306 = scmp.lt.s32.totalorder %s24, 2
      %s307 = scalar_select %p306, %s24, 2
      %p308 = scmp.lt.s32.totalorder %s305, 17
      %s309 = scalar_select %p308, %s305, 17
      %s310 = smul.addr %s307, 18
      %s311 = sadd.s32 %s309, %s310
      %s312 = smul.addr %s311, 8
      %s313 = scalar_lea.vmem %s1, %s312
      %p314 = pneg %p80
      %p315 = pneg %p77
      %p316 = pneg %p101
      %p317 = pneg %p98
      %p318 = pneg %p122
      %p319 = pneg %p119
      %p320 = pneg %p143
      %p321 = pneg %p140
      %p322 = pneg %p164
      %p323 = pneg %p161
      %p324 = pneg %p185
      %p325 = pneg %p182
      %p326 = pneg %p206
      %p327 = pneg %p203
      %p328 = pneg %p232
      %p329 = pneg %p229
      %s330 = smul.u32 18, %s23
      %p331 = scmp.lt.s32.totalorder %s330, 17
      %s332 = scalar_select %p331, %s330, 17
      %s333 = smul.addr %s332, 4
      %s334 = scalar_lea.vmem %s8, %s333
      %s335 = smul.u32 18, %s23
      %p336 = scmp.lt.s32.totalorder %s335, 17
      %s337 = scalar_select %p336, %s335, 17
      %s338 = smul.addr %s337, 8
      %s339 = scalar_lea.vmem %s0, %s338
      %s340 = smul.u32 18, %s23
      %s341 = smul.u32 18, %s23
      %p342 = scmp.lt.s32.totalorder %s24, 2
      %s343 = scalar_select %p342, %s24, 2
      %p344 = scmp.lt.s32.totalorder %s341, 17
      %s345 = scalar_select %p344, %s341, 17
      %s346 = smul.addr %s343, 18
      %s347 = sadd.s32 %s345, %s346
      %s348 = smul.addr %s347, 8
      %s349 = scalar_lea.vmem %s1, %s348
      %s350 = smul.u32 18, %s23
      %s351 = smul.u32 18, %s23
      %p352 = scmp.lt.s32.totalorder %s351, 17
      %s353 = scalar_select %p352, %s351, 17
      %s354 = smul.addr %s353, 4
      %s355 = scalar_lea.vmem %s8, %s354
      %s356 = smul.u32 18, %s23
      %p358 = scmp.eq.s32.totalorder %s24, 0
      // Predicated region
      $region53: #{tpu_custom_call.1} parent=51 // pred_check
        %p359 = pneg %p358
      $region54: #{tpu_custom_call.1} parent=51 // pred_check_branch
        %361 = sbr.rel (%p359) target = $region56
      $region55: #{tpu_custom_call.1} parent=51 // pred_region
        %vm362 = vcmask 261120
        %363 = vst.msk [vmem:[#allocation2] sm:$0xff] %vm362, -inf
        %364 = vst.msk [vmem:[#allocation2 + $0x8] sm:$0xff] %vm362, -inf
        %365 = vst.msk [vmem:[#allocation2 + $0x10] sm:$0xff] %vm362, -inf
        %366 = vst.msk [vmem:[#allocation2 + $0x18] sm:$0xff] %vm362, -inf
        %367 = vst.msk [vmem:[#allocation2 + $0x20] sm:$0xff] %vm362, -inf
        %368 = vst.msk [vmem:[#allocation2 + $0x28] sm:$0xff] %vm362, -inf
        %369 = vst.msk [vmem:[#allocation2 + $0x30] sm:$0xff] %vm362, -inf
        %370 = vst.msk [vmem:[#allocation2 + $0x38] sm:$0xff] %vm362, -inf
        %371 = vst.msk [vmem:[#allocation2 + $0x40] sm:$0xff] %vm362, -inf
        %372 = vst.msk [vmem:[#allocation2 + $0x48] sm:$0xff] %vm362, -inf
        %373 = vst.msk [vmem:[#allocation2 + $0x50] sm:$0xff] %vm362, -inf
        %374 = vst.msk [vmem:[#allocation2 + $0x58] sm:$0xff] %vm362, -inf
        %375 = vst.msk [vmem:[#allocation2 + $0x60] sm:$0xff] %vm362, -inf
        %376 = vst.msk [vmem:[#allocation2 + $0x68] sm:$0xff] %vm362, -inf
        %377 = vst.msk [vmem:[#allocation2 + $0x70] sm:$0xff] %vm362, -inf
        %378 = vst.msk [vmem:[#allocation2 + $0x78] sm:$0xff] %vm362, -inf
        %379 = vst.msk [vmem:[#allocation2 + $0x80] sm:$0xff] %vm362, -inf
        %380 = vst.msk [vmem:[#allocation2 + $0x88] sm:$0xff] %vm362, -inf
      $region56: #{tpu_custom_call.1} parent=51 // pred_fallthru
        _
      %v381 = vld [vmem:[%s349] sm:$0xff]
      %v382 = vld [vmem:[%s349 + $0x8] sm:$0xff]
      %v383 = vld [vmem:[%s349 + $0x10] sm:$0xff]
      %v384 = vld [vmem:[%s349 + $0x18] sm:$0xff]
      %v385 = vld [vmem:[%s349 + $0x20] sm:$0xff]
      %v386 = vld [vmem:[%s349 + $0x28] sm:$0xff]
      %v387 = vld [vmem:[%s349 + $0x30] sm:$0xff]
      %v388 = vld [vmem:[%s349 + $0x38] sm:$0xff]
      %v389 = vld [vmem:[%s349 + $0x40] sm:$0xff]
      %v390 = vld [vmem:[%s349 + $0x48] sm:$0xff]
      %v391 = vld [vmem:[%s349 + $0x50] sm:$0xff]
      %v392 = vld [vmem:[%s349 + $0x58] sm:$0xff]
      %v393 = vld [vmem:[%s349 + $0x60] sm:$0xff]
      %v394 = vld [vmem:[%s349 + $0x68] sm:$0xff]
      %v395 = vld [vmem:[%s349 + $0x70] sm:$0xff]
      %v396 = vld [vmem:[%s349 + $0x78] sm:$0xff]
      %v397 = vld [vmem:[%s349 + $0x80] sm:$0xff]
      %v398 = vld [vmem:[%s349 + $0x88] sm:$0xff]
      %v399 = vld [vmem:[%s2] sm:$0x1]
      %401 = vset.pattern.permute.xlu0 0
      %402 = vperm.xlu0 %401, %v381
      %v403 = vpop.permute.xlu0 %402
      %406 = vset.pattern.permute.xlu0 0
      %407 = vperm.xlu0 %406, %v382
      %v408 = vpop.permute.xlu0 %407
      %411 = vset.pattern.permute.xlu0 0
      %412 = vperm.xlu0 %411, %v383
      %v413 = vpop.permute.xlu0 %412
      %416 = vset.pattern.permute.xlu0 0
      %417 = vperm.xlu0 %416, %v384
      %v418 = vpop.permute.xlu0 %417
      %421 = vset.pattern.permute.xlu0 0
      %422 = vperm.xlu0 %421, %v385
      %v423 = vpop.permute.xlu0 %422
      %426 = vset.pattern.permute.xlu0 0
      %427 = vperm.xlu0 %426, %v386
      %v428 = vpop.permute.xlu0 %427
      %431 = vset.pattern.permute.xlu0 0
      %432 = vperm.xlu0 %431, %v387
      %v433 = vpop.permute.xlu0 %432
      %436 = vset.pattern.permute.xlu0 0
      %437 = vperm.xlu0 %436, %v388
      %v438 = vpop.permute.xlu0 %437
      %441 = vset.pattern.permute.xlu0 0
      %442 = vperm.xlu0 %441, %v389
      %v443 = vpop.permute.xlu0 %442
      %446 = vset.pattern.permute.xlu0 0
      %447 = vperm.xlu0 %446, %v390
      %v448 = vpop.permute.xlu0 %447
      %451 = vset.pattern.permute.xlu0 0
      %452 = vperm.xlu0 %451, %v391
      %v453 = vpop.permute.xlu0 %452
      %456 = vset.pattern.permute.xlu0 0
      %457 = vperm.xlu0 %456, %v392
      %v458 = vpop.permute.xlu0 %457
      %461 = vset.pattern.permute.xlu0 0
      %462 = vperm.xlu0 %461, %v393
      %v463 = vpop.permute.xlu0 %462
      %466 = vset.pattern.permute.xlu0 0
      %467 = vperm.xlu0 %466, %v394
      %v468 = vpop.permute.xlu0 %467
      %471 = vset.pattern.permute.xlu0 0
      %472 = vperm.xlu0 %471, %v395
      %v473 = vpop.permute.xlu0 %472
      %476 = vset.pattern.permute.xlu0 0
      %477 = vperm.xlu0 %476, %v396
      %v478 = vpop.permute.xlu0 %477
      %481 = vset.pattern.permute.xlu0 0
      %482 = vperm.xlu0 %481, %v397
      %v483 = vpop.permute.xlu0 %482
      %486 = vset.pattern.permute.xlu0 0
      %487 = vperm.xlu0 %486, %v398
      %v488 = vpop.permute.xlu0 %487
      %v491 = vlaneseq
      %v492 = vshrl.u32 %v491, 7
      %v493 = vsub.s32 0, %v492
      %v494 = vrot.slane %v399, %v493
      %v496 = vmul.f32 %v403, %v494
      %v497 = vmul.f32 %v408, %v494
      %v498 = vmul.f32 %v413, %v494
      %v499 = vmul.f32 %v418, %v494
      %v500 = vmul.f32 %v423, %v494
      %v501 = vmul.f32 %v428, %v494
      %v502 = vmul.f32 %v433, %v494
      %v503 = vmul.f32 %v438, %v494
      %v504 = vmul.f32 %v443, %v494
      %v505 = vmul.f32 %v448, %v494
      %v506 = vmul.f32 %v453, %v494
      %v507 = vmul.f32 %v458, %v494
      %v508 = vmul.f32 %v463, %v494
      %v509 = vmul.f32 %v468, %v494
      %v510 = vmul.f32 %v473, %v494
      %v511 = vmul.f32 %v478, %v494
      %v512 = vmul.f32 %v483, %v494
      %v513 = vmul.f32 %v488, %v494
      %v514 = vld [vmem:[%s3] sm:$0x1]
      %v516 = vlaneseq
      %v517 = vshrl.u32 %v516, 7
      %v518 = vsub.s32 0, %v517
      %v519 = vrot.slane %v514, %v518
      %v521 = vadd.f32 %v496, %v519
      %v522 = vadd.f32 %v497, %v519
      %v523 = vadd.f32 %v498, %v519
      %v524 = vadd.f32 %v499, %v519
      %v525 = vadd.f32 %v500, %v519
      %v526 = vadd.f32 %v501, %v519
      %v527 = vadd.f32 %v502, %v519
      %v528 = vadd.f32 %v503, %v519
      %v529 = vadd.f32 %v504, %v519
      %v530 = vadd.f32 %v505, %v519
      %v531 = vadd.f32 %v506, %v519
      %v532 = vadd.f32 %v507, %v519
      %v533 = vadd.f32 %v508, %v519
      %v534 = vadd.f32 %v509, %v519
      %v535 = vadd.f32 %v510, %v519
      %v536 = vadd.f32 %v511, %v519
      %v537 = vadd.f32 %v512, %v519
      %v538 = vadd.f32 %v513, %v519
      %v539 = vand.u32 2147483647, %v521
      %vm540 = vcmp.le.f32.partialorder %v539, 0.7853982
      %vm541 = vcmp.lt.s32.totalorder %v521, 0
      %v542 = vand.u32 %v521, 2139095040
      %v543 = vshrl.u32 %v542, 23
      %v544 = vsub.s32 %v543, 127
      %v545 = vand.u32 2147483647, %v521
      %v546 = vand.u32 %v545, 8388607
      %v547 = vor.u32 %v546, 8388608
      %v548 = vsub.s32 0, %v547
      %v549 = vadd.s32 %v544, 1
      %vm550 = vcmp.gt.s32.totalorder %v549, 0
      %v551 = vsel %vm550, %v549, 0
      %v552 = vshrl.u32 %v551, 5
      %v553 = vand.u32 %v551, 31
      %v554 = vsub.s32 32, %v553
      %v555 = vshrl.u32 683565275, %v554
      %v556 = vshll.u32 683565275, %v553
      %v557 = vshrl.u32 2475754826, %v554
      %v558 = vor.u32 %v556, %v557
      %v559 = vshll.u32 2475754826, %v553
      %v560 = vshrl.u32 2131351028, %v554
      %v561 = vor.u32 %v559, %v560
      %v562 = vshll.u32 2131351028, %v553
      %v563 = vshrl.u32 2102212464, %v554
      %v564 = vor.u32 %v562, %v563
      %v565 = vshll.u32 2102212464, %v553
      %v566 = vshrl.u32 920167782, %v554
      %v567 = vor.u32 %v565, %v566
      %v568 = vshll.u32 920167782, %v553
      %v569 = vshrl.u32 1326507024, %v554
      %v570 = vor.u32 %v568, %v569
      %vm571 = vcmp.lt.s32.totalorder %v552, 1
      %vm572 = vcmp.lt.s32.totalorder %v552, 2
      %vm573 = vcmp.lt.s32.totalorder %v552, 3
      %vm574 = vcmp.lt.s32.totalorder %v552, 4
      %v575 = vsel %vm571, %v555, %v558
      %v576 = vsel %vm574, %v564, 2102212464
      %v577 = vsel %vm573, %v561, %v576
      %v578 = vsel %vm572, %v575, %v577
      %v579 = vsel %vm571, %v558, %v561
      %v580 = vsel %vm574, %v567, 920167782
      %v581 = vsel %vm573, %v564, %v580
      %v582 = vsel %vm572, %v579, %v581
      %v583 = vsel %vm571, %v561, %v564
      %v584 = vsel %vm574, %v570, 1326507024
      %v585 = vsel %vm573, %v567, %v584
      %v586 = vsel %vm572, %v583, %v585
      %v587 = vshll.u32 %v547, 8
      %v588 = vmul.u32.u64.compose %v587, %v586
      %v589 = vextract.low.u32 %v588
      %v590 = vextract.high.u32 %v588
      %v591 = vmul.u32.u64.compose %v587, %v582
      %v592 = vextract.low.u32 %v591
      %v593 = vextract.high.u32 %v591
      %v594 = vmul.u32 %v587, %v578
      %v595 = vadd.s32 %v590, %v592
      %vm596 = vc.u32 %v590, %v592
      %v597 = vadd.s32 %v593, 1
      %v598 = vsel %vm596, %v597, %v593
      %v599 = vadd.s32 %v594, %v598
      %v600 = vadd.s32 %v599, 536870912
      %v601 = vshrl.u32 %v600, 30
      %v602 = vshll.u32 %v601, 30
      %v603 = vsub.s32 %v599, %v602
      %vm604 = vcmp.lt.s32.totalorder %v603, 0
      %v605 = vsub.s32 0, %v603
      %v606 = vsel %vm604, %v605, %v603
      %v607 = vclz %v606
      %v608 = vsub.s32 %v607, 2
      %vm609 = vcmp.gt.s32.totalorder 0, %v608
      %v610 = vsel %vm609, 0, %v608
      %v611 = vsub.s32 32, %v610
      %v612 = vshll.u32 %v603, %v610
      %v613 = vshrl.u32 %v595, %v611
      %v614 = vor.u32 %v612, %v613
      %v615 = vsub.s32 4294967266, %v610
      %v616 = vadd.s32 %v615, 127
      %v617 = vshll.u32 %v616, 23
      %v618 = vor.u32 4788187, %v617
      %v619 = vand.u32 2147483647, %v618
      %v621 = vcvt.s32.f32 %v614
      %v622 = vmul.f32 %v621, %v619
      %v623 = vxor.u32 %v622, 2147483648
      %v624 = vsel %vm541, %v623, %v622
      %v625 = vsub.s32 4, %v601
      %v626 = vsel %vm541, %v625, %v601
      %v627 = vsel %vm540, %v521, %v624
      %v628 = vsel %vm540, 0, %v626
      %v629 = vcosq.f32.pop %v627
      %v630 = vsinq.f32.pop %v627
      %vm631 = vweird.f32 %v521
      %v632 = vadd.s32 %v628, 3
      %v633 = vand.u32 %v632, 3
      %vm634 = vcmp.lt.s32.totalorder %v633, 2
      %vm635 = vcmp.eq.s32.totalorder %v633, 0
      %v636 = vxor.u32 %v630, 2147483648
      %v637 = vsel %vm635, %v629, %v636
      %vm638 = vcmp.eq.s32.totalorder %v633, 2
      %v639 = vxor.u32 %v629, 2147483648
      %v640 = vsel %vm638, %v639, %v630
      %v641 = vsel %vm634, %v637, %v640
      %v642 = vsel %vm631, nan, %v641
      %v643 = vand.u32 2147483647, %v522
      %vm644 = vcmp.le.f32.partialorder %v643, 0.7853982
      %vm645 = vcmp.lt.s32.totalorder %v522, 0
      %v646 = vand.u32 %v522, 2139095040
      %v647 = vshrl.u32 %v646, 23
      %v648 = vsub.s32 %v647, 127
      %v649 = vand.u32 2147483647, %v522
      %v650 = vand.u32 %v649, 8388607
      %v651 = vor.u32 %v650, 8388608
      %v652 = vsub.s32 0, %v651
      %v653 = vadd.s32 %v648, 1
      %vm654 = vcmp.gt.s32.totalorder %v653, 0
      %v655 = vsel %vm654, %v653, 0
      %v656 = vshrl.u32 %v655, 5
      %v657 = vand.u32 %v655, 31
      %v658 = vsub.s32 32, %v657
      %v659 = vshrl.u32 683565275, %v658
      %v660 = vshll.u32 683565275, %v657
      %v661 = vshrl.u32 2475754826, %v658
      %v662 = vor.u32 %v660, %v661
      %v663 = vshll.u32 2475754826, %v657
      %v664 = vshrl.u32 2131351028, %v658
      %v665 = vor.u32 %v663, %v664
      %v666 = vshll.u32 2131351028, %v657
      %v667 = vshrl.u32 2102212464, %v658
      %v668 = vor.u32 %v666, %v667
      %v669 = vshll.u32 2102212464, %v657
      %v670 = vshrl.u32 920167782, %v658
      %v671 = vor.u32 %v669, %v670
      %v672 = vshll.u32 920167782, %v657
      %v673 = vshrl.u32 1326507024, %v658
      %v674 = vor.u32 %v672, %v673
      %vm675 = vcmp.lt.s32.totalorder %v656, 1
      %vm676 = vcmp.lt.s32.totalorder %v656, 2
      %vm677 = vcmp.lt.s32.totalorder %v656, 3
      %vm678 = vcmp.lt.s32.totalorder %v656, 4
      %v679 = vsel %vm675, %v659, %v662
      %v680 = vsel %vm678, %v668, 2102212464
      %v681 = vsel %vm677, %v665, %v680
      %v682 = vsel %vm676, %v679, %v681
      %v683 = vsel %vm675, %v662, %v665
      %v684 = vsel %vm678, %v671, 920167782
      %v685 = vsel %vm677, %v668, %v684
      %v686 = vsel %vm676, %v683, %v685
      %v687 = vsel %vm675, %v665, %v668
      %v688 = vsel %vm678, %v674, 1326507024
      %v689 = vsel %vm677, %v671, %v688
      %v690 = vsel %vm676, %v687, %v689
      %v691 = vshll.u32 %v651, 8
      %v692 = vmul.u32.u64.compose %v691, %v690
      %v693 = vextract.low.u32 %v692
      %v694 = vextract.high.u32 %v692
      %v695 = vmul.u32.u64.compose %v691, %v686
      %v696 = vextract.low.u32 %v695
      %v697 = vextract.high.u32 %v695
      %v698 = vmul.u32 %v691, %v682
      %v699 = vadd.s32 %v694, %v696
      %vm700 = vc.u32 %v694, %v696
      %v701 = vadd.s32 %v697, 1
      %v702 = vsel %vm700, %v701, %v697
      %v703 = vadd.s32 %v698, %v702
      %v704 = vadd.s32 %v703, 536870912
      %v705 = vshrl.u32 %v704, 30
      %v706 = vshll.u32 %v705, 30
      %v707 = vsub.s32 %v703, %v706
      %vm708 = vcmp.lt.s32.totalorder %v707, 0
      %v709 = vsub.s32 0, %v707
      %v710 = vsel %vm708, %v709, %v707
      %v711 = vclz %v710
      %v712 = vsub.s32 %v711, 2
      %vm713 = vcmp.gt.s32.totalorder 0, %v712
      %v714 = vsel %vm713, 0, %v712
      %v715 = vsub.s32 32, %v714
      %v716 = vshll.u32 %v707, %v714
      %v717 = vshrl.u32 %v699, %v715
      %v718 = vor.u32 %v716, %v717
      %v719 = vsub.s32 4294967266, %v714
      %v720 = vadd.s32 %v719, 127
      %v721 = vshll.u32 %v720, 23
      %v722 = vor.u32 4788187, %v721
      %v723 = vand.u32 2147483647, %v722
      %v725 = vcvt.s32.f32 %v718
      %v726 = vmul.f32 %v725, %v723
      %v727 = vxor.u32 %v726, 2147483648
      %v728 = vsel %vm645, %v727, %v726
      %v729 = vsub.s32 4, %v705
      %v730 = vsel %vm645, %v729, %v705
      %v731 = vsel %vm644, %v522, %v728
      %v732 = vsel %vm644, 0, %v730
      %v733 = vcosq.f32.pop %v731
      %v734 = vsinq.f32.pop %v731
      %vm735 = vweird.f32 %v522
      %v736 = vadd.s32 %v732, 3
      %v737 = vand.u32 %v736, 3
      %vm738 = vcmp.lt.s32.totalorder %v737, 2
      %vm739 = vcmp.eq.s32.totalorder %v737, 0
      %v740 = vxor.u32 %v734, 2147483648
      %v741 = vsel %vm739, %v733, %v740
      %vm742 = vcmp.eq.s32.totalorder %v737, 2
      %v743 = vxor.u32 %v733, 2147483648
      %v744 = vsel %vm742, %v743, %v734
      %v745 = vsel %vm738, %v741, %v744
      %v746 = vsel %vm735, nan, %v745
      %v747 = vand.u32 2147483647, %v523
      %vm748 = vcmp.le.f32.partialorder %v747, 0.7853982
      %vm749 = vcmp.lt.s32.totalorder %v523, 0
      %v750 = vand.u32 %v523, 2139095040
      %v751 = vshrl.u32 %v750, 23
      %v752 = vsub.s32 %v751, 127
      %v753 = vand.u32 2147483647, %v523
      %v754 = vand.u32 %v753, 8388607
      %v755 = vor.u32 %v754, 8388608
      %v756 = vsub.s32 0, %v755
      %v757 = vadd.s32 %v752, 1
      %vm758 = vcmp.gt.s32.totalorder %v757, 0
      %v759 = vsel %vm758, %v757, 0
      %v760 = vshrl.u32 %v759, 5
      %v761 = vand.u32 %v759, 31
      %v762 = vsub.s32 32, %v761
      %v763 = vshrl.u32 683565275, %v762
      %v764 = vshll.u32 683565275, %v761
      %v765 = vshrl.u32 2475754826, %v762
      %v766 = vor.u32 %v764, %v765
      %v767 = vshll.u32 2475754826, %v761
      %v768 = vshrl.u32 2131351028, %v762
      %v769 = vor.u32 %v767, %v768
      %v770 = vshll.u32 2131351028, %v761
      %v771 = vshrl.u32 2102212464, %v762
      %v772 = vor.u32 %v770, %v771
      %v773 = vshll.u32 2102212464, %v761
      %v774 = vshrl.u32 920167782, %v762
      %v775 = vor.u32 %v773, %v774
      %v776 = vshll.u32 920167782, %v761
      %v777 = vshrl.u32 1326507024, %v762
      %v778 = vor.u32 %v776, %v777
      %vm779 = vcmp.lt.s32.totalorder %v760, 1
      %vm780 = vcmp.lt.s32.totalorder %v760, 2
      %vm781 = vcmp.lt.s32.totalorder %v760, 3
      %vm782 = vcmp.lt.s32.totalorder %v760, 4
      %v783 = vsel %vm779, %v763, %v766
      %v784 = vsel %vm782, %v772, 2102212464
      %v785 = vsel %vm781, %v769, %v784
      %v786 = vsel %vm780, %v783, %v785
      %v787 = vsel %vm779, %v766, %v769
      %v788 = vsel %vm782, %v775, 920167782
      %v789 = vsel %vm781, %v772, %v788
      %v790 = vsel %vm780, %v787, %v789
      %v791 = vsel %vm779, %v769, %v772
      %v792 = vsel %vm782, %v778, 1326507024
      %v793 = vsel %vm781, %v775, %v792
      %v794 = vsel %vm780, %v791, %v793
      %v795 = vshll.u32 %v755, 8
      %v796 = vmul.u32.u64.compose %v795, %v794
      %v797 = vextract.low.u32 %v796
      %v798 = vextract.high.u32 %v796
      %v799 = vmul.u32.u64.compose %v795, %v790
      %v800 = vextract.low.u32 %v799
      %v801 = vextract.high.u32 %v799
      %v802 = vmul.u32 %v795, %v786
      %v803 = vadd.s32 %v798, %v800
      %vm804 = vc.u32 %v798, %v800
      %v805 = vadd.s32 %v801, 1
      %v806 = vsel %vm804, %v805, %v801
      %v807 = vadd.s32 %v802, %v806
      %v808 = vadd.s32 %v807, 536870912
      %v809 = vshrl.u32 %v808, 30
      %v810 = vshll.u32 %v809, 30
      %v811 = vsub.s32 %v807, %v810
      %vm812 = vcmp.lt.s32.totalorder %v811, 0
      %v813 = vsub.s32 0, %v811
      %v814 = vsel %vm812, %v813, %v811
      %v815 = vclz %v814
      %v816 = vsub.s32 %v815, 2
      %vm817 = vcmp.gt.s32.totalorder 0, %v816
      %v818 = vsel %vm817, 0, %v816
      %v819 = vsub.s32 32, %v818
      %v820 = vshll.u32 %v811, %v818
      %v821 = vshrl.u32 %v803, %v819
      %v822 = vor.u32 %v820, %v821
      %v823 = vsub.s32 4294967266, %v818
      %v824 = vadd.s32 %v823, 127
      %v825 = vshll.u32 %v824, 23
      %v826 = vor.u32 4788187, %v825
      %v827 = vand.u32 2147483647, %v826
      %v829 = vcvt.s32.f32 %v822
      %v830 = vmul.f32 %v829, %v827
      %v831 = vxor.u32 %v830, 2147483648
      %v832 = vsel %vm749, %v831, %v830
      %v833 = vsub.s32 4, %v809
      %v834 = vsel %vm749, %v833, %v809
      %v835 = vsel %vm748, %v523, %v832
      %v836 = vsel %vm748, 0, %v834
      %v837 = vcosq.f32.pop %v835
      %v838 = vsinq.f32.pop %v835
      %vm839 = vweird.f32 %v523
      %v840 = vadd.s32 %v836, 3
      %v841 = vand.u32 %v840, 3
      %vm842 = vcmp.lt.s32.totalorder %v841, 2
      %vm843 = vcmp.eq.s32.totalorder %v841, 0
      %v844 = vxor.u32 %v838, 2147483648
      %v845 = vsel %vm843, %v837, %v844
      %vm846 = vcmp.eq.s32.totalorder %v841, 2
      %v847 = vxor.u32 %v837, 2147483648
      %v848 = vsel %vm846, %v847, %v838
      %v849 = vsel %vm842, %v845, %v848
      %v850 = vsel %vm839, nan, %v849
      %v851 = vand.u32 2147483647, %v524
      %vm852 = vcmp.le.f32.partialorder %v851, 0.7853982
      %vm853 = vcmp.lt.s32.totalorder %v524, 0
      %v854 = vand.u32 %v524, 2139095040
      %v855 = vshrl.u32 %v854, 23
      %v856 = vsub.s32 %v855, 127
      %v857 = vand.u32 2147483647, %v524
      %v858 = vand.u32 %v857, 8388607
      %v859 = vor.u32 %v858, 8388608
      %v860 = vsub.s32 0, %v859
      %v861 = vadd.s32 %v856, 1
      %vm862 = vcmp.gt.s32.totalorder %v861, 0
      %v863 = vsel %vm862, %v861, 0
      %v864 = vshrl.u32 %v863, 5
      %v865 = vand.u32 %v863, 31
      %v866 = vsub.s32 32, %v865
      %v867 = vshrl.u32 683565275, %v866
      %v868 = vshll.u32 683565275, %v865
      %v869 = vshrl.u32 2475754826, %v866
      %v870 = vor.u32 %v868, %v869
      %v871 = vshll.u32 2475754826, %v865
      %v872 = vshrl.u32 2131351028, %v866
      %v873 = vor.u32 %v871, %v872
      %v874 = vshll.u32 2131351028, %v865
      %v875 = vshrl.u32 2102212464, %v866
      %v876 = vor.u32 %v874, %v875
      %v877 = vshll.u32 2102212464, %v865
      %v878 = vshrl.u32 920167782, %v866
      %v879 = vor.u32 %v877, %v878
      %v880 = vshll.u32 920167782, %v865
      %v881 = vshrl.u32 1326507024, %v866
      %v882 = vor.u32 %v880, %v881
      %vm883 = vcmp.lt.s32.totalorder %v864, 1
      %vm884 = vcmp.lt.s32.totalorder %v864, 2
      %vm885 = vcmp.lt.s32.totalorder %v864, 3
      %vm886 = vcmp.lt.s32.totalorder %v864, 4
      %v887 = vsel %vm883, %v867, %v870
      %v888 = vsel %vm886, %v876, 2102212464
      %v889 = vsel %vm885, %v873, %v888
      %v890 = vsel %vm884, %v887, %v889
      %v891 = vsel %vm883, %v870, %v873
      %v892 = vsel %vm886, %v879, 920167782
      %v893 = vsel %vm885, %v876, %v892
      %v894 = vsel %vm884, %v891, %v893
      %v895 = vsel %vm883, %v873, %v876
      %v896 = vsel %vm886, %v882, 1326507024
      %v897 = vsel %vm885, %v879, %v896
      %v898 = vsel %vm884, %v895, %v897
      %v899 = vshll.u32 %v859, 8
      %v900 = vmul.u32.u64.compose %v899, %v898
      %v901 = vextract.low.u32 %v900
      %v902 = vextract.high.u32 %v900
      %v903 = vmul.u32.u64.compose %v899, %v894
      %v904 = vextract.low.u32 %v903
      %v905 = vextract.high.u32 %v903
      %v906 = vmul.u32 %v899, %v890
      %v907 = vadd.s32 %v902, %v904
      %vm908 = vc.u32 %v902, %v904
      %v909 = vadd.s32 %v905, 1
      %v910 = vsel %vm908, %v909, %v905
      %v911 = vadd.s32 %v906, %v910
      %v912 = vadd.s32 %v911, 536870912
      %v913 = vshrl.u32 %v912, 30
      %v914 = vshll.u32 %v913, 30
      %v915 = vsub.s32 %v911, %v914
      %vm916 = vcmp.lt.s32.totalorder %v915, 0
      %v917 = vsub.s32 0, %v915
      %v918 = vsel %vm916, %v917, %v915
      %v919 = vclz %v918
      %v920 = vsub.s32 %v919, 2
      %vm921 = vcmp.gt.s32.totalorder 0, %v920
      %v922 = vsel %vm921, 0, %v920
      %v923 = vsub.s32 32, %v922
      %v924 = vshll.u32 %v915, %v922
      %v925 = vshrl.u32 %v907, %v923
      %v926 = vor.u32 %v924, %v925
      %v927 = vsub.s32 4294967266, %v922
      %v928 = vadd.s32 %v927, 127
      %v929 = vshll.u32 %v928, 23
      %v930 = vor.u32 4788187, %v929
      %v931 = vand.u32 2147483647, %v930
      %v933 = vcvt.s32.f32 %v926
      %v934 = vmul.f32 %v933, %v931
      %v935 = vxor.u32 %v934, 2147483648
      %v936 = vsel %vm853, %v935, %v934
      %v937 = vsub.s32 4, %v913
      %v938 = vsel %vm853, %v937, %v913
      %v939 = vsel %vm852, %v524, %v936
      %v940 = vsel %vm852, 0, %v938
      %v941 = vcosq.f32.pop %v939
      %v942 = vsinq.f32.pop %v939
      %vm943 = vweird.f32 %v524
      %v944 = vadd.s32 %v940, 3
      %v945 = vand.u32 %v944, 3
      %vm946 = vcmp.lt.s32.totalorder %v945, 2
      %vm947 = vcmp.eq.s32.totalorder %v945, 0
      %v948 = vxor.u32 %v942, 2147483648
      %v949 = vsel %vm947, %v941, %v948
      %vm950 = vcmp.eq.s32.totalorder %v945, 2
      %v951 = vxor.u32 %v941, 2147483648
      %v952 = vsel %vm950, %v951, %v942
      %v953 = vsel %vm946, %v949, %v952
      %v954 = vsel %vm943, nan, %v953
      %v955 = vand.u32 2147483647, %v525
      %vm956 = vcmp.le.f32.partialorder %v955, 0.7853982
      %vm957 = vcmp.lt.s32.totalorder %v525, 0
      %v958 = vand.u32 %v525, 2139095040
      %v959 = vshrl.u32 %v958, 23
      %v960 = vsub.s32 %v959, 127
      %v961 = vand.u32 2147483647, %v525
      %v962 = vand.u32 %v961, 8388607
      %v963 = vor.u32 %v962, 8388608
      %v964 = vsub.s32 0, %v963
      %v965 = vadd.s32 %v960, 1
      %vm966 = vcmp.gt.s32.totalorder %v965, 0
      %v967 = vsel %vm966, %v965, 0
      %v968 = vshrl.u32 %v967, 5
      %v969 = vand.u32 %v967, 31
      %v970 = vsub.s32 32, %v969
      %v971 = vshrl.u32 683565275, %v970
      %v972 = vshll.u32 683565275, %v969
      %v973 = vshrl.u32 2475754826, %v970
      %v974 = vor.u32 %v972, %v973
      %v975 = vshll.u32 2475754826, %v969
      %v976 = vshrl.u32 2131351028, %v970
      %v977 = vor.u32 %v975, %v976
      %v978 = vshll.u32 2131351028, %v969
      %v979 = vshrl.u32 2102212464, %v970
      %v980 = vor.u32 %v978, %v979
      %v981 = vshll.u32 2102212464, %v969
      %v982 = vshrl.u32 920167782, %v970
      %v983 = vor.u32 %v981, %v982
      %v984 = vshll.u32 920167782, %v969
      %v985 = vshrl.u32 1326507024, %v970
      %v986 = vor.u32 %v984, %v985
      %vm987 = vcmp.lt.s32.totalorder %v968, 1
      %vm988 = vcmp.lt.s32.totalorder %v968, 2
      %vm989 = vcmp.lt.s32.totalorder %v968, 3
      %vm990 = vcmp.lt.s32.totalorder %v968, 4
      %v991 = vsel %vm987, %v971, %v974
      %v992 = vsel %vm990, %v980, 2102212464
      %v993 = vsel %vm989, %v977, %v992
      %v994 = vsel %vm988, %v991, %v993
      %v995 = vsel %vm987, %v974, %v977
      %v996 = vsel %vm990, %v983, 920167782
      %v997 = vsel %vm989, %v980, %v996
      %v998 = vsel %vm988, %v995, %v997
      %v999 = vsel %vm987, %v977, %v980
      %v1000 = vsel %vm990, %v986, 1326507024
      %v1001 = vsel %vm989, %v983, %v1000
      %v1002 = vsel %vm988, %v999, %v1001
      %v1003 = vshll.u32 %v963, 8
      %v1004 = vmul.u32.u64.compose %v1003, %v1002
      %v1005 = vextract.low.u32 %v1004
      %v1006 = vextract.high.u32 %v1004
      %v1007 = vmul.u32.u64.compose %v1003, %v998
      %v1008 = vextract.low.u32 %v1007
      %v1009 = vextract.high.u32 %v1007
      %v1010 = vmul.u32 %v1003, %v994
      %v1011 = vadd.s32 %v1006, %v1008
      %vm1012 = vc.u32 %v1006, %v1008
      %v1013 = vadd.s32 %v1009, 1
      %v1014 = vsel %vm1012, %v1013, %v1009
      %v1015 = vadd.s32 %v1010, %v1014
      %v1016 = vadd.s32 %v1015, 536870912
      %v1017 = vshrl.u32 %v1016, 30
      %v1018 = vshll.u32 %v1017, 30
      %v1019 = vsub.s32 %v1015, %v1018
      %vm1020 = vcmp.lt.s32.totalorder %v1019, 0
      %v1021 = vsub.s32 0, %v1019
      %v1022 = vsel %vm1020, %v1021, %v1019
      %v1023 = vclz %v1022
      %v1024 = vsub.s32 %v1023, 2
      %vm1025 = vcmp.gt.s32.totalorder 0, %v1024
      %v1026 = vsel %vm1025, 0, %v1024
      %v1027 = vsub.s32 32, %v1026
      %v1028 = vshll.u32 %v1019, %v1026
      %v1029 = vshrl.u32 %v1011, %v1027
      %v1030 = vor.u32 %v1028, %v1029
      %v1031 = vsub.s32 4294967266, %v1026
      %v1032 = vadd.s32 %v1031, 127
      %v1033 = vshll.u32 %v1032, 23
      %v1034 = vor.u32 4788187, %v1033
      %v1035 = vand.u32 2147483647, %v1034
      %v1037 = vcvt.s32.f32 %v1030
      %v1038 = vmul.f32 %v1037, %v1035
      %v1039 = vxor.u32 %v1038, 2147483648
      %v1040 = vsel %vm957, %v1039, %v1038
      %v1041 = vsub.s32 4, %v1017
      %v1042 = vsel %vm957, %v1041, %v1017
      %v1043 = vsel %vm956, %v525, %v1040
      %v1044 = vsel %vm956, 0, %v1042
      %v1045 = vcosq.f32.pop %v1043
      %v1046 = vsinq.f32.pop %v1043
      %vm1047 = vweird.f32 %v525
      %v1048 = vadd.s32 %v1044, 3
      %v1049 = vand.u32 %v1048, 3
      %vm1050 = vcmp.lt.s32.totalorder %v1049, 2
      %vm1051 = vcmp.eq.s32.totalorder %v1049, 0
      %v1052 = vxor.u32 %v1046, 2147483648
      %v1053 = vsel %vm1051, %v1045, %v1052
      %vm1054 = vcmp.eq.s32.totalorder %v1049, 2
      %v1055 = vxor.u32 %v1045, 2147483648
      %v1056 = vsel %vm1054, %v1055, %v1046
      %v1057 = vsel %vm1050, %v1053, %v1056
      %v1058 = vsel %vm1047, nan, %v1057
      %v1059 = vand.u32 2147483647, %v526
      %vm1060 = vcmp.le.f32.partialorder %v1059, 0.7853982
      %vm1061 = vcmp.lt.s32.totalorder %v526, 0
      %v1062 = vand.u32 %v526, 2139095040
      %v1063 = vshrl.u32 %v1062, 23
      %v1064 = vsub.s32 %v1063, 127
      %v1065 = vand.u32 2147483647, %v526
      %v1066 = vand.u32 %v1065, 8388607
      %v1067 = vor.u32 %v1066, 8388608
      %v1068 = vsub.s32 0, %v1067
      %v1069 = vadd.s32 %v1064, 1
      %vm1070 = vcmp.gt.s32.totalorder %v1069, 0
      %v1071 = vsel %vm1070, %v1069, 0
      %v1072 = vshrl.u32 %v1071, 5
      %v1073 = vand.u32 %v1071, 31
      %v1074 = vsub.s32 32, %v1073
      %v1075 = vshrl.u32 683565275, %v1074
      %v1076 = vshll.u32 683565275, %v1073
      %v1077 = vshrl.u32 2475754826, %v1074
      %v1078 = vor.u32 %v1076, %v1077
      %v1079 = vshll.u32 2475754826, %v1073
      %v1080 = vshrl.u32 2131351028, %v1074
      %v1081 = vor.u32 %v1079, %v1080
      %v1082 = vshll.u32 2131351028, %v1073
      %v1083 = vshrl.u32 2102212464, %v1074
      %v1084 = vor.u32 %v1082, %v1083
      %v1085 = vshll.u32 2102212464, %v1073
      %v1086 = vshrl.u32 920167782, %v1074
      %v1087 = vor.u32 %v1085, %v1086
      %v1088 = vshll.u32 920167782, %v1073
      %v1089 = vshrl.u32 1326507024, %v1074
      %v1090 = vor.u32 %v1088, %v1089
      %vm1091 = vcmp.lt.s32.totalorder %v1072, 1
      %vm1092 = vcmp.lt.s32.totalorder %v1072, 2
      %vm1093 = vcmp.lt.s32.totalorder %v1072, 3
      %vm1094 = vcmp.lt.s32.totalorder %v1072, 4
      %v1095 = vsel %vm1091, %v1075, %v1078
      %v1096 = vsel %vm1094, %v1084, 2102212464
      %v1097 = vsel %vm1093, %v1081, %v1096
      %v1098 = vsel %vm1092, %v1095, %v1097
      %v1099 = vsel %vm1091, %v1078, %v1081
      %v1100 = vsel %vm1094, %v1087, 920167782
      %v1101 = vsel %vm1093, %v1084, %v1100
      %v1102 = vsel %vm1092, %v1099, %v1101
      %v1103 = vsel %vm1091, %v1081, %v1084
      %v1104 = vsel %vm1094, %v1090, 1326507024
      %v1105 = vsel %vm1093, %v1087, %v1104
      %v1106 = vsel %vm1092, %v1103, %v1105
      %v1107 = vshll.u32 %v1067, 8
      %v1108 = vmul.u32.u64.compose %v1107, %v1106
      %v1109 = vextract.low.u32 %v1108
      %v1110 = vextract.high.u32 %v1108
      %v1111 = vmul.u32.u64.compose %v1107, %v1102
      %v1112 = vextract.low.u32 %v1111
      %v1113 = vextract.high.u32 %v1111
      %v1114 = vmul.u32 %v1107, %v1098
      %v1115 = vadd.s32 %v1110, %v1112
      %vm1116 = vc.u32 %v1110, %v1112
      %v1117 = vadd.s32 %v1113, 1
      %v1118 = vsel %vm1116, %v1117, %v1113
      %v1119 = vadd.s32 %v1114, %v1118
      %v1120 = vadd.s32 %v1119, 536870912
      %v1121 = vshrl.u32 %v1120, 30
      %v1122 = vshll.u32 %v1121, 30
      %v1123 = vsub.s32 %v1119, %v1122
      %vm1124 = vcmp.lt.s32.totalorder %v1123, 0
      %v1125 = vsub.s32 0, %v1123
      %v1126 = vsel %vm1124, %v1125, %v1123
      %v1127 = vclz %v1126
      %v1128 = vsub.s32 %v1127, 2
      %vm1129 = vcmp.gt.s32.totalorder 0, %v1128
      %v1130 = vsel %vm1129, 0, %v1128
      %v1131 = vsub.s32 32, %v1130
      %v1132 = vshll.u32 %v1123, %v1130
      %v1133 = vshrl.u32 %v1115, %v1131
      %v1134 = vor.u32 %v1132, %v1133
      %v1135 = vsub.s32 4294967266, %v1130
      %v1136 = vadd.s32 %v1135, 127
      %v1137 = vshll.u32 %v1136, 23
      %v1138 = vor.u32 4788187, %v1137
      %v1139 = vand.u32 2147483647, %v1138
      %v1141 = vcvt.s32.f32 %v1134
      %v1142 = vmul.f32 %v1141, %v1139
      %v1143 = vxor.u32 %v1142, 2147483648
      %v1144 = vsel %vm1061, %v1143, %v1142
      %v1145 = vsub.s32 4, %v1121
      %v1146 = vsel %vm1061, %v1145, %v1121
      %v1147 = vsel %vm1060, %v526, %v1144
      %v1148 = vsel %vm1060, 0, %v1146
      %v1149 = vcosq.f32.pop %v1147
      %v1150 = vsinq.f32.pop %v1147
      %vm1151 = vweird.f32 %v526
      %v1152 = vadd.s32 %v1148, 3
      %v1153 = vand.u32 %v1152, 3
      %vm1154 = vcmp.lt.s32.totalorder %v1153, 2
      %vm1155 = vcmp.eq.s32.totalorder %v1153, 0
      %v1156 = vxor.u32 %v1150, 2147483648
      %v1157 = vsel %vm1155, %v1149, %v1156
      %vm1158 = vcmp.eq.s32.totalorder %v1153, 2
      %v1159 = vxor.u32 %v1149, 2147483648
      %v1160 = vsel %vm1158, %v1159, %v1150
      %v1161 = vsel %vm1154, %v1157, %v1160
      %v1162 = vsel %vm1151, nan, %v1161
      %v1163 = vand.u32 2147483647, %v527
      %vm1164 = vcmp.le.f32.partialorder %v1163, 0.7853982
      %vm1165 = vcmp.lt.s32.totalorder %v527, 0
      %v1166 = vand.u32 %v527, 2139095040
      %v1167 = vshrl.u32 %v1166, 23
      %v1168 = vsub.s32 %v1167, 127
      %v1169 = vand.u32 2147483647, %v527
      %v1170 = vand.u32 %v1169, 8388607
      %v1171 = vor.u32 %v1170, 8388608
      %v1172 = vsub.s32 0, %v1171
      %v1173 = vadd.s32 %v1168, 1
      %vm1174 = vcmp.gt.s32.totalorder %v1173, 0
      %v1175 = vsel %vm1174, %v1173, 0
      %v1176 = vshrl.u32 %v1175, 5
      %v1177 = vand.u32 %v1175, 31
      %v1178 = vsub.s32 32, %v1177
      %v1179 = vshrl.u32 683565275, %v1178
      %v1180 = vshll.u32 683565275, %v1177
      %v1181 = vshrl.u32 2475754826, %v1178
      %v1182 = vor.u32 %v1180, %v1181
      %v1183 = vshll.u32 2475754826, %v1177
      %v1184 = vshrl.u32 2131351028, %v1178
      %v1185 = vor.u32 %v1183, %v1184
      %v1186 = vshll.u32 2131351028, %v1177
      %v1187 = vshrl.u32 2102212464, %v1178
      %v1188 = vor.u32 %v1186, %v1187
      %v1189 = vshll.u32 2102212464, %v1177
      %v1190 = vshrl.u32 920167782, %v1178
      %v1191 = vor.u32 %v1189, %v1190
      %v1192 = vshll.u32 920167782, %v1177
      %v1193 = vshrl.u32 1326507024, %v1178
      %v1194 = vor.u32 %v1192, %v1193
      %vm1195 = vcmp.lt.s32.totalorder %v1176, 1
      %vm1196 = vcmp.lt.s32.totalorder %v1176, 2
      %vm1197 = vcmp.lt.s32.totalorder %v1176, 3
      %vm1198 = vcmp.lt.s32.totalorder %v1176, 4
      %v1199 = vsel %vm1195, %v1179, %v1182
      %v1200 = vsel %vm1198, %v1188, 2102212464
      %v1201 = vsel %vm1197, %v1185, %v1200
      %v1202 = vsel %vm1196, %v1199, %v1201
      %v1203 = vsel %vm1195, %v1182, %v1185
      %v1204 = vsel %vm1198, %v1191, 920167782
      %v1205 = vsel %vm1197, %v1188, %v1204
      %v1206 = vsel %vm1196, %v1203, %v1205
      %v1207 = vsel %vm1195, %v1185, %v1188
      %v1208 = vsel %vm1198, %v1194, 1326507024
      %v1209 = vsel %vm1197, %v1191, %v1208
      %v1210 = vsel %vm1196, %v1207, %v1209
      %v1211 = vshll.u32 %v1171, 8
      %v1212 = vmul.u32.u64.compose %v1211, %v1210
      %v1213 = vextract.low.u32 %v1212
      %v1214 = vextract.high.u32 %v1212
      %v1215 = vmul.u32.u64.compose %v1211, %v1206
      %v1216 = vextract.low.u32 %v1215
      %v1217 = vextract.high.u32 %v1215
      %v1218 = vmul.u32 %v1211, %v1202
      %v1219 = vadd.s32 %v1214, %v1216
      %vm1220 = vc.u32 %v1214, %v1216
      %v1221 = vadd.s32 %v1217, 1
      %v1222 = vsel %vm1220, %v1221, %v1217
      %v1223 = vadd.s32 %v1218, %v1222
      %v1224 = vadd.s32 %v1223, 536870912
      %v1225 = vshrl.u32 %v1224, 30
      %v1226 = vshll.u32 %v1225, 30
      %v1227 = vsub.s32 %v1223, %v1226
      %vm1228 = vcmp.lt.s32.totalorder %v1227, 0
      %v1229 = vsub.s32 0, %v1227
      %v1230 = vsel %vm1228, %v1229, %v1227
      %v1231 = vclz %v1230
      %v1232 = vsub.s32 %v1231, 2
      %vm1233 = vcmp.gt.s32.totalorder 0, %v1232
      %v1234 = vsel %vm1233, 0, %v1232
      %v1235 = vsub.s32 32, %v1234
      %v1236 = vshll.u32 %v1227, %v1234
      %v1237 = vshrl.u32 %v1219, %v1235
      %v1238 = vor.u32 %v1236, %v1237
      %v1239 = vsub.s32 4294967266, %v1234
      %v1240 = vadd.s32 %v1239, 127
      %v1241 = vshll.u32 %v1240, 23
      %v1242 = vor.u32 4788187, %v1241
      %v1243 = vand.u32 2147483647, %v1242
      %v1245 = vcvt.s32.f32 %v1238
      %v1246 = vmul.f32 %v1245, %v1243
      %v1247 = vxor.u32 %v1246, 2147483648
      %v1248 = vsel %vm1165, %v1247, %v1246
      %v1249 = vsub.s32 4, %v1225
      %v1250 = vsel %vm1165, %v1249, %v1225
      %v1251 = vsel %vm1164, %v527, %v1248
      %v1252 = vsel %vm1164, 0, %v1250
      %v1253 = vcosq.f32.pop %v1251
      %v1254 = vsinq.f32.pop %v1251
      %vm1255 = vweird.f32 %v527
      %v1256 = vadd.s32 %v1252, 3
      %v1257 = vand.u32 %v1256, 3
      %vm1258 = vcmp.lt.s32.totalorder %v1257, 2
      %vm1259 = vcmp.eq.s32.totalorder %v1257, 0
      %v1260 = vxor.u32 %v1254, 2147483648
      %v1261 = vsel %vm1259, %v1253, %v1260
      %vm1262 = vcmp.eq.s32.totalorder %v1257, 2
      %v1263 = vxor.u32 %v1253, 2147483648
      %v1264 = vsel %vm1262, %v1263, %v1254
      %v1265 = vsel %vm1258, %v1261, %v1264
      %v1266 = vsel %vm1255, nan, %v1265
      %v1267 = vand.u32 2147483647, %v528
      %vm1268 = vcmp.le.f32.partialorder %v1267, 0.7853982
      %vm1269 = vcmp.lt.s32.totalorder %v528, 0
      %v1270 = vand.u32 %v528, 2139095040
      %v1271 = vshrl.u32 %v1270, 23
      %v1272 = vsub.s32 %v1271, 127
      %v1273 = vand.u32 2147483647, %v528
      %v1274 = vand.u32 %v1273, 8388607
      %v1275 = vor.u32 %v1274, 8388608
      %v1276 = vsub.s32 0, %v1275
      %v1277 = vadd.s32 %v1272, 1
      %vm1278 = vcmp.gt.s32.totalorder %v1277, 0
      %v1279 = vsel %vm1278, %v1277, 0
      %v1280 = vshrl.u32 %v1279, 5
      %v1281 = vand.u32 %v1279, 31
      %v1282 = vsub.s32 32, %v1281
      %v1283 = vshrl.u32 683565275, %v1282
      %v1284 = vshll.u32 683565275, %v1281
      %v1285 = vshrl.u32 2475754826, %v1282
      %v1286 = vor.u32 %v1284, %v1285
      %v1287 = vshll.u32 2475754826, %v1281
      %v1288 = vshrl.u32 2131351028, %v1282
      %v1289 = vor.u32 %v1287, %v1288
      %v1290 = vshll.u32 2131351028, %v1281
      %v1291 = vshrl.u32 2102212464, %v1282
      %v1292 = vor.u32 %v1290, %v1291
      %v1293 = vshll.u32 2102212464, %v1281
      %v1294 = vshrl.u32 920167782, %v1282
      %v1295 = vor.u32 %v1293, %v1294
      %v1296 = vshll.u32 920167782, %v1281
      %v1297 = vshrl.u32 1326507024, %v1282
      %v1298 = vor.u32 %v1296, %v1297
      %vm1299 = vcmp.lt.s32.totalorder %v1280, 1
      %vm1300 = vcmp.lt.s32.totalorder %v1280, 2
      %vm1301 = vcmp.lt.s32.totalorder %v1280, 3
      %vm1302 = vcmp.lt.s32.totalorder %v1280, 4
      %v1303 = vsel %vm1299, %v1283, %v1286
      %v1304 = vsel %vm1302, %v1292, 2102212464
      %v1305 = vsel %vm1301, %v1289, %v1304
      %v1306 = vsel %vm1300, %v1303, %v1305
      %v1307 = vsel %vm1299, %v1286, %v1289
      %v1308 = vsel %vm1302, %v1295, 920167782
      %v1309 = vsel %vm1301, %v1292, %v1308
      %v1310 = vsel %vm1300, %v1307, %v1309
      %v1311 = vsel %vm1299, %v1289, %v1292
      %v1312 = vsel %vm1302, %v1298, 1326507024
      %v1313 = vsel %vm1301, %v1295, %v1312
      %v1314 = vsel %vm1300, %v1311, %v1313
      %v1315 = vshll.u32 %v1275, 8
      %v1316 = vmul.u32.u64.compose %v1315, %v1314
      %v1317 = vextract.low.u32 %v1316
      %v1318 = vextract.high.u32 %v1316
      %v1319 = vmul.u32.u64.compose %v1315, %v1310
      %v1320 = vextract.low.u32 %v1319
      %v1321 = vextract.high.u32 %v1319
      %v1322 = vmul.u32 %v1315, %v1306
      %v1323 = vadd.s32 %v1318, %v1320
      %vm1324 = vc.u32 %v1318, %v1320
      %v1325 = vadd.s32 %v1321, 1
      %v1326 = vsel %vm1324, %v1325, %v1321
      %v1327 = vadd.s32 %v1322, %v1326
      %v1328 = vadd.s32 %v1327, 536870912
      %v1329 = vshrl.u32 %v1328, 30
      %v1330 = vshll.u32 %v1329, 30
      %v1331 = vsub.s32 %v1327, %v1330
      %vm1332 = vcmp.lt.s32.totalorder %v1331, 0
      %v1333 = vsub.s32 0, %v1331
      %v1334 = vsel %vm1332, %v1333, %v1331
      %v1335 = vclz %v1334
      %v1336 = vsub.s32 %v1335, 2
      %vm1337 = vcmp.gt.s32.totalorder 0, %v1336
      %v1338 = vsel %vm1337, 0, %v1336
      %v1339 = vsub.s32 32, %v1338
      %v1340 = vshll.u32 %v1331, %v1338
      %v1341 = vshrl.u32 %v1323, %v1339
      %v1342 = vor.u32 %v1340, %v1341
      %v1343 = vsub.s32 4294967266, %v1338
      %v1344 = vadd.s32 %v1343, 127
      %v1345 = vshll.u32 %v1344, 23
      %v1346 = vor.u32 4788187, %v1345
      %v1347 = vand.u32 2147483647, %v1346
      %v1349 = vcvt.s32.f32 %v1342
      %v1350 = vmul.f32 %v1349, %v1347
      %v1351 = vxor.u32 %v1350, 2147483648
      %v1352 = vsel %vm1269, %v1351, %v1350
      %v1353 = vsub.s32 4, %v1329
      %v1354 = vsel %vm1269, %v1353, %v1329
      %v1355 = vsel %vm1268, %v528, %v1352
      %v1356 = vsel %vm1268, 0, %v1354
      %v1357 = vcosq.f32.pop %v1355
      %v1358 = vsinq.f32.pop %v1355
      %vm1359 = vweird.f32 %v528
      %v1360 = vadd.s32 %v1356, 3
      %v1361 = vand.u32 %v1360, 3
      %vm1362 = vcmp.lt.s32.totalorder %v1361, 2
      %vm1363 = vcmp.eq.s32.totalorder %v1361, 0
      %v1364 = vxor.u32 %v1358, 2147483648
      %v1365 = vsel %vm1363, %v1357, %v1364
      %vm1366 = vcmp.eq.s32.totalorder %v1361, 2
      %v1367 = vxor.u32 %v1357, 2147483648
      %v1368 = vsel %vm1366, %v1367, %v1358
      %v1369 = vsel %vm1362, %v1365, %v1368
      %v1370 = vsel %vm1359, nan, %v1369
      %v1371 = vand.u32 2147483647, %v529
      %vm1372 = vcmp.le.f32.partialorder %v1371, 0.7853982
      %vm1373 = vcmp.lt.s32.totalorder %v529, 0
      %v1374 = vand.u32 %v529, 2139095040
      %v1375 = vshrl.u32 %v1374, 23
      %v1376 = vsub.s32 %v1375, 127
      %v1377 = vand.u32 2147483647, %v529
      %v1378 = vand.u32 %v1377, 8388607
      %v1379 = vor.u32 %v1378, 8388608
      %v1380 = vsub.s32 0, %v1379
      %v1381 = vadd.s32 %v1376, 1
      %vm1382 = vcmp.gt.s32.totalorder %v1381, 0
      %v1383 = vsel %vm1382, %v1381, 0
      %v1384 = vshrl.u32 %v1383, 5
      %v1385 = vand.u32 %v1383, 31
      %v1386 = vsub.s32 32, %v1385
      %v1387 = vshrl.u32 683565275, %v1386
      %v1388 = vshll.u32 683565275, %v1385
      %v1389 = vshrl.u32 2475754826, %v1386
      %v1390 = vor.u32 %v1388, %v1389
      %v1391 = vshll.u32 2475754826, %v1385
      %v1392 = vshrl.u32 2131351028, %v1386
      %v1393 = vor.u32 %v1391, %v1392
      %v1394 = vshll.u32 2131351028, %v1385
      %v1395 = vshrl.u32 2102212464, %v1386
      %v1396 = vor.u32 %v1394, %v1395
      %v1397 = vshll.u32 2102212464, %v1385
      %v1398 = vshrl.u32 920167782, %v1386
      %v1399 = vor.u32 %v1397, %v1398
      %v1400 = vshll.u32 920167782, %v1385
      %v1401 = vshrl.u32 1326507024, %v1386
      %v1402 = vor.u32 %v1400, %v1401
      %vm1403 = vcmp.lt.s32.totalorder %v1384, 1
      %vm1404 = vcmp.lt.s32.totalorder %v1384, 2
      %vm1405 = vcmp.lt.s32.totalorder %v1384, 3
      %vm1406 = vcmp.lt.s32.totalorder %v1384, 4
      %v1407 = vsel %vm1403, %v1387, %v1390
      %v1408 = vsel %vm1406, %v1396, 2102212464
      %v1409 = vsel %vm1405, %v1393, %v1408
      %v1410 = vsel %vm1404, %v1407, %v1409
      %v1411 = vsel %vm1403, %v1390, %v1393
      %v1412 = vsel %vm1406, %v1399, 920167782
      %v1413 = vsel %vm1405, %v1396, %v1412
      %v1414 = vsel %vm1404, %v1411, %v1413
      %v1415 = vsel %vm1403, %v1393, %v1396
      %v1416 = vsel %vm1406, %v1402, 1326507024
      %v1417 = vsel %vm1405, %v1399, %v1416
      %v1418 = vsel %vm1404, %v1415, %v1417
      %v1419 = vshll.u32 %v1379, 8
      %v1420 = vmul.u32.u64.compose %v1419, %v1418
      %v1421 = vextract.low.u32 %v1420
      %v1422 = vextract.high.u32 %v1420
      %v1423 = vmul.u32.u64.compose %v1419, %v1414
      %v1424 = vextract.low.u32 %v1423
      %v1425 = vextract.high.u32 %v1423
      %v1426 = vmul.u32 %v1419, %v1410
      %v1427 = vadd.s32 %v1422, %v1424
      %vm1428 = vc.u32 %v1422, %v1424
      %v1429 = vadd.s32 %v1425, 1
      %v1430 = vsel %vm1428, %v1429, %v1425
      %v1431 = vadd.s32 %v1426, %v1430
      %v1432 = vadd.s32 %v1431, 536870912
      %v1433 = vshrl.u32 %v1432, 30
      %v1434 = vshll.u32 %v1433, 30
      %v1435 = vsub.s32 %v1431, %v1434
      %vm1436 = vcmp.lt.s32.totalorder %v1435, 0
      %v1437 = vsub.s32 0, %v1435
      %v1438 = vsel %vm1436, %v1437, %v1435
      %v1439 = vclz %v1438
      %v1440 = vsub.s32 %v1439, 2
      %vm1441 = vcmp.gt.s32.totalorder 0, %v1440
      %v1442 = vsel %vm1441, 0, %v1440
      %v1443 = vsub.s32 32, %v1442
      %v1444 = vshll.u32 %v1435, %v1442
      %v1445 = vshrl.u32 %v1427, %v1443
      %v1446 = vor.u32 %v1444, %v1445
      %v1447 = vsub.s32 4294967266, %v1442
      %v1448 = vadd.s32 %v1447, 127
      %v1449 = vshll.u32 %v1448, 23
      %v1450 = vor.u32 4788187, %v1449
      %v1451 = vand.u32 2147483647, %v1450
      %v1453 = vcvt.s32.f32 %v1446
      %v1454 = vmul.f32 %v1453, %v1451
      %v1455 = vxor.u32 %v1454, 2147483648
      %v1456 = vsel %vm1373, %v1455, %v1454
      %v1457 = vsub.s32 4, %v1433
      %v1458 = vsel %vm1373, %v1457, %v1433
      %v1459 = vsel %vm1372, %v529, %v1456
      %v1460 = vsel %vm1372, 0, %v1458
      %v1461 = vcosq.f32.pop %v1459
      %v1462 = vsinq.f32.pop %v1459
      %vm1463 = vweird.f32 %v529
      %v1464 = vadd.s32 %v1460, 3
      %v1465 = vand.u32 %v1464, 3
      %vm1466 = vcmp.lt.s32.totalorder %v1465, 2
      %vm1467 = vcmp.eq.s32.totalorder %v1465, 0
      %v1468 = vxor.u32 %v1462, 2147483648
      %v1469 = vsel %vm1467, %v1461, %v1468
      %vm1470 = vcmp.eq.s32.totalorder %v1465, 2
      %v1471 = vxor.u32 %v1461, 2147483648
      %v1472 = vsel %vm1470, %v1471, %v1462
      %v1473 = vsel %vm1466, %v1469, %v1472
      %v1474 = vsel %vm1463, nan, %v1473
      %v1475 = vand.u32 2147483647, %v530
      %vm1476 = vcmp.le.f32.partialorder %v1475, 0.7853982
      %vm1477 = vcmp.lt.s32.totalorder %v530, 0
      %v1478 = vand.u32 %v530, 2139095040
      %v1479 = vshrl.u32 %v1478, 23
      %v1480 = vsub.s32 %v1479, 127
      %v1481 = vand.u32 2147483647, %v530
      %v1482 = vand.u32 %v1481, 8388607
      %v1483 = vor.u32 %v1482, 8388608
      %v1484 = vsub.s32 0, %v1483
      %v1485 = vadd.s32 %v1480, 1
      %vm1486 = vcmp.gt.s32.totalorder %v1485, 0
      %v1487 = vsel %vm1486, %v1485, 0
      %v1488 = vshrl.u32 %v1487, 5
      %v1489 = vand.u32 %v1487, 31
      %v1490 = vsub.s32 32, %v1489
      %v1491 = vshrl.u32 683565275, %v1490
      %v1492 = vshll.u32 683565275, %v1489
      %v1493 = vshrl.u32 2475754826, %v1490
      %v1494 = vor.u32 %v1492, %v1493
      %v1495 = vshll.u32 2475754826, %v1489
      %v1496 = vshrl.u32 2131351028, %v1490
      %v1497 = vor.u32 %v1495, %v1496
      %v1498 = vshll.u32 2131351028, %v1489
      %v1499 = vshrl.u32 2102212464, %v1490
      %v1500 = vor.u32 %v1498, %v1499
      %v1501 = vshll.u32 2102212464, %v1489
      %v1502 = vshrl.u32 920167782, %v1490
      %v1503 = vor.u32 %v1501, %v1502
      %v1504 = vshll.u32 920167782, %v1489
      %v1505 = vshrl.u32 1326507024, %v1490
      %v1506 = vor.u32 %v1504, %v1505
      %vm1507 = vcmp.lt.s32.totalorder %v1488, 1
      %vm1508 = vcmp.lt.s32.totalorder %v1488, 2
      %vm1509 = vcmp.lt.s32.totalorder %v1488, 3
      %vm1510 = vcmp.lt.s32.totalorder %v1488, 4
      %v1511 = vsel %vm1507, %v1491, %v1494
      %v1512 = vsel %vm1510, %v1500, 2102212464
      %v1513 = vsel %vm1509, %v1497, %v1512
      %v1514 = vsel %vm1508, %v1511, %v1513
      %v1515 = vsel %vm1507, %v1494, %v1497
      %v1516 = vsel %vm1510, %v1503, 920167782
      %v1517 = vsel %vm1509, %v1500, %v1516
      %v1518 = vsel %vm1508, %v1515, %v1517
      %v1519 = vsel %vm1507, %v1497, %v1500
      %v1520 = vsel %vm1510, %v1506, 1326507024
      %v1521 = vsel %vm1509, %v1503, %v1520
      %v1522 = vsel %vm1508, %v1519, %v1521
      %v1523 = vshll.u32 %v1483, 8
      %v1524 = vmul.u32.u64.compose %v1523, %v1522
      %v1525 = vextract.low.u32 %v1524
      %v1526 = vextract.high.u32 %v1524
      %v1527 = vmul.u32.u64.compose %v1523, %v1518
      %v1528 = vextract.low.u32 %v1527
      %v1529 = vextract.high.u32 %v1527
      %v1530 = vmul.u32 %v1523, %v1514
      %v1531 = vadd.s32 %v1526, %v1528
      %vm1532 = vc.u32 %v1526, %v1528
      %v1533 = vadd.s32 %v1529, 1
      %v1534 = vsel %vm1532, %v1533, %v1529
      %v1535 = vadd.s32 %v1530, %v1534
      %v1536 = vadd.s32 %v1535, 536870912
      %v1537 = vshrl.u32 %v1536, 30
      %v1538 = vshll.u32 %v1537, 30
      %v1539 = vsub.s32 %v1535, %v1538
      %vm1540 = vcmp.lt.s32.totalorder %v1539, 0
      %v1541 = vsub.s32 0, %v1539
      %v1542 = vsel %vm1540, %v1541, %v1539
      %v1543 = vclz %v1542
      %v1544 = vsub.s32 %v1543, 2
      %vm1545 = vcmp.gt.s32.totalorder 0, %v1544
      %v1546 = vsel %vm1545, 0, %v1544
      %v1547 = vsub.s32 32, %v1546
      %v1548 = vshll.u32 %v1539, %v1546
      %v1549 = vshrl.u32 %v1531, %v1547
      %v1550 = vor.u32 %v1548, %v1549
      %v1551 = vsub.s32 4294967266, %v1546
      %v1552 = vadd.s32 %v1551, 127
      %v1553 = vshll.u32 %v1552, 23
      %v1554 = vor.u32 4788187, %v1553
      %v1555 = vand.u32 2147483647, %v1554
      %v1557 = vcvt.s32.f32 %v1550
      %v1558 = vmul.f32 %v1557, %v1555
      %v1559 = vxor.u32 %v1558, 2147483648
      %v1560 = vsel %vm1477, %v1559, %v1558
      %v1561 = vsub.s32 4, %v1537
      %v1562 = vsel %vm1477, %v1561, %v1537
      %v1563 = vsel %vm1476, %v530, %v1560
      %v1564 = vsel %vm1476, 0, %v1562
      %v1565 = vcosq.f32.pop %v1563
      %v1566 = vsinq.f32.pop %v1563
      %vm1567 = vweird.f32 %v530
      %v1568 = vadd.s32 %v1564, 3
      %v1569 = vand.u32 %v1568, 3
      %vm1570 = vcmp.lt.s32.totalorder %v1569, 2
      %vm1571 = vcmp.eq.s32.totalorder %v1569, 0
      %v1572 = vxor.u32 %v1566, 2147483648
      %v1573 = vsel %vm1571, %v1565, %v1572
      %vm1574 = vcmp.eq.s32.totalorder %v1569, 2
      %v1575 = vxor.u32 %v1565, 2147483648
      %v1576 = vsel %vm1574, %v1575, %v1566
      %v1577 = vsel %vm1570, %v1573, %v1576
      %v1578 = vsel %vm1567, nan, %v1577
      %v1579 = vand.u32 2147483647, %v531
      %vm1580 = vcmp.le.f32.partialorder %v1579, 0.7853982
      %vm1581 = vcmp.lt.s32.totalorder %v531, 0
      %v1582 = vand.u32 %v531, 2139095040
      %v1583 = vshrl.u32 %v1582, 23
      %v1584 = vsub.s32 %v1583, 127
      %v1585 = vand.u32 2147483647, %v531
      %v1586 = vand.u32 %v1585, 8388607
      %v1587 = vor.u32 %v1586, 8388608
      %v1588 = vsub.s32 0, %v1587
      %v1589 = vadd.s32 %v1584, 1
      %vm1590 = vcmp.gt.s32.totalorder %v1589, 0
      %v1591 = vsel %vm1590, %v1589, 0
      %v1592 = vshrl.u32 %v1591, 5
      %v1593 = vand.u32 %v1591, 31
      %v1594 = vsub.s32 32, %v1593
      %v1595 = vshrl.u32 683565275, %v1594
      %v1596 = vshll.u32 683565275, %v1593
      %v1597 = vshrl.u32 2475754826, %v1594
      %v1598 = vor.u32 %v1596, %v1597
      %v1599 = vshll.u32 2475754826, %v1593
      %v1600 = vshrl.u32 2131351028, %v1594
      %v1601 = vor.u32 %v1599, %v1600
      %v1602 = vshll.u32 2131351028, %v1593
      %v1603 = vshrl.u32 2102212464, %v1594
      %v1604 = vor.u32 %v1602, %v1603
      %v1605 = vshll.u32 2102212464, %v1593
      %v1606 = vshrl.u32 920167782, %v1594
      %v1607 = vor.u32 %v1605, %v1606
      %v1608 = vshll.u32 920167782, %v1593
      %v1609 = vshrl.u32 1326507024, %v1594
      %v1610 = vor.u32 %v1608, %v1609
      %vm1611 = vcmp.lt.s32.totalorder %v1592, 1
      %vm1612 = vcmp.lt.s32.totalorder %v1592, 2
      %vm1613 = vcmp.lt.s32.totalorder %v1592, 3
      %vm1614 = vcmp.lt.s32.totalorder %v1592, 4
      %v1615 = vsel %vm1611, %v1595, %v1598
      %v1616 = vsel %vm1614, %v1604, 2102212464
      %v1617 = vsel %vm1613, %v1601, %v1616
      %v1618 = vsel %vm1612, %v1615, %v1617
      %v1619 = vsel %vm1611, %v1598, %v1601
      %v1620 = vsel %vm1614, %v1607, 920167782
      %v1621 = vsel %vm1613, %v1604, %v1620
      %v1622 = vsel %vm1612, %v1619, %v1621
      %v1623 = vsel %vm1611, %v1601, %v1604
      %v1624 = vsel %vm1614, %v1610, 1326507024
      %v1625 = vsel %vm1613, %v1607, %v1624
      %v1626 = vsel %vm1612, %v1623, %v1625
      %v1627 = vshll.u32 %v1587, 8
      %v1628 = vmul.u32.u64.compose %v1627, %v1626
      %v1629 = vextract.low.u32 %v1628
      %v1630 = vextract.high.u32 %v1628
      %v1631 = vmul.u32.u64.compose %v1627, %v1622
      %v1632 = vextract.low.u32 %v1631
      %v1633 = vextract.high.u32 %v1631
      %v1634 = vmul.u32 %v1627, %v1618
      %v1635 = vadd.s32 %v1630, %v1632
      %vm1636 = vc.u32 %v1630, %v1632
      %v1637 = vadd.s32 %v1633, 1
      %v1638 = vsel %vm1636, %v1637, %v1633
      %v1639 = vadd.s32 %v1634, %v1638
      %v1640 = vadd.s32 %v1639, 536870912
      %v1641 = vshrl.u32 %v1640, 30
      %v1642 = vshll.u32 %v1641, 30
      %v1643 = vsub.s32 %v1639, %v1642
      %vm1644 = vcmp.lt.s32.totalorder %v1643, 0
      %v1645 = vsub.s32 0, %v1643
      %v1646 = vsel %vm1644, %v1645, %v1643
      %v1647 = vclz %v1646
      %v1648 = vsub.s32 %v1647, 2
      %vm1649 = vcmp.gt.s32.totalorder 0, %v1648
      %v1650 = vsel %vm1649, 0, %v1648
      %v1651 = vsub.s32 32, %v1650
      %v1652 = vshll.u32 %v1643, %v1650
      %v1653 = vshrl.u32 %v1635, %v1651
      %v1654 = vor.u32 %v1652, %v1653
      %v1655 = vsub.s32 4294967266, %v1650
      %v1656 = vadd.s32 %v1655, 127
      %v1657 = vshll.u32 %v1656, 23
      %v1658 = vor.u32 4788187, %v1657
      %v1659 = vand.u32 2147483647, %v1658
      %v1661 = vcvt.s32.f32 %v1654
      %v1662 = vmul.f32 %v1661, %v1659
      %v1663 = vxor.u32 %v1662, 2147483648
      %v1664 = vsel %vm1581, %v1663, %v1662
      %v1665 = vsub.s32 4, %v1641
      %v1666 = vsel %vm1581, %v1665, %v1641
      %v1667 = vsel %vm1580, %v531, %v1664
      %v1668 = vsel %vm1580, 0, %v1666
      %v1669 = vcosq.f32.pop %v1667
      %v1670 = vsinq.f32.pop %v1667
      %vm1671 = vweird.f32 %v531
      %v1672 = vadd.s32 %v1668, 3
      %v1673 = vand.u32 %v1672, 3
      %vm1674 = vcmp.lt.s32.totalorder %v1673, 2
      %vm1675 = vcmp.eq.s32.totalorder %v1673, 0
      %v1676 = vxor.u32 %v1670, 2147483648
      %v1677 = vsel %vm1675, %v1669, %v1676
      %vm1678 = vcmp.eq.s32.totalorder %v1673, 2
      %v1679 = vxor.u32 %v1669, 2147483648
      %v1680 = vsel %vm1678, %v1679, %v1670
      %v1681 = vsel %vm1674, %v1677, %v1680
      %v1682 = vsel %vm1671, nan, %v1681
      %v1683 = vand.u32 2147483647, %v532
      %vm1684 = vcmp.le.f32.partialorder %v1683, 0.7853982
      %vm1685 = vcmp.lt.s32.totalorder %v532, 0
      %v1686 = vand.u32 %v532, 2139095040
      %v1687 = vshrl.u32 %v1686, 23
      %v1688 = vsub.s32 %v1687, 127
      %v1689 = vand.u32 2147483647, %v532
      %v1690 = vand.u32 %v1689, 8388607
      %v1691 = vor.u32 %v1690, 8388608
      %v1692 = vsub.s32 0, %v1691
      %v1693 = vadd.s32 %v1688, 1
      %vm1694 = vcmp.gt.s32.totalorder %v1693, 0
      %v1695 = vsel %vm1694, %v1693, 0
      %v1696 = vshrl.u32 %v1695, 5
      %v1697 = vand.u32 %v1695, 31
      %v1698 = vsub.s32 32, %v1697
      %v1699 = vshrl.u32 683565275, %v1698
      %v1700 = vshll.u32 683565275, %v1697
      %v1701 = vshrl.u32 2475754826, %v1698
      %v1702 = vor.u32 %v1700, %v1701
      %v1703 = vshll.u32 2475754826, %v1697
      %v1704 = vshrl.u32 2131351028, %v1698
      %v1705 = vor.u32 %v1703, %v1704
      %v1706 = vshll.u32 2131351028, %v1697
      %v1707 = vshrl.u32 2102212464, %v1698
      %v1708 = vor.u32 %v1706, %v1707
      %v1709 = vshll.u32 2102212464, %v1697
      %v1710 = vshrl.u32 920167782, %v1698
      %v1711 = vor.u32 %v1709, %v1710
      %v1712 = vshll.u32 920167782, %v1697
      %v1713 = vshrl.u32 1326507024, %v1698
      %v1714 = vor.u32 %v1712, %v1713
      %vm1715 = vcmp.lt.s32.totalorder %v1696, 1
      %vm1716 = vcmp.lt.s32.totalorder %v1696, 2
      %vm1717 = vcmp.lt.s32.totalorder %v1696, 3
      %vm1718 = vcmp.lt.s32.totalorder %v1696, 4
      %v1719 = vsel %vm1715, %v1699, %v1702
      %v1720 = vsel %vm1718, %v1708, 2102212464
      %v1721 = vsel %vm1717, %v1705, %v1720
      %v1722 = vsel %vm1716, %v1719, %v1721
      %v1723 = vsel %vm1715, %v1702, %v1705
      %v1724 = vsel %vm1718, %v1711, 920167782
      %v1725 = vsel %vm1717, %v1708, %v1724
      %v1726 = vsel %vm1716, %v1723, %v1725
      %v1727 = vsel %vm1715, %v1705, %v1708
      %v1728 = vsel %vm1718, %v1714, 1326507024
      %v1729 = vsel %vm1717, %v1711, %v1728
      %v1730 = vsel %vm1716, %v1727, %v1729
      %v1731 = vshll.u32 %v1691, 8
      %v1732 = vmul.u32.u64.compose %v1731, %v1730
      %v1733 = vextract.low.u32 %v1732
      %v1734 = vextract.high.u32 %v1732
      %v1735 = vmul.u32.u64.compose %v1731, %v1726
      %v1736 = vextract.low.u32 %v1735
      %v1737 = vextract.high.u32 %v1735
      %v1738 = vmul.u32 %v1731, %v1722
      %v1739 = vadd.s32 %v1734, %v1736
      %vm1740 = vc.u32 %v1734, %v1736
      %v1741 = vadd.s32 %v1737, 1
      %v1742 = vsel %vm1740, %v1741, %v1737
      %v1743 = vadd.s32 %v1738, %v1742
      %v1744 = vadd.s32 %v1743, 536870912
      %v1745 = vshrl.u32 %v1744, 30
      %v1746 = vshll.u32 %v1745, 30
      %v1747 = vsub.s32 %v1743, %v1746
      %vm1748 = vcmp.lt.s32.totalorder %v1747, 0
      %v1749 = vsub.s32 0, %v1747
      %v1750 = vsel %vm1748, %v1749, %v1747
      %v1751 = vclz %v1750
      %v1752 = vsub.s32 %v1751, 2
      %vm1753 = vcmp.gt.s32.totalorder 0, %v1752
      %v1754 = vsel %vm1753, 0, %v1752
      %v1755 = vsub.s32 32, %v1754
      %v1756 = vshll.u32 %v1747, %v1754
      %v1757 = vshrl.u32 %v1739, %v1755
      %v1758 = vor.u32 %v1756, %v1757
      %v1759 = vsub.s32 4294967266, %v1754
      %v1760 = vadd.s32 %v1759, 127
      %v1761 = vshll.u32 %v1760, 23
      %v1762 = vor.u32 4788187, %v1761
      %v1763 = vand.u32 2147483647, %v1762
      %v1765 = vcvt.s32.f32 %v1758
      %v1766 = vmul.f32 %v1765, %v1763
      %v1767 = vxor.u32 %v1766, 2147483648
      %v1768 = vsel %vm1685, %v1767, %v1766
      %v1769 = vsub.s32 4, %v1745
      %v1770 = vsel %vm1685, %v1769, %v1745
      %v1771 = vsel %vm1684, %v532, %v1768
      %v1772 = vsel %vm1684, 0, %v1770
      %v1773 = vcosq.f32.pop %v1771
      %v1774 = vsinq.f32.pop %v1771
      %vm1775 = vweird.f32 %v532
      %v1776 = vadd.s32 %v1772, 3
      %v1777 = vand.u32 %v1776, 3
      %vm1778 = vcmp.lt.s32.totalorder %v1777, 2
      %vm1779 = vcmp.eq.s32.totalorder %v1777, 0
      %v1780 = vxor.u32 %v1774, 2147483648
      %v1781 = vsel %vm1779, %v1773, %v1780
      %vm1782 = vcmp.eq.s32.totalorder %v1777, 2
      %v1783 = vxor.u32 %v1773, 2147483648
      %v1784 = vsel %vm1782, %v1783, %v1774
      %v1785 = vsel %vm1778, %v1781, %v1784
      %v1786 = vsel %vm1775, nan, %v1785
      %v1787 = vand.u32 2147483647, %v533
      %vm1788 = vcmp.le.f32.partialorder %v1787, 0.7853982
      %vm1789 = vcmp.lt.s32.totalorder %v533, 0
      %v1790 = vand.u32 %v533, 2139095040
      %v1791 = vshrl.u32 %v1790, 23
      %v1792 = vsub.s32 %v1791, 127
      %v1793 = vand.u32 2147483647, %v533
      %v1794 = vand.u32 %v1793, 8388607
      %v1795 = vor.u32 %v1794, 8388608
      %v1796 = vsub.s32 0, %v1795
      %v1797 = vadd.s32 %v1792, 1
      %vm1798 = vcmp.gt.s32.totalorder %v1797, 0
      %v1799 = vsel %vm1798, %v1797, 0
      %v1800 = vshrl.u32 %v1799, 5
      %v1801 = vand.u32 %v1799, 31
      %v1802 = vsub.s32 32, %v1801
      %v1803 = vshrl.u32 683565275, %v1802
      %v1804 = vshll.u32 683565275, %v1801
      %v1805 = vshrl.u32 2475754826, %v1802
      %v1806 = vor.u32 %v1804, %v1805
      %v1807 = vshll.u32 2475754826, %v1801
      %v1808 = vshrl.u32 2131351028, %v1802
      %v1809 = vor.u32 %v1807, %v1808
      %v1810 = vshll.u32 2131351028, %v1801
      %v1811 = vshrl.u32 2102212464, %v1802
      %v1812 = vor.u32 %v1810, %v1811
      %v1813 = vshll.u32 2102212464, %v1801
      %v1814 = vshrl.u32 920167782, %v1802
      %v1815 = vor.u32 %v1813, %v1814
      %v1816 = vshll.u32 920167782, %v1801
      %v1817 = vshrl.u32 1326507024, %v1802
      %v1818 = vor.u32 %v1816, %v1817
      %vm1819 = vcmp.lt.s32.totalorder %v1800, 1
      %vm1820 = vcmp.lt.s32.totalorder %v1800, 2
      %vm1821 = vcmp.lt.s32.totalorder %v1800, 3
      %vm1822 = vcmp.lt.s32.totalorder %v1800, 4
      %v1823 = vsel %vm1819, %v1803, %v1806
      %v1824 = vsel %vm1822, %v1812, 2102212464
      %v1825 = vsel %vm1821, %v1809, %v1824
      %v1826 = vsel %vm1820, %v1823, %v1825
      %v1827 = vsel %vm1819, %v1806, %v1809
      %v1828 = vsel %vm1822, %v1815, 920167782
      %v1829 = vsel %vm1821, %v1812, %v1828
      %v1830 = vsel %vm1820, %v1827, %v1829
      %v1831 = vsel %vm1819, %v1809, %v1812
      %v1832 = vsel %vm1822, %v1818, 1326507024
      %v1833 = vsel %vm1821, %v1815, %v1832
      %v1834 = vsel %vm1820, %v1831, %v1833
      %v1835 = vshll.u32 %v1795, 8
      %v1836 = vmul.u32.u64.compose %v1835, %v1834
      %v1837 = vextract.low.u32 %v1836
      %v1838 = vextract.high.u32 %v1836
      %v1839 = vmul.u32.u64.compose %v1835, %v1830
      %v1840 = vextract.low.u32 %v1839
      %v1841 = vextract.high.u32 %v1839
      %v1842 = vmul.u32 %v1835, %v1826
      %v1843 = vadd.s32 %v1838, %v1840
      %vm1844 = vc.u32 %v1838, %v1840
      %v1845 = vadd.s32 %v1841, 1
      %v1846 = vsel %vm1844, %v1845, %v1841
      %v1847 = vadd.s32 %v1842, %v1846
      %v1848 = vadd.s32 %v1847, 536870912
      %v1849 = vshrl.u32 %v1848, 30
      %v1850 = vshll.u32 %v1849, 30
      %v1851 = vsub.s32 %v1847, %v1850
      %vm1852 = vcmp.lt.s32.totalorder %v1851, 0
      %v1853 = vsub.s32 0, %v1851
      %v1854 = vsel %vm1852, %v1853, %v1851
      %v1855 = vclz %v1854
      %v1856 = vsub.s32 %v1855, 2
      %vm1857 = vcmp.gt.s32.totalorder 0, %v1856
      %v1858 = vsel %vm1857, 0, %v1856
      %v1859 = vsub.s32 32, %v1858
      %v1860 = vshll.u32 %v1851, %v1858
      %v1861 = vshrl.u32 %v1843, %v1859
      %v1862 = vor.u32 %v1860, %v1861
      %v1863 = vsub.s32 4294967266, %v1858
      %v1864 = vadd.s32 %v1863, 127
      %v1865 = vshll.u32 %v1864, 23
      %v1866 = vor.u32 4788187, %v1865
      %v1867 = vand.u32 2147483647, %v1866
      %v1869 = vcvt.s32.f32 %v1862
      %v1870 = vmul.f32 %v1869, %v1867
      %v1871 = vxor.u32 %v1870, 2147483648
      %v1872 = vsel %vm1789, %v1871, %v1870
      %v1873 = vsub.s32 4, %v1849
      %v1874 = vsel %vm1789, %v1873, %v1849
      %v1875 = vsel %vm1788, %v533, %v1872
      %v1876 = vsel %vm1788, 0, %v1874
      %v1877 = vcosq.f32.pop %v1875
      %v1878 = vsinq.f32.pop %v1875
      %vm1879 = vweird.f32 %v533
      %v1880 = vadd.s32 %v1876, 3
      %v1881 = vand.u32 %v1880, 3
      %vm1882 = vcmp.lt.s32.totalorder %v1881, 2
      %vm1883 = vcmp.eq.s32.totalorder %v1881, 0
      %v1884 = vxor.u32 %v1878, 2147483648
      %v1885 = vsel %vm1883, %v1877, %v1884
      %vm1886 = vcmp.eq.s32.totalorder %v1881, 2
      %v1887 = vxor.u32 %v1877, 2147483648
      %v1888 = vsel %vm1886, %v1887, %v1878
      %v1889 = vsel %vm1882, %v1885, %v1888
      %v1890 = vsel %vm1879, nan, %v1889
      %v1891 = vand.u32 2147483647, %v534
      %vm1892 = vcmp.le.f32.partialorder %v1891, 0.7853982
      %vm1893 = vcmp.lt.s32.totalorder %v534, 0
      %v1894 = vand.u32 %v534, 2139095040
      %v1895 = vshrl.u32 %v1894, 23
      %v1896 = vsub.s32 %v1895, 127
      %v1897 = vand.u32 2147483647, %v534
      %v1898 = vand.u32 %v1897, 8388607
      %v1899 = vor.u32 %v1898, 8388608
      %v1900 = vsub.s32 0, %v1899
      %v1901 = vadd.s32 %v1896, 1
      %vm1902 = vcmp.gt.s32.totalorder %v1901, 0
      %v1903 = vsel %vm1902, %v1901, 0
      %v1904 = vshrl.u32 %v1903, 5
      %v1905 = vand.u32 %v1903, 31
      %v1906 = vsub.s32 32, %v1905
      %v1907 = vshrl.u32 683565275, %v1906
      %v1908 = vshll.u32 683565275, %v1905
      %v1909 = vshrl.u32 2475754826, %v1906
      %v1910 = vor.u32 %v1908, %v1909
      %v1911 = vshll.u32 2475754826, %v1905
      %v1912 = vshrl.u32 2131351028, %v1906
      %v1913 = vor.u32 %v1911, %v1912
      %v1914 = vshll.u32 2131351028, %v1905
      %v1915 = vshrl.u32 2102212464, %v1906
      %v1916 = vor.u32 %v1914, %v1915
      %v1917 = vshll.u32 2102212464, %v1905
      %v1918 = vshrl.u32 920167782, %v1906
      %v1919 = vor.u32 %v1917, %v1918
      %v1920 = vshll.u32 920167782, %v1905
      %v1921 = vshrl.u32 1326507024, %v1906
      %v1922 = vor.u32 %v1920, %v1921
      %vm1923 = vcmp.lt.s32.totalorder %v1904, 1
      %vm1924 = vcmp.lt.s32.totalorder %v1904, 2
      %vm1925 = vcmp.lt.s32.totalorder %v1904, 3
      %vm1926 = vcmp.lt.s32.totalorder %v1904, 4
      %v1927 = vsel %vm1923, %v1907, %v1910
      %v1928 = vsel %vm1926, %v1916, 2102212464
      %v1929 = vsel %vm1925, %v1913, %v1928
      %v1930 = vsel %vm1924, %v1927, %v1929
      %v1931 = vsel %vm1923, %v1910, %v1913
      %v1932 = vsel %vm1926, %v1919, 920167782
      %v1933 = vsel %vm1925, %v1916, %v1932
      %v1934 = vsel %vm1924, %v1931, %v1933
      %v1935 = vsel %vm1923, %v1913, %v1916
      %v1936 = vsel %vm1926, %v1922, 1326507024
      %v1937 = vsel %vm1925, %v1919, %v1936
      %v1938 = vsel %vm1924, %v1935, %v1937
      %v1939 = vshll.u32 %v1899, 8
      %v1940 = vmul.u32.u64.compose %v1939, %v1938
      %v1941 = vextract.low.u32 %v1940
      %v1942 = vextract.high.u32 %v1940
      %v1943 = vmul.u32.u64.compose %v1939, %v1934
      %v1944 = vextract.low.u32 %v1943
      %v1945 = vextract.high.u32 %v1943
      %v1946 = vmul.u32 %v1939, %v1930
      %v1947 = vadd.s32 %v1942, %v1944
      %vm1948 = vc.u32 %v1942, %v1944
      %v1949 = vadd.s32 %v1945, 1
      %v1950 = vsel %vm1948, %v1949, %v1945
      %v1951 = vadd.s32 %v1946, %v1950
      %v1952 = vadd.s32 %v1951, 536870912
      %v1953 = vshrl.u32 %v1952, 30
      %v1954 = vshll.u32 %v1953, 30
      %v1955 = vsub.s32 %v1951, %v1954
      %vm1956 = vcmp.lt.s32.totalorder %v1955, 0
      %v1957 = vsub.s32 0, %v1955
      %v1958 = vsel %vm1956, %v1957, %v1955
      %v1959 = vclz %v1958
      %v1960 = vsub.s32 %v1959, 2
      %vm1961 = vcmp.gt.s32.totalorder 0, %v1960
      %v1962 = vsel %vm1961, 0, %v1960
      %v1963 = vsub.s32 32, %v1962
      %v1964 = vshll.u32 %v1955, %v1962
      %v1965 = vshrl.u32 %v1947, %v1963
      %v1966 = vor.u32 %v1964, %v1965
      %v1967 = vsub.s32 4294967266, %v1962
      %v1968 = vadd.s32 %v1967, 127
      %v1969 = vshll.u32 %v1968, 23
      %v1970 = vor.u32 4788187, %v1969
      %v1971 = vand.u32 2147483647, %v1970
      %v1973 = vcvt.s32.f32 %v1966
      %v1974 = vmul.f32 %v1973, %v1971
      %v1975 = vxor.u32 %v1974, 2147483648
      %v1976 = vsel %vm1893, %v1975, %v1974
      %v1977 = vsub.s32 4, %v1953
      %v1978 = vsel %vm1893, %v1977, %v1953
      %v1979 = vsel %vm1892, %v534, %v1976
      %v1980 = vsel %vm1892, 0, %v1978
      %v1981 = vcosq.f32.pop %v1979
      %v1982 = vsinq.f32.pop %v1979
      %vm1983 = vweird.f32 %v534
      %v1984 = vadd.s32 %v1980, 3
      %v1985 = vand.u32 %v1984, 3
      %vm1986 = vcmp.lt.s32.totalorder %v1985, 2
      %vm1987 = vcmp.eq.s32.totalorder %v1985, 0
      %v1988 = vxor.u32 %v1982, 2147483648
      %v1989 = vsel %vm1987, %v1981, %v1988
      %vm1990 = vcmp.eq.s32.totalorder %v1985, 2
      %v1991 = vxor.u32 %v1981, 2147483648
      %v1992 = vsel %vm1990, %v1991, %v1982
      %v1993 = vsel %vm1986, %v1989, %v1992
      %v1994 = vsel %vm1983, nan, %v1993
      %v1995 = vand.u32 2147483647, %v535
      %vm1996 = vcmp.le.f32.partialorder %v1995, 0.7853982
      %vm1997 = vcmp.lt.s32.totalorder %v535, 0
      %v1998 = vand.u32 %v535, 2139095040
      %v1999 = vshrl.u32 %v1998, 23
      %v2000 = vsub.s32 %v1999, 127
      %v2001 = vand.u32 2147483647, %v535
      %v2002 = vand.u32 %v2001, 8388607
      %v2003 = vor.u32 %v2002, 8388608
      %v2004 = vsub.s32 0, %v2003
      %v2005 = vadd.s32 %v2000, 1
      %vm2006 = vcmp.gt.s32.totalorder %v2005, 0
      %v2007 = vsel %vm2006, %v2005, 0
      %v2008 = vshrl.u32 %v2007, 5
      %v2009 = vand.u32 %v2007, 31
      %v2010 = vsub.s32 32, %v2009
      %v2011 = vshrl.u32 683565275, %v2010
      %v2012 = vshll.u32 683565275, %v2009
      %v2013 = vshrl.u32 2475754826, %v2010
      %v2014 = vor.u32 %v2012, %v2013
      %v2015 = vshll.u32 2475754826, %v2009
      %v2016 = vshrl.u32 2131351028, %v2010
      %v2017 = vor.u32 %v2015, %v2016
      %v2018 = vshll.u32 2131351028, %v2009
      %v2019 = vshrl.u32 2102212464, %v2010
      %v2020 = vor.u32 %v2018, %v2019
      %v2021 = vshll.u32 2102212464, %v2009
      %v2022 = vshrl.u32 920167782, %v2010
      %v2023 = vor.u32 %v2021, %v2022
      %v2024 = vshll.u32 920167782, %v2009
      %v2025 = vshrl.u32 1326507024, %v2010
      %v2026 = vor.u32 %v2024, %v2025
      %vm2027 = vcmp.lt.s32.totalorder %v2008, 1
      %vm2028 = vcmp.lt.s32.totalorder %v2008, 2
      %vm2029 = vcmp.lt.s32.totalorder %v2008, 3
      %vm2030 = vcmp.lt.s32.totalorder %v2008, 4
      %v2031 = vsel %vm2027, %v2011, %v2014
      %v2032 = vsel %vm2030, %v2020, 2102212464
      %v2033 = vsel %vm2029, %v2017, %v2032
      %v2034 = vsel %vm2028, %v2031, %v2033
      %v2035 = vsel %vm2027, %v2014, %v2017
      %v2036 = vsel %vm2030, %v2023, 920167782
      %v2037 = vsel %vm2029, %v2020, %v2036
      %v2038 = vsel %vm2028, %v2035, %v2037
      %v2039 = vsel %vm2027, %v2017, %v2020
      %v2040 = vsel %vm2030, %v2026, 1326507024
      %v2041 = vsel %vm2029, %v2023, %v2040
      %v2042 = vsel %vm2028, %v2039, %v2041
      %v2043 = vshll.u32 %v2003, 8
      %v2044 = vmul.u32.u64.compose %v2043, %v2042
      %v2045 = vextract.low.u32 %v2044
      %v2046 = vextract.high.u32 %v2044
      %v2047 = vmul.u32.u64.compose %v2043, %v2038
      %v2048 = vextract.low.u32 %v2047
      %v2049 = vextract.high.u32 %v2047
      %v2050 = vmul.u32 %v2043, %v2034
      %v2051 = vadd.s32 %v2046, %v2048
      %vm2052 = vc.u32 %v2046, %v2048
      %v2053 = vadd.s32 %v2049, 1
      %v2054 = vsel %vm2052, %v2053, %v2049
      %v2055 = vadd.s32 %v2050, %v2054
      %v2056 = vadd.s32 %v2055, 536870912
      %v2057 = vshrl.u32 %v2056, 30
      %v2058 = vshll.u32 %v2057, 30
      %v2059 = vsub.s32 %v2055, %v2058
      %vm2060 = vcmp.lt.s32.totalorder %v2059, 0
      %v2061 = vsub.s32 0, %v2059
      %v2062 = vsel %vm2060, %v2061, %v2059
      %v2063 = vclz %v2062
      %v2064 = vsub.s32 %v2063, 2
      %vm2065 = vcmp.gt.s32.totalorder 0, %v2064
      %v2066 = vsel %vm2065, 0, %v2064
      %v2067 = vsub.s32 32, %v2066
      %v2068 = vshll.u32 %v2059, %v2066
      %v2069 = vshrl.u32 %v2051, %v2067
      %v2070 = vor.u32 %v2068, %v2069
      %v2071 = vsub.s32 4294967266, %v2066
      %v2072 = vadd.s32 %v2071, 127
      %v2073 = vshll.u32 %v2072, 23
      %v2074 = vor.u32 4788187, %v2073
      %v2075 = vand.u32 2147483647, %v2074
      %v2077 = vcvt.s32.f32 %v2070
      %v2078 = vmul.f32 %v2077, %v2075
      %v2079 = vxor.u32 %v2078, 2147483648
      %v2080 = vsel %vm1997, %v2079, %v2078
      %v2081 = vsub.s32 4, %v2057
      %v2082 = vsel %vm1997, %v2081, %v2057
      %v2083 = vsel %vm1996, %v535, %v2080
      %v2084 = vsel %vm1996, 0, %v2082
      %v2085 = vcosq.f32.pop %v2083
      %v2086 = vsinq.f32.pop %v2083
      %vm2087 = vweird.f32 %v535
      %v2088 = vadd.s32 %v2084, 3
      %v2089 = vand.u32 %v2088, 3
      %vm2090 = vcmp.lt.s32.totalorder %v2089, 2
      %vm2091 = vcmp.eq.s32.totalorder %v2089, 0
      %v2092 = vxor.u32 %v2086, 2147483648
      %v2093 = vsel %vm2091, %v2085, %v2092
      %vm2094 = vcmp.eq.s32.totalorder %v2089, 2
      %v2095 = vxor.u32 %v2085, 2147483648
      %v2096 = vsel %vm2094, %v2095, %v2086
      %v2097 = vsel %vm2090, %v2093, %v2096
      %v2098 = vsel %vm2087, nan, %v2097
      %v2099 = vand.u32 2147483647, %v536
      %vm2100 = vcmp.le.f32.partialorder %v2099, 0.7853982
      %vm2101 = vcmp.lt.s32.totalorder %v536, 0
      %v2102 = vand.u32 %v536, 2139095040
      %v2103 = vshrl.u32 %v2102, 23
      %v2104 = vsub.s32 %v2103, 127
      %v2105 = vand.u32 2147483647, %v536
      %v2106 = vand.u32 %v2105, 8388607
      %v2107 = vor.u32 %v2106, 8388608
      %v2108 = vsub.s32 0, %v2107
      %v2109 = vadd.s32 %v2104, 1
      %vm2110 = vcmp.gt.s32.totalorder %v2109, 0
      %v2111 = vsel %vm2110, %v2109, 0
      %v2112 = vshrl.u32 %v2111, 5
      %v2113 = vand.u32 %v2111, 31
      %v2114 = vsub.s32 32, %v2113
      %v2115 = vshrl.u32 683565275, %v2114
      %v2116 = vshll.u32 683565275, %v2113
      %v2117 = vshrl.u32 2475754826, %v2114
      %v2118 = vor.u32 %v2116, %v2117
      %v2119 = vshll.u32 2475754826, %v2113
      %v2120 = vshrl.u32 2131351028, %v2114
      %v2121 = vor.u32 %v2119, %v2120
      %v2122 = vshll.u32 2131351028, %v2113
      %v2123 = vshrl.u32 2102212464, %v2114
      %v2124 = vor.u32 %v2122, %v2123
      %v2125 = vshll.u32 2102212464, %v2113
      %v2126 = vshrl.u32 920167782, %v2114
      %v2127 = vor.u32 %v2125, %v2126
      %v2128 = vshll.u32 920167782, %v2113
      %v2129 = vshrl.u32 1326507024, %v2114
      %v2130 = vor.u32 %v2128, %v2129
      %vm2131 = vcmp.lt.s32.totalorder %v2112, 1
      %vm2132 = vcmp.lt.s32.totalorder %v2112, 2
      %vm2133 = vcmp.lt.s32.totalorder %v2112, 3
      %vm2134 = vcmp.lt.s32.totalorder %v2112, 4
      %v2135 = vsel %vm2131, %v2115, %v2118
      %v2136 = vsel %vm2134, %v2124, 2102212464
      %v2137 = vsel %vm2133, %v2121, %v2136
      %v2138 = vsel %vm2132, %v2135, %v2137
      %v2139 = vsel %vm2131, %v2118, %v2121
      %v2140 = vsel %vm2134, %v2127, 920167782
      %v2141 = vsel %vm2133, %v2124, %v2140
      %v2142 = vsel %vm2132, %v2139, %v2141
      %v2143 = vsel %vm2131, %v2121, %v2124
      %v2144 = vsel %vm2134, %v2130, 1326507024
      %v2145 = vsel %vm2133, %v2127, %v2144
      %v2146 = vsel %vm2132, %v2143, %v2145
      %v2147 = vshll.u32 %v2107, 8
      %v2148 = vmul.u32.u64.compose %v2147, %v2146
      %v2149 = vextract.low.u32 %v2148
      %v2150 = vextract.high.u32 %v2148
      %v2151 = vmul.u32.u64.compose %v2147, %v2142
      %v2152 = vextract.low.u32 %v2151
      %v2153 = vextract.high.u32 %v2151
      %v2154 = vmul.u32 %v2147, %v2138
      %v2155 = vadd.s32 %v2150, %v2152
      %vm2156 = vc.u32 %v2150, %v2152
      %v2157 = vadd.s32 %v2153, 1
      %v2158 = vsel %vm2156, %v2157, %v2153
      %v2159 = vadd.s32 %v2154, %v2158
      %v2160 = vadd.s32 %v2159, 536870912
      %v2161 = vshrl.u32 %v2160, 30
      %v2162 = vshll.u32 %v2161, 30
      %v2163 = vsub.s32 %v2159, %v2162
      %vm2164 = vcmp.lt.s32.totalorder %v2163, 0
      %v2165 = vsub.s32 0, %v2163
      %v2166 = vsel %vm2164, %v2165, %v2163
      %v2167 = vclz %v2166
      %v2168 = vsub.s32 %v2167, 2
      %vm2169 = vcmp.gt.s32.totalorder 0, %v2168
      %v2170 = vsel %vm2169, 0, %v2168
      %v2171 = vsub.s32 32, %v2170
      %v2172 = vshll.u32 %v2163, %v2170
      %v2173 = vshrl.u32 %v2155, %v2171
      %v2174 = vor.u32 %v2172, %v2173
      %v2175 = vsub.s32 4294967266, %v2170
      %v2176 = vadd.s32 %v2175, 127
      %v2177 = vshll.u32 %v2176, 23
      %v2178 = vor.u32 4788187, %v2177
      %v2179 = vand.u32 2147483647, %v2178
      %v2181 = vcvt.s32.f32 %v2174
      %v2182 = vmul.f32 %v2181, %v2179
      %v2183 = vxor.u32 %v2182, 2147483648
      %v2184 = vsel %vm2101, %v2183, %v2182
      %v2185 = vsub.s32 4, %v2161
      %v2186 = vsel %vm2101, %v2185, %v2161
      %v2187 = vsel %vm2100, %v536, %v2184
      %v2188 = vsel %vm2100, 0, %v2186
      %v2189 = vcosq.f32.pop %v2187
      %v2190 = vsinq.f32.pop %v2187
      %vm2191 = vweird.f32 %v536
      %v2192 = vadd.s32 %v2188, 3
      %v2193 = vand.u32 %v2192, 3
      %vm2194 = vcmp.lt.s32.totalorder %v2193, 2
      %vm2195 = vcmp.eq.s32.totalorder %v2193, 0
      %v2196 = vxor.u32 %v2190, 2147483648
      %v2197 = vsel %vm2195, %v2189, %v2196
      %vm2198 = vcmp.eq.s32.totalorder %v2193, 2
      %v2199 = vxor.u32 %v2189, 2147483648
      %v2200 = vsel %vm2198, %v2199, %v2190
      %v2201 = vsel %vm2194, %v2197, %v2200
      %v2202 = vsel %vm2191, nan, %v2201
      %v2203 = vand.u32 2147483647, %v537
      %vm2204 = vcmp.le.f32.partialorder %v2203, 0.7853982
      %vm2205 = vcmp.lt.s32.totalorder %v537, 0
      %v2206 = vand.u32 %v537, 2139095040
      %v2207 = vshrl.u32 %v2206, 23
      %v2208 = vsub.s32 %v2207, 127
      %v2209 = vand.u32 2147483647, %v537
      %v2210 = vand.u32 %v2209, 8388607
      %v2211 = vor.u32 %v2210, 8388608
      %v2212 = vsub.s32 0, %v2211
      %v2213 = vadd.s32 %v2208, 1
      %vm2214 = vcmp.gt.s32.totalorder %v2213, 0
      %v2215 = vsel %vm2214, %v2213, 0
      %v2216 = vshrl.u32 %v2215, 5
      %v2217 = vand.u32 %v2215, 31
      %v2218 = vsub.s32 32, %v2217
      %v2219 = vshrl.u32 683565275, %v2218
      %v2220 = vshll.u32 683565275, %v2217
      %v2221 = vshrl.u32 2475754826, %v2218
      %v2222 = vor.u32 %v2220, %v2221
      %v2223 = vshll.u32 2475754826, %v2217
      %v2224 = vshrl.u32 2131351028, %v2218
      %v2225 = vor.u32 %v2223, %v2224
      %v2226 = vshll.u32 2131351028, %v2217
      %v2227 = vshrl.u32 2102212464, %v2218
      %v2228 = vor.u32 %v2226, %v2227
      %v2229 = vshll.u32 2102212464, %v2217
      %v2230 = vshrl.u32 920167782, %v2218
      %v2231 = vor.u32 %v2229, %v2230
      %v2232 = vshll.u32 920167782, %v2217
      %v2233 = vshrl.u32 1326507024, %v2218
      %v2234 = vor.u32 %v2232, %v2233
      %vm2235 = vcmp.lt.s32.totalorder %v2216, 1
      %vm2236 = vcmp.lt.s32.totalorder %v2216, 2
      %vm2237 = vcmp.lt.s32.totalorder %v2216, 3
      %vm2238 = vcmp.lt.s32.totalorder %v2216, 4
      %v2239 = vsel %vm2235, %v2219, %v2222
      %v2240 = vsel %vm2238, %v2228, 2102212464
      %v2241 = vsel %vm2237, %v2225, %v2240
      %v2242 = vsel %vm2236, %v2239, %v2241
      %v2243 = vsel %vm2235, %v2222, %v2225
      %v2244 = vsel %vm2238, %v2231, 920167782
      %v2245 = vsel %vm2237, %v2228, %v2244
      %v2246 = vsel %vm2236, %v2243, %v2245
      %v2247 = vsel %vm2235, %v2225, %v2228
      %v2248 = vsel %vm2238, %v2234, 1326507024
      %v2249 = vsel %vm2237, %v2231, %v2248
      %v2250 = vsel %vm2236, %v2247, %v2249
      %v2251 = vshll.u32 %v2211, 8
      %v2252 = vmul.u32.u64.compose %v2251, %v2250
      %v2253 = vextract.low.u32 %v2252
      %v2254 = vextract.high.u32 %v2252
      %v2255 = vmul.u32.u64.compose %v2251, %v2246
      %v2256 = vextract.low.u32 %v2255
      %v2257 = vextract.high.u32 %v2255
      %v2258 = vmul.u32 %v2251, %v2242
      %v2259 = vadd.s32 %v2254, %v2256
      %vm2260 = vc.u32 %v2254, %v2256
      %v2261 = vadd.s32 %v2257, 1
      %v2262 = vsel %vm2260, %v2261, %v2257
      %v2263 = vadd.s32 %v2258, %v2262
      %v2264 = vadd.s32 %v2263, 536870912
      %v2265 = vshrl.u32 %v2264, 30
      %v2266 = vshll.u32 %v2265, 30
      %v2267 = vsub.s32 %v2263, %v2266
      %vm2268 = vcmp.lt.s32.totalorder %v2267, 0
      %v2269 = vsub.s32 0, %v2267
      %v2270 = vsel %vm2268, %v2269, %v2267
      %v2271 = vclz %v2270
      %v2272 = vsub.s32 %v2271, 2
      %vm2273 = vcmp.gt.s32.totalorder 0, %v2272
      %v2274 = vsel %vm2273, 0, %v2272
      %v2275 = vsub.s32 32, %v2274
      %v2276 = vshll.u32 %v2267, %v2274
      %v2277 = vshrl.u32 %v2259, %v2275
      %v2278 = vor.u32 %v2276, %v2277
      %v2279 = vsub.s32 4294967266, %v2274
      %v2280 = vadd.s32 %v2279, 127
      %v2281 = vshll.u32 %v2280, 23
      %v2282 = vor.u32 4788187, %v2281
      %v2283 = vand.u32 2147483647, %v2282
      %v2285 = vcvt.s32.f32 %v2278
      %v2286 = vmul.f32 %v2285, %v2283
      %v2287 = vxor.u32 %v2286, 2147483648
      %v2288 = vsel %vm2205, %v2287, %v2286
      %v2289 = vsub.s32 4, %v2265
      %v2290 = vsel %vm2205, %v2289, %v2265
      %v2291 = vsel %vm2204, %v537, %v2288
      %v2292 = vsel %vm2204, 0, %v2290
      %v2293 = vcosq.f32.pop %v2291
      %v2294 = vsinq.f32.pop %v2291
      %vm2295 = vweird.f32 %v537
      %v2296 = vadd.s32 %v2292, 3
      %v2297 = vand.u32 %v2296, 3
      %vm2298 = vcmp.lt.s32.totalorder %v2297, 2
      %vm2299 = vcmp.eq.s32.totalorder %v2297, 0
      %v2300 = vxor.u32 %v2294, 2147483648
      %v2301 = vsel %vm2299, %v2293, %v2300
      %vm2302 = vcmp.eq.s32.totalorder %v2297, 2
      %v2303 = vxor.u32 %v2293, 2147483648
      %v2304 = vsel %vm2302, %v2303, %v2294
      %v2305 = vsel %vm2298, %v2301, %v2304
      %v2306 = vsel %vm2295, nan, %v2305
      %v2307 = vand.u32 2147483647, %v538
      %vm2308 = vcmp.le.f32.partialorder %v2307, 0.7853982
      %vm2309 = vcmp.lt.s32.totalorder %v538, 0
      %v2310 = vand.u32 %v538, 2139095040
      %v2311 = vshrl.u32 %v2310, 23
      %v2312 = vsub.s32 %v2311, 127
      %v2313 = vand.u32 2147483647, %v538
      %v2314 = vand.u32 %v2313, 8388607
      %v2315 = vor.u32 %v2314, 8388608
      %v2316 = vsub.s32 0, %v2315
      %v2317 = vadd.s32 %v2312, 1
      %vm2318 = vcmp.gt.s32.totalorder %v2317, 0
      %v2319 = vsel %vm2318, %v2317, 0
      %v2320 = vshrl.u32 %v2319, 5
      %v2321 = vand.u32 %v2319, 31
      %v2322 = vsub.s32 32, %v2321
      %v2323 = vshrl.u32 683565275, %v2322
      %v2324 = vshll.u32 683565275, %v2321
      %v2325 = vshrl.u32 2475754826, %v2322
      %v2326 = vor.u32 %v2324, %v2325
      %v2327 = vshll.u32 2475754826, %v2321
      %v2328 = vshrl.u32 2131351028, %v2322
      %v2329 = vor.u32 %v2327, %v2328
      %v2330 = vshll.u32 2131351028, %v2321
      %v2331 = vshrl.u32 2102212464, %v2322
      %v2332 = vor.u32 %v2330, %v2331
      %v2333 = vshll.u32 2102212464, %v2321
      %v2334 = vshrl.u32 920167782, %v2322
      %v2335 = vor.u32 %v2333, %v2334
      %v2336 = vshll.u32 920167782, %v2321
      %v2337 = vshrl.u32 1326507024, %v2322
      %v2338 = vor.u32 %v2336, %v2337
      %vm2339 = vcmp.lt.s32.totalorder %v2320, 1
      %vm2340 = vcmp.lt.s32.totalorder %v2320, 2
      %vm2341 = vcmp.lt.s32.totalorder %v2320, 3
      %vm2342 = vcmp.lt.s32.totalorder %v2320, 4
      %v2343 = vsel %vm2339, %v2323, %v2326
      %v2344 = vsel %vm2342, %v2332, 2102212464
      %v2345 = vsel %vm2341, %v2329, %v2344
      %v2346 = vsel %vm2340, %v2343, %v2345
      %v2347 = vsel %vm2339, %v2326, %v2329
      %v2348 = vsel %vm2342, %v2335, 920167782
      %v2349 = vsel %vm2341, %v2332, %v2348
      %v2350 = vsel %vm2340, %v2347, %v2349
      %v2351 = vsel %vm2339, %v2329, %v2332
      %v2352 = vsel %vm2342, %v2338, 1326507024
      %v2353 = vsel %vm2341, %v2335, %v2352
      %v2354 = vsel %vm2340, %v2351, %v2353
      %v2355 = vshll.u32 %v2315, 8
      %v2356 = vmul.u32.u64.compose %v2355, %v2354
      %v2357 = vextract.low.u32 %v2356
      %v2358 = vextract.high.u32 %v2356
      %v2359 = vmul.u32.u64.compose %v2355, %v2350
      %v2360 = vextract.low.u32 %v2359
      %v2361 = vextract.high.u32 %v2359
      %v2362 = vmul.u32 %v2355, %v2346
      %v2363 = vadd.s32 %v2358, %v2360
      %vm2364 = vc.u32 %v2358, %v2360
      %v2365 = vadd.s32 %v2361, 1
      %v2366 = vsel %vm2364, %v2365, %v2361
      %v2367 = vadd.s32 %v2362, %v2366
      %v2368 = vadd.s32 %v2367, 536870912
      %v2369 = vshrl.u32 %v2368, 30
      %v2370 = vshll.u32 %v2369, 30
      %v2371 = vsub.s32 %v2367, %v2370
      %vm2372 = vcmp.lt.s32.totalorder %v2371, 0
      %v2373 = vsub.s32 0, %v2371
      %v2374 = vsel %vm2372, %v2373, %v2371
      %v2375 = vclz %v2374
      %v2376 = vsub.s32 %v2375, 2
      %vm2377 = vcmp.gt.s32.totalorder 0, %v2376
      %v2378 = vsel %vm2377, 0, %v2376
      %v2379 = vsub.s32 32, %v2378
      %v2380 = vshll.u32 %v2371, %v2378
      %v2381 = vshrl.u32 %v2363, %v2379
      %v2382 = vor.u32 %v2380, %v2381
      %v2383 = vsub.s32 4294967266, %v2378
      %v2384 = vadd.s32 %v2383, 127
      %v2385 = vshll.u32 %v2384, 23
      %v2386 = vor.u32 4788187, %v2385
      %v2387 = vand.u32 2147483647, %v2386
      %v2389 = vcvt.s32.f32 %v2382
      %v2390 = vmul.f32 %v2389, %v2387
      %v2391 = vxor.u32 %v2390, 2147483648
      %v2392 = vsel %vm2309, %v2391, %v2390
      %v2393 = vsub.s32 4, %v2369
      %v2394 = vsel %vm2309, %v2393, %v2369
      %v2395 = vsel %vm2308, %v538, %v2392
      %v2396 = vsel %vm2308, 0, %v2394
      %v2397 = vcosq.f32.pop %v2395
      %v2398 = vsinq.f32.pop %v2395
      %vm2399 = vweird.f32 %v538
      %v2400 = vadd.s32 %v2396, 3
      %v2401 = vand.u32 %v2400, 3
      %vm2402 = vcmp.lt.s32.totalorder %v2401, 2
      %vm2403 = vcmp.eq.s32.totalorder %v2401, 0
      %v2404 = vxor.u32 %v2398, 2147483648
      %v2405 = vsel %vm2403, %v2397, %v2404
      %vm2406 = vcmp.eq.s32.totalorder %v2401, 2
      %v2407 = vxor.u32 %v2397, 2147483648
      %v2408 = vsel %vm2406, %v2407, %v2398
      %v2409 = vsel %vm2402, %v2405, %v2408
      %v2410 = vsel %vm2399, nan, %v2409
      %v2411 = vpack.c.bf16 %v746, %v642
      %v2412 = vpack.c.bf16 %v954, %v850
      %v2413 = vpack.c.bf16 %v1162, %v1058
      %v2414 = vpack.c.bf16 %v1370, %v1266
      %v2415 = vpack.c.bf16 %v1578, %v1474
      %v2416 = vpack.c.bf16 %v1786, %v1682
      %v2417 = vpack.c.bf16 %v1994, %v1890
      %v2418 = vpack.c.bf16 %v2202, %v2098
      %v2419 = vpack.c.bf16 %v2410, %v2306
      %v2420 = vld [vmem:[%s6] sm:$0xf]
      %v2421 = vld [vmem:[%s6 + $0x4] sm:$0xf]
      %v2422 = vld [vmem:[%s6 + $0x8] sm:$0xf]
      %v2423 = vld [vmem:[%s6 + $0xc] sm:$0xf]
      %v2424 = vld [vmem:[%s7] sm:$0x1]
      %v2426 = vlaneseq
      %v2427 = vshrl.u32 %v2426, 7
      %v2428 = vsub.s32 0, %v2427
      %v2429 = vrot.slane %v2424, %v2428
      %v2435 = vunpack.c.l.b16 %v2420
      %v2436 = vunpack.c.l.b16 %v2421
      %v2437 = vunpack.c.l.b16 %v2422
      %v2438 = vunpack.c.l.b16 %v2423
      %v2439 = vpack.c.b16 %v2436, %v2435
      %v2440 = vpack.c.b16 %v2438, %v2437
      %vm2443 = vcmask 261120
      %v2445 = vsel %vm2443, %v2411, 0
      %v2448 = vsel %vm2443, %v2412, 0
      %v2451 = vsel %vm2443, %v2413, 0
      %v2454 = vsel %vm2443, %v2414, 0
      %v2457 = vsel %vm2443, %v2415, 0
      %v2460 = vsel %vm2443, %v2416, 0
      %v2463 = vsel %vm2443, %v2417, 0
      %v2466 = vsel %vm2443, %v2418, 0
      %v2469 = vsel %vm2443, %v2419, 0
      %2471 = vmatprep.subr.bf16.mxu0 0
      %2472 = vmatpush1.bf16.msra.mxu0 %v2439
      %2473 = vmatprep.subr.bf16.mxu0 0
      %2474 = vmatpush1.bf16.msra.mxu0 %v2440
      %2475 = vmatprep.subr.bf16.mxu0 0
      %2476 = vmatpush1.bf16.msra.mxu0 0
      %2477 = vmatprep.subr.bf16.mxu0 0
      %2478 = vmatpush1.bf16.msra.mxu0 0
      %2479 = vmatprep.subr.bf16.mxu0 0
      %2480 = vmatpush1.bf16.msra.mxu0 0
      %2481 = vmatprep.subr.bf16.mxu0 0
      %2482 = vmatpush1.bf16.msra.mxu0 0
      %2483 = vmatprep.subr.bf16.mxu0 0
      %2484 = vmatpush1.bf16.msra.mxu0 0
      %2485 = vmatprep.subr.bf16.mxu0 0
      %2486 = vmatpush1.bf16.msra.mxu0 0
      %2487 = vmatprep.subr.bf16.mxu0 0
      %2488 = vmatpush1.bf16.msra.mxu0 0
      %2489 = vmatprep.subr.bf16.mxu0 0
      %2490 = vmatpush1.bf16.msra.mxu0 0
      %2491 = vmatprep.subr.bf16.mxu0 0
      %2492 = vmatpush1.bf16.msra.mxu0 0
      %2493 = vmatprep.subr.bf16.mxu0 0
      %2494 = vmatpush1.bf16.msra.mxu0 0
      %2495 = vmatprep.subr.bf16.mxu0 0
      %2496 = vmatpush1.bf16.msra.mxu0 0
      %2497 = vmatprep.subr.bf16.mxu0 0
      %2498 = vmatpush1.bf16.msra.mxu0 0
      %2499 = vmatprep.subr.bf16.mxu0 0
      %2500 = vmatpush1.bf16.msra.mxu0 0
      %2501 = vmatprep.subr.bf16.mxu0 0
      %2502 = vmatpush1.bf16.msra.mxu0 0
      %2503 = vmatprep.mubr.bf16.mxu0 0
      %2504 = vmatmul.mubr.bf16.gmra.mrb[0].mxu0 %v2445
      %v2505 = vpop.f32.mrb[0].mxu0
      %v2506 = vadd.f32 %v2429, %v2505
      %v2507 = vpop.f32.mrb[0].mxu0
      %v2508 = vpop.f32.mrb[0].mxu0
      %v2509 = vadd.f32 %v2429, %v2508
      %v2510 = vpop.f32.mrb[0].mxu0
      %2511 = vmatprep.mubr.bf16.mxu0 0
      %2512 = vmatmul.mubr.bf16.gmra.mrb[0].mxu0 %v2448
      %v2513 = vpop.f32.mrb[0].mxu0
      %v2514 = vadd.f32 %v2429, %v2513
      %v2515 = vpop.f32.mrb[0].mxu0
      %v2516 = vpop.f32.mrb[0].mxu0
      %v2517 = vadd.f32 %v2429, %v2516
      %v2518 = vpop.f32.mrb[0].mxu0
      %2519 = vmatprep.mubr.bf16.mxu0 0
      %2520 = vmatmul.mubr.bf16.gmra.mrb[0].mxu0 %v2451
      %v2521 = vpop.f32.mrb[0].mxu0
      %v2522 = vadd.f32 %v2429, %v2521
      %v2523 = vpop.f32.mrb[0].mxu0
      %v2524 = vpop.f32.mrb[0].mxu0
      %v2525 = vadd.f32 %v2429, %v2524
      %v2526 = vpop.f32.mrb[0].mxu0
      %2527 = vmatprep.mubr.bf16.mxu0 0
      %2528 = vmatmul.mubr.bf16.gmra.mrb[0].mxu0 %v2454
      %v2529 = vpop.f32.mrb[0].mxu0
      %v2530 = vadd.f32 %v2429, %v2529
      %v2531 = vpop.f32.mrb[0].mxu0
      %v2532 = vpop.f32.mrb[0].mxu0
      %v2533 = vadd.f32 %v2429, %v2532
      %v2534 = vpop.f32.mrb[0].mxu0
      %2535 = vmatprep.mubr.bf16.mxu0 0
      %2536 = vmatmul.mubr.bf16.gmra.mrb[0].mxu0 %v2457
      %v2537 = vpop.f32.mrb[0].mxu0
      %v2538 = vadd.f32 %v2429, %v2537
      %v2539 = vpop.f32.mrb[0].mxu0
      %v2540 = vpop.f32.mrb[0].mxu0
      %v2541 = vadd.f32 %v2429, %v2540
      %v2542 = vpop.f32.mrb[0].mxu0
      %2543 = vmatprep.mubr.bf16.mxu0 0
      %2544 = vmatmul.mubr.bf16.gmra.mrb[0].mxu0 %v2460
      %v2545 = vpop.f32.mrb[0].mxu0
      %v2546 = vadd.f32 %v2429, %v2545
      %v2547 = vpop.f32.mrb[0].mxu0
      %v2548 = vpop.f32.mrb[0].mxu0
      %v2549 = vadd.f32 %v2429, %v2548
      %v2550 = vpop.f32.mrb[0].mxu0
      %2551 = vmatprep.mubr.bf16.mxu0 0
      %2552 = vmatmul.mubr.bf16.gmra.mrb[0].mxu0 %v2463
      %v2553 = vpop.f32.mrb[0].mxu0
      %v2554 = vadd.f32 %v2429, %v2553
      %v2555 = vpop.f32.mrb[0].mxu0
      %v2556 = vpop.f32.mrb[0].mxu0
      %v2557 = vadd.f32 %v2429, %v2556
      %v2558 = vpop.f32.mrb[0].mxu0
      %2559 = vmatprep.mubr.bf16.mxu0 0
      %2560 = vmatmul.mubr.bf16.gmra.mrb[0].mxu0 %v2466
      %v2561 = vpop.f32.mrb[0].mxu0
      %v2562 = vadd.f32 %v2429, %v2561
      %v2563 = vpop.f32.mrb[0].mxu0
      %v2564 = vpop.f32.mrb[0].mxu0
      %v2565 = vadd.f32 %v2429, %v2564
      %v2566 = vpop.f32.mrb[0].mxu0
      %2567 = vmatprep.mubr.bf16.mxu0 0
      %2568 = vmatmul.mubr.bf16.gmra.mrb[0].mxu0 %v2469
      %v2569 = vpop.f32.mrb[0].mxu0
      %v2570 = vadd.f32 %v2429, %v2569
      %v2571 = vpop.f32.mrb[0].mxu0
      %v2572 = vpop.f32.mrb[0].mxu0
      %v2573 = vadd.f32 %v2429, %v2572
      %v2574 = vpop.f32.mrb[0].mxu0
      %2575 = vdwg.mxu0
      %v2576 = vld [vmem:[#allocation2] sm:$0xff]
      %v2577 = vld [vmem:[#allocation2 + $0x8] sm:$0xff]
      %v2578 = vld [vmem:[#allocation2 + $0x10] sm:$0xff]
      %v2579 = vld [vmem:[#allocation2 + $0x18] sm:$0xff]
      %v2580 = vld [vmem:[#allocation2 + $0x20] sm:$0xff]
      %v2581 = vld [vmem:[#allocation2 + $0x28] sm:$0xff]
      %v2582 = vld [vmem:[#allocation2 + $0x30] sm:$0xff]
      %v2583 = vld [vmem:[#allocation2 + $0x38] sm:$0xff]
      %v2584 = vld [vmem:[#allocation2 + $0x40] sm:$0xff]
      %v2585 = vld [vmem:[#allocation2 + $0x48] sm:$0xff]
      %v2586 = vld [vmem:[#allocation2 + $0x50] sm:$0xff]
      %v2587 = vld [vmem:[#allocation2 + $0x58] sm:$0xff]
      %v2588 = vld [vmem:[#allocation2 + $0x60] sm:$0xff]
      %v2589 = vld [vmem:[#allocation2 + $0x68] sm:$0xff]
      %v2590 = vld [vmem:[#allocation2 + $0x70] sm:$0xff]
      %v2591 = vld [vmem:[#allocation2 + $0x78] sm:$0xff]
      %v2592 = vld [vmem:[#allocation2 + $0x80] sm:$0xff]
      %v2593 = vld [vmem:[#allocation2 + $0x88] sm:$0xff]
      %v2594 = vmax.f32 %v2576, %v2506
      %v2595 = vmax.f32 %v2577, %v2509
      %v2596 = vmax.f32 %v2578, %v2514
      %v2597 = vmax.f32 %v2579, %v2517
      %v2598 = vmax.f32 %v2580, %v2522
      %v2599 = vmax.f32 %v2581, %v2525
      %v2600 = vmax.f32 %v2582, %v2530
      %v2601 = vmax.f32 %v2583, %v2533
      %v2602 = vmax.f32 %v2584, %v2538
      %v2603 = vmax.f32 %v2585, %v2541
      %v2604 = vmax.f32 %v2586, %v2546
      %v2605 = vmax.f32 %v2587, %v2549
      %v2606 = vmax.f32 %v2588, %v2554
      %v2607 = vmax.f32 %v2589, %v2557
      %v2608 = vmax.f32 %v2590, %v2562
      %v2609 = vmax.f32 %v2591, %v2565
      %v2610 = vmax.f32 %v2592, %v2570
      %v2611 = vmax.f32 %v2593, %v2573
      %2612 = vst.msk [vmem:[#allocation2] sm:$0xff] %vm2443, %v2594
      %2613 = vst.msk [vmem:[#allocation2 + $0x8] sm:$0xff] %vm2443, %v2595
      %2614 = vst.msk [vmem:[#allocation2 + $0x10] sm:$0xff] %vm2443, %v2596
      %2615 = vst.msk [vmem:[#allocation2 + $0x18] sm:$0xff] %vm2443, %v2597
      %2616 = vst.msk [vmem:[#allocation2 + $0x20] sm:$0xff] %vm2443, %v2598
      %2617 = vst.msk [vmem:[#allocation2 + $0x28] sm:$0xff] %vm2443, %v2599
      %2618 = vst.msk [vmem:[#allocation2 + $0x30] sm:$0xff] %vm2443, %v2600
      %2619 = vst.msk [vmem:[#allocation2 + $0x38] sm:$0xff] %vm2443, %v2601
      %2620 = vst.msk [vmem:[#allocation2 + $0x40] sm:$0xff] %vm2443, %v2602
      %2621 = vst.msk [vmem:[#allocation2 + $0x48] sm:$0xff] %vm2443, %v2603
      %2622 = vst.msk [vmem:[#allocation2 + $0x50] sm:$0xff] %vm2443, %v2604
      %2623 = vst.msk [vmem:[#allocation2 + $0x58] sm:$0xff] %vm2443, %v2605
      %2624 = vst.msk [vmem:[#allocation2 + $0x60] sm:$0xff] %vm2443, %v2606
      %2625 = vst.msk [vmem:[#allocation2 + $0x68] sm:$0xff] %vm2443, %v2607
      %2626 = vst.msk [vmem:[#allocation2 + $0x70] sm:$0xff] %vm2443, %v2608
      %2627 = vst.msk [vmem:[#allocation2 + $0x78] sm:$0xff] %vm2443, %v2609
      %2628 = vst.msk [vmem:[#allocation2 + $0x80] sm:$0xff] %vm2443, %v2610
      %2629 = vst.msk [vmem:[#allocation2 + $0x88] sm:$0xff] %vm2443, %v2611
      %p2630 = scmp.eq.s32.totalorder %s24, 2
      // Predicated region
      $region57: #{tpu_custom_call.1} parent=51 // pred_check
        %p2631 = pneg %p2630
      $region58: #{tpu_custom_call.1} parent=51 // pred_check_branch
        %2633 = sbr.rel (%p2631) target = $region60
      $region59: #{tpu_custom_call.1} parent=51 // pred_region
        %v2634 = vld [vmem:[%s339] sm:$0xff]
        %v2635 = vld [vmem:[%s339 + $0x8] sm:$0xff]
        %v2636 = vld [vmem:[%s339 + $0x10] sm:$0xff]
        %v2637 = vld [vmem:[%s339 + $0x18] sm:$0xff]
        %v2638 = vld [vmem:[%s339 + $0x20] sm:$0xff]
        %v2639 = vld [vmem:[%s339 + $0x28] sm:$0xff]
        %v2640 = vld [vmem:[%s339 + $0x30] sm:$0xff]
        %v2641 = vld [vmem:[%s339 + $0x38] sm:$0xff]
        %v2642 = vld [vmem:[%s339 + $0x40] sm:$0xff]
        %v2643 = vld [vmem:[%s339 + $0x48] sm:$0xff]
        %v2644 = vld [vmem:[%s339 + $0x50] sm:$0xff]
        %v2645 = vld [vmem:[%s339 + $0x58] sm:$0xff]
        %v2646 = vld [vmem:[%s339 + $0x60] sm:$0xff]
        %v2647 = vld [vmem:[%s339 + $0x68] sm:$0xff]
        %v2648 = vld [vmem:[%s339 + $0x70] sm:$0xff]
        %v2649 = vld [vmem:[%s339 + $0x78] sm:$0xff]
        %v2650 = vld [vmem:[%s339 + $0x80] sm:$0xff]
        %v2651 = vld [vmem:[%s339 + $0x88] sm:$0xff]
        %v2652 = vld [vmem:[%s2] sm:$0x1]
        %2654 = vset.pattern.permute.xlu0 0
        %2655 = vperm.xlu0 %2654, %v2634
        %v2656 = vpop.permute.xlu0 %2655
        %2659 = vset.pattern.permute.xlu0 0
        %2660 = vperm.xlu0 %2659, %v2635
        %v2661 = vpop.permute.xlu0 %2660
        %2664 = vset.pattern.permute.xlu0 0
        %2665 = vperm.xlu0 %2664, %v2636
        %v2666 = vpop.permute.xlu0 %2665
        %2669 = vset.pattern.permute.xlu0 0
        %2670 = vperm.xlu0 %2669, %v2637
        %v2671 = vpop.permute.xlu0 %2670
        %2674 = vset.pattern.permute.xlu0 0
        %2675 = vperm.xlu0 %2674, %v2638
        %v2676 = vpop.permute.xlu0 %2675
        %2679 = vset.pattern.permute.xlu0 0
        %2680 = vperm.xlu0 %2679, %v2639
        %v2681 = vpop.permute.xlu0 %2680
        %2684 = vset.pattern.permute.xlu0 0
        %2685 = vperm.xlu0 %2684, %v2640
        %v2686 = vpop.permute.xlu0 %2685
        %2689 = vset.pattern.permute.xlu0 0
        %2690 = vperm.xlu0 %2689, %v2641
        %v2691 = vpop.permute.xlu0 %2690
        %2694 = vset.pattern.permute.xlu0 0
        %2695 = vperm.xlu0 %2694, %v2642
        %v2696 = vpop.permute.xlu0 %2695
        %2699 = vset.pattern.permute.xlu0 0
        %2700 = vperm.xlu0 %2699, %v2643
        %v2701 = vpop.permute.xlu0 %2700
        %2704 = vset.pattern.permute.xlu0 0
        %2705 = vperm.xlu0 %2704, %v2644
        %v2706 = vpop.permute.xlu0 %2705
        %2709 = vset.pattern.permute.xlu0 0
        %2710 = vperm.xlu0 %2709, %v2645
        %v2711 = vpop.permute.xlu0 %2710
        %2714 = vset.pattern.permute.xlu0 0
        %2715 = vperm.xlu0 %2714, %v2646
        %v2716 = vpop.permute.xlu0 %2715
        %2719 = vset.pattern.permute.xlu0 0
        %2720 = vperm.xlu0 %2719, %v2647
        %v2721 = vpop.permute.xlu0 %2720
        %2724 = vset.pattern.permute.xlu0 0
        %2725 = vperm.xlu0 %2724, %v2648
        %v2726 = vpop.permute.xlu0 %2725
        %2729 = vset.pattern.permute.xlu0 0
        %2730 = vperm.xlu0 %2729, %v2649
        %v2731 = vpop.permute.xlu0 %2730
        %2734 = vset.pattern.permute.xlu0 0
        %2735 = vperm.xlu0 %2734, %v2650
        %v2736 = vpop.permute.xlu0 %2735
        %2739 = vset.pattern.permute.xlu0 0
        %2740 = vperm.xlu0 %2739, %v2651
        %v2741 = vpop.permute.xlu0 %2740
        %v2744 = vlaneseq
        %v2745 = vshrl.u32 %v2744, 7
        %v2746 = vsub.s32 0, %v2745
        %v2747 = vrot.slane %v2652, %v2746
        %v2749 = vmul.f32 %v2656, %v2747
        %v2750 = vmul.f32 %v2661, %v2747
        %v2751 = vmul.f32 %v2666, %v2747
        %v2752 = vmul.f32 %v2671, %v2747
        %v2753 = vmul.f32 %v2676, %v2747
        %v2754 = vmul.f32 %v2681, %v2747
        %v2755 = vmul.f32 %v2686, %v2747
        %v2756 = vmul.f32 %v2691, %v2747
        %v2757 = vmul.f32 %v2696, %v2747
        %v2758 = vmul.f32 %v2701, %v2747
        %v2759 = vmul.f32 %v2706, %v2747
        %v2760 = vmul.f32 %v2711, %v2747
        %v2761 = vmul.f32 %v2716, %v2747
        %v2762 = vmul.f32 %v2721, %v2747
        %v2763 = vmul.f32 %v2726, %v2747
        %v2764 = vmul.f32 %v2731, %v2747
        %v2765 = vmul.f32 %v2736, %v2747
        %v2766 = vmul.f32 %v2741, %v2747
        %v2767 = vld [vmem:[%s3] sm:$0x1]
        %v2769 = vlaneseq
        %v2770 = vshrl.u32 %v2769, 7
        %v2771 = vsub.s32 0, %v2770
        %v2772 = vrot.slane %v2767, %v2771
        %v2774 = vadd.f32 %v2749, %v2772
        %v2775 = vadd.f32 %v2750, %v2772
        %v2776 = vadd.f32 %v2751, %v2772
        %v2777 = vadd.f32 %v2752, %v2772
        %v2778 = vadd.f32 %v2753, %v2772
        %v2779 = vadd.f32 %v2754, %v2772
        %v2780 = vadd.f32 %v2755, %v2772
        %v2781 = vadd.f32 %v2756, %v2772
        %v2782 = vadd.f32 %v2757, %v2772
        %v2783 = vadd.f32 %v2758, %v2772
        %v2784 = vadd.f32 %v2759, %v2772
        %v2785 = vadd.f32 %v2760, %v2772
        %v2786 = vadd.f32 %v2761, %v2772
        %v2787 = vadd.f32 %v2762, %v2772
        %v2788 = vadd.f32 %v2763, %v2772
        %v2789 = vadd.f32 %v2764, %v2772
        %v2790 = vadd.f32 %v2765, %v2772
        %v2791 = vadd.f32 %v2766, %v2772
        %v2792 = vand.u32 2147483647, %v2774
        %vm2793 = vcmp.le.f32.partialorder %v2792, 0.7853982
        %vm2794 = vcmp.lt.s32.totalorder %v2774, 0
        %v2795 = vand.u32 %v2774, 2139095040
        %v2796 = vshrl.u32 %v2795, 23
        %v2797 = vsub.s32 %v2796, 127
        %v2798 = vand.u32 2147483647, %v2774
        %v2799 = vand.u32 %v2798, 8388607
        %v2800 = vor.u32 %v2799, 8388608
        %v2801 = vsub.s32 0, %v2800
        %v2802 = vadd.s32 %v2797, 1
        %vm2803 = vcmp.gt.s32.totalorder %v2802, 0
        %v2804 = vsel %vm2803, %v2802, 0
        %v2805 = vshrl.u32 %v2804, 5
        %v2806 = vand.u32 %v2804, 31
        %v2807 = vsub.s32 32, %v2806
        %v2808 = vshrl.u32 683565275, %v2807
        %v2809 = vshll.u32 683565275, %v2806
        %v2810 = vshrl.u32 2475754826, %v2807
        %v2811 = vor.u32 %v2809, %v2810
        %v2812 = vshll.u32 2475754826, %v2806
        %v2813 = vshrl.u32 2131351028, %v2807
        %v2814 = vor.u32 %v2812, %v2813
        %v2815 = vshll.u32 2131351028, %v2806
        %v2816 = vshrl.u32 2102212464, %v2807
        %v2817 = vor.u32 %v2815, %v2816
        %v2818 = vshll.u32 2102212464, %v2806
        %v2819 = vshrl.u32 920167782, %v2807
        %v2820 = vor.u32 %v2818, %v2819
        %v2821 = vshll.u32 920167782, %v2806
        %v2822 = vshrl.u32 1326507024, %v2807
        %v2823 = vor.u32 %v2821, %v2822
        %vm2824 = vcmp.lt.s32.totalorder %v2805, 1
        %vm2825 = vcmp.lt.s32.totalorder %v2805, 2
        %vm2826 = vcmp.lt.s32.totalorder %v2805, 3
        %vm2827 = vcmp.lt.s32.totalorder %v2805, 4
        %v2828 = vsel %vm2824, %v2808, %v2811
        %v2829 = vsel %vm2827, %v2817, 2102212464
        %v2830 = vsel %vm2826, %v2814, %v2829
        %v2831 = vsel %vm2825, %v2828, %v2830
        %v2832 = vsel %vm2824, %v2811, %v2814
        %v2833 = vsel %vm2827, %v2820, 920167782
        %v2834 = vsel %vm2826, %v2817, %v2833
        %v2835 = vsel %vm2825, %v2832, %v2834
        %v2836 = vsel %vm2824, %v2814, %v2817
        %v2837 = vsel %vm2827, %v2823, 1326507024
        %v2838 = vsel %vm2826, %v2820, %v2837
        %v2839 = vsel %vm2825, %v2836, %v2838
        %v2840 = vshll.u32 %v2800, 8
        %v2841 = vmul.u32.u64.compose %v2840, %v2839
        %v2842 = vextract.low.u32 %v2841
        %v2843 = vextract.high.u32 %v2841
        %v2844 = vmul.u32.u64.compose %v2840, %v2835
        %v2845 = vextract.low.u32 %v2844
        %v2846 = vextract.high.u32 %v2844
        %v2847 = vmul.u32 %v2840, %v2831
        %v2848 = vadd.s32 %v2843, %v2845
        %vm2849 = vc.u32 %v2843, %v2845
        %v2850 = vadd.s32 %v2846, 1
        %v2851 = vsel %vm2849, %v2850, %v2846
        %v2852 = vadd.s32 %v2847, %v2851
        %v2853 = vadd.s32 %v2852, 536870912
        %v2854 = vshrl.u32 %v2853, 30
        %v2855 = vshll.u32 %v2854, 30
        %v2856 = vsub.s32 %v2852, %v2855
        %vm2857 = vcmp.lt.s32.totalorder %v2856, 0
        %v2858 = vsub.s32 0, %v2856
        %v2859 = vsel %vm2857, %v2858, %v2856
        %v2860 = vclz %v2859
        %v2861 = vsub.s32 %v2860, 2
        %vm2862 = vcmp.gt.s32.totalorder 0, %v2861
        %v2863 = vsel %vm2862, 0, %v2861
        %v2864 = vsub.s32 32, %v2863
        %v2865 = vshll.u32 %v2856, %v2863
        %v2866 = vshrl.u32 %v2848, %v2864
        %v2867 = vor.u32 %v2865, %v2866
        %v2868 = vsub.s32 4294967266, %v2863
        %v2869 = vadd.s32 %v2868, 127
        %v2870 = vshll.u32 %v2869, 23
        %v2871 = vor.u32 4788187, %v2870
        %v2872 = vand.u32 2147483647, %v2871
        %v2874 = vcvt.s32.f32 %v2867
        %v2875 = vmul.f32 %v2874, %v2872
        %v2876 = vxor.u32 %v2875, 2147483648
        %v2877 = vsel %vm2794, %v2876, %v2875
        %v2878 = vsub.s32 4, %v2854
        %v2879 = vsel %vm2794, %v2878, %v2854
        %v2880 = vsel %vm2793, %v2774, %v2877
        %v2881 = vsel %vm2793, 0, %v2879
        %v2882 = vcosq.f32.pop %v2880
        %v2883 = vsinq.f32.pop %v2880
        %vm2884 = vweird.f32 %v2774
        %v2885 = vadd.s32 %v2881, 3
        %v2886 = vand.u32 %v2885, 3
        %vm2887 = vcmp.lt.s32.totalorder %v2886, 2
        %vm2888 = vcmp.eq.s32.totalorder %v2886, 0
        %v2889 = vxor.u32 %v2883, 2147483648
        %v2890 = vsel %vm2888, %v2882, %v2889
        %vm2891 = vcmp.eq.s32.totalorder %v2886, 2
        %v2892 = vxor.u32 %v2882, 2147483648
        %v2893 = vsel %vm2891, %v2892, %v2883
        %v2894 = vsel %vm2887, %v2890, %v2893
        %v2895 = vsel %vm2884, nan, %v2894
        %v2896 = vand.u32 2147483647, %v2775
        %vm2897 = vcmp.le.f32.partialorder %v2896, 0.7853982
        %vm2898 = vcmp.lt.s32.totalorder %v2775, 0
        %v2899 = vand.u32 %v2775, 2139095040
        %v2900 = vshrl.u32 %v2899, 23
        %v2901 = vsub.s32 %v2900, 127
        %v2902 = vand.u32 2147483647, %v2775
        %v2903 = vand.u32 %v2902, 8388607
        %v2904 = vor.u32 %v2903, 8388608
        %v2905 = vsub.s32 0, %v2904
        %v2906 = vadd.s32 %v2901, 1
        %vm2907 = vcmp.gt.s32.totalorder %v2906, 0
        %v2908 = vsel %vm2907, %v2906, 0
        %v2909 = vshrl.u32 %v2908, 5
        %v2910 = vand.u32 %v2908, 31
        %v2911 = vsub.s32 32, %v2910
        %v2912 = vshrl.u32 683565275, %v2911
        %v2913 = vshll.u32 683565275, %v2910
        %v2914 = vshrl.u32 2475754826, %v2911
        %v2915 = vor.u32 %v2913, %v2914
        %v2916 = vshll.u32 2475754826, %v2910
        %v2917 = vshrl.u32 2131351028, %v2911
        %v2918 = vor.u32 %v2916, %v2917
        %v2919 = vshll.u32 2131351028, %v2910
        %v2920 = vshrl.u32 2102212464, %v2911
        %v2921 = vor.u32 %v2919, %v2920
        %v2922 = vshll.u32 2102212464, %v2910
        %v2923 = vshrl.u32 920167782, %v2911
        %v2924 = vor.u32 %v2922, %v2923
        %v2925 = vshll.u32 920167782, %v2910
        %v2926 = vshrl.u32 1326507024, %v2911
        %v2927 = vor.u32 %v2925, %v2926
        %vm2928 = vcmp.lt.s32.totalorder %v2909, 1
        %vm2929 = vcmp.lt.s32.totalorder %v2909, 2
        %vm2930 = vcmp.lt.s32.totalorder %v2909, 3
        %vm2931 = vcmp.lt.s32.totalorder %v2909, 4
        %v2932 = vsel %vm2928, %v2912, %v2915
        %v2933 = vsel %vm2931, %v2921, 2102212464
        %v2934 = vsel %vm2930, %v2918, %v2933
        %v2935 = vsel %vm2929, %v2932, %v2934
        %v2936 = vsel %vm2928, %v2915, %v2918
        %v2937 = vsel %vm2931, %v2924, 920167782
        %v2938 = vsel %vm2930, %v2921, %v2937
        %v2939 = vsel %vm2929, %v2936, %v2938
        %v2940 = vsel %vm2928, %v2918, %v2921
        %v2941 = vsel %vm2931, %v2927, 1326507024
        %v2942 = vsel %vm2930, %v2924, %v2941
        %v2943 = vsel %vm2929, %v2940, %v2942
        %v2944 = vshll.u32 %v2904, 8
        %v2945 = vmul.u32.u64.compose %v2944, %v2943
        %v2946 = vextract.low.u32 %v2945
        %v2947 = vextract.high.u32 %v2945
        %v2948 = vmul.u32.u64.compose %v2944, %v2939
        %v2949 = vextract.low.u32 %v2948
        %v2950 = vextract.high.u32 %v2948
        %v2951 = vmul.u32 %v2944, %v2935
        %v2952 = vadd.s32 %v2947, %v2949
        %vm2953 = vc.u32 %v2947, %v2949
        %v2954 = vadd.s32 %v2950, 1
        %v2955 = vsel %vm2953, %v2954, %v2950
        %v2956 = vadd.s32 %v2951, %v2955
        %v2957 = vadd.s32 %v2956, 536870912
        %v2958 = vshrl.u32 %v2957, 30
        %v2959 = vshll.u32 %v2958, 30
        %v2960 = vsub.s32 %v2956, %v2959
        %vm2961 = vcmp.lt.s32.totalorder %v2960, 0
        %v2962 = vsub.s32 0, %v2960
        %v2963 = vsel %vm2961, %v2962, %v2960
        %v2964 = vclz %v2963
        %v2965 = vsub.s32 %v2964, 2
        %vm2966 = vcmp.gt.s32.totalorder 0, %v2965
        %v2967 = vsel %vm2966, 0, %v2965
        %v2968 = vsub.s32 32, %v2967
        %v2969 = vshll.u32 %v2960, %v2967
        %v2970 = vshrl.u32 %v2952, %v2968
        %v2971 = vor.u32 %v2969, %v2970
        %v2972 = vsub.s32 4294967266, %v2967
        %v2973 = vadd.s32 %v2972, 127
        %v2974 = vshll.u32 %v2973, 23
        %v2975 = vor.u32 4788187, %v2974
        %v2976 = vand.u32 2147483647, %v2975
        %v2978 = vcvt.s32.f32 %v2971
        %v2979 = vmul.f32 %v2978, %v2976
        %v2980 = vxor.u32 %v2979, 2147483648
        %v2981 = vsel %vm2898, %v2980, %v2979
        %v2982 = vsub.s32 4, %v2958
        %v2983 = vsel %vm2898, %v2982, %v2958
        %v2984 = vsel %vm2897, %v2775, %v2981
        %v2985 = vsel %vm2897, 0, %v2983
        %v2986 = vcosq.f32.pop %v2984
        %v2987 = vsinq.f32.pop %v2984
        %vm2988 = vweird.f32 %v2775
        %v2989 = vadd.s32 %v2985, 3
        %v2990 = vand.u32 %v2989, 3
        %vm2991 = vcmp.lt.s32.totalorder %v2990, 2
        %vm2992 = vcmp.eq.s32.totalorder %v2990, 0
        %v2993 = vxor.u32 %v2987, 2147483648
        %v2994 = vsel %vm2992, %v2986, %v2993
        %vm2995 = vcmp.eq.s32.totalorder %v2990, 2
        %v2996 = vxor.u32 %v2986, 2147483648
        %v2997 = vsel %vm2995, %v2996, %v2987
        %v2998 = vsel %vm2991, %v2994, %v2997
        %v2999 = vsel %vm2988, nan, %v2998
        %v3000 = vand.u32 2147483647, %v2776
        %vm3001 = vcmp.le.f32.partialorder %v3000, 0.7853982
        %vm3002 = vcmp.lt.s32.totalorder %v2776, 0
        %v3003 = vand.u32 %v2776, 2139095040
        %v3004 = vshrl.u32 %v3003, 23
        %v3005 = vsub.s32 %v3004, 127
        %v3006 = vand.u32 2147483647, %v2776
        %v3007 = vand.u32 %v3006, 8388607
        %v3008 = vor.u32 %v3007, 8388608
        %v3009 = vsub.s32 0, %v3008
        %v3010 = vadd.s32 %v3005, 1
        %vm3011 = vcmp.gt.s32.totalorder %v3010, 0
        %v3012 = vsel %vm3011, %v3010, 0
        %v3013 = vshrl.u32 %v3012, 5
        %v3014 = vand.u32 %v3012, 31
        %v3015 = vsub.s32 32, %v3014
        %v3016 = vshrl.u32 683565275, %v3015
        %v3017 = vshll.u32 683565275, %v3014
        %v3018 = vshrl.u32 2475754826, %v3015
        %v3019 = vor.u32 %v3017, %v3018
        %v3020 = vshll.u32 2475754826, %v3014
        %v3021 = vshrl.u32 2131351028, %v3015
        %v3022 = vor.u32 %v3020, %v3021
        %v3023 = vshll.u32 2131351028, %v3014
        %v3024 = vshrl.u32 2102212464, %v3015
        %v3025 = vor.u32 %v3023, %v3024
        %v3026 = vshll.u32 2102212464, %v3014
        %v3027 = vshrl.u32 920167782, %v3015
        %v3028 = vor.u32 %v3026, %v3027
        %v3029 = vshll.u32 920167782, %v3014
        %v3030 = vshrl.u32 1326507024, %v3015
        %v3031 = vor.u32 %v3029, %v3030
        %vm3032 = vcmp.lt.s32.totalorder %v3013, 1
        %vm3033 = vcmp.lt.s32.totalorder %v3013, 2
        %vm3034 = vcmp.lt.s32.totalorder %v3013, 3
        %vm3035 = vcmp.lt.s32.totalorder %v3013, 4
        %v3036 = vsel %vm3032, %v3016, %v3019
        %v3037 = vsel %vm3035, %v3025, 2102212464
        %v3038 = vsel %vm3034, %v3022, %v3037
        %v3039 = vsel %vm3033, %v3036, %v3038
        %v3040 = vsel %vm3032, %v3019, %v3022
        %v3041 = vsel %vm3035, %v3028, 920167782
        %v3042 = vsel %vm3034, %v3025, %v3041
        %v3043 = vsel %vm3033, %v3040, %v3042
        %v3044 = vsel %vm3032, %v3022, %v3025
        %v3045 = vsel %vm3035, %v3031, 1326507024
        %v3046 = vsel %vm3034, %v3028, %v3045
        %v3047 = vsel %vm3033, %v3044, %v3046
        %v3048 = vshll.u32 %v3008, 8
        %v3049 = vmul.u32.u64.compose %v3048, %v3047
        %v3050 = vextract.low.u32 %v3049
        %v3051 = vextract.high.u32 %v3049
        %v3052 = vmul.u32.u64.compose %v3048, %v3043
        %v3053 = vextract.low.u32 %v3052
        %v3054 = vextract.high.u32 %v3052
        %v3055 = vmul.u32 %v3048, %v3039
        %v3056 = vadd.s32 %v3051, %v3053
        %vm3057 = vc.u32 %v3051, %v3053
        %v3058 = vadd.s32 %v3054, 1
        %v3059 = vsel %vm3057, %v3058, %v3054
        %v3060 = vadd.s32 %v3055, %v3059
        %v3061 = vadd.s32 %v3060, 536870912
        %v3062 = vshrl.u32 %v3061, 30
        %v3063 = vshll.u32 %v3062, 30
        %v3064 = vsub.s32 %v3060, %v3063
        %vm3065 = vcmp.lt.s32.totalorder %v3064, 0
        %v3066 = vsub.s32 0, %v3064
        %v3067 = vsel %vm3065, %v3066, %v3064
        %v3068 = vclz %v3067
        %v3069 = vsub.s32 %v3068, 2
        %vm3070 = vcmp.gt.s32.totalorder 0, %v3069
        %v3071 = vsel %vm3070, 0, %v3069
        %v3072 = vsub.s32 32, %v3071
        %v3073 = vshll.u32 %v3064, %v3071
        %v3074 = vshrl.u32 %v3056, %v3072
        %v3075 = vor.u32 %v3073, %v3074
        %v3076 = vsub.s32 4294967266, %v3071
        %v3077 = vadd.s32 %v3076, 127
        %v3078 = vshll.u32 %v3077, 23
        %v3079 = vor.u32 4788187, %v3078
        %v3080 = vand.u32 2147483647, %v3079
        %v3082 = vcvt.s32.f32 %v3075
        %v3083 = vmul.f32 %v3082, %v3080
        %v3084 = vxor.u32 %v3083, 2147483648
        %v3085 = vsel %vm3002, %v3084, %v3083
        %v3086 = vsub.s32 4, %v3062
        %v3087 = vsel %vm3002, %v3086, %v3062
        %v3088 = vsel %vm3001, %v2776, %v3085
        %v3089 = vsel %vm3001, 0, %v3087
        %v3090 = vcosq.f32.pop %v3088
        %v3091 = vsinq.f32.pop %v3088
        %vm3092 = vweird.f32 %v2776
        %v3093 = vadd.s32 %v3089, 3
        %v3094 = vand.u32 %v3093, 3
        %vm3095 = vcmp.lt.s32.totalorder %v3094, 2
        %vm3096 = vcmp.eq.s32.totalorder %v3094, 0
        %v3097 = vxor.u32 %v3091, 2147483648
        %v3098 = vsel %vm3096, %v3090, %v3097
        %vm3099 = vcmp.eq.s32.totalorder %v3094, 2
        %v3100 = vxor.u32 %v3090, 2147483648
        %v3101 = vsel %vm3099, %v3100, %v3091
        %v3102 = vsel %vm3095, %v3098, %v3101
        %v3103 = vsel %vm3092, nan, %v3102
        %v3104 = vand.u32 2147483647, %v2777
        %vm3105 = vcmp.le.f32.partialorder %v3104, 0.7853982
        %vm3106 = vcmp.lt.s32.totalorder %v2777, 0
        %v3107 = vand.u32 %v2777, 2139095040
        %v3108 = vshrl.u32 %v3107, 23
        %v3109 = vsub.s32 %v3108, 127
        %v3110 = vand.u32 2147483647, %v2777
        %v3111 = vand.u32 %v3110, 8388607
        %v3112 = vor.u32 %v3111, 8388608
        %v3113 = vsub.s32 0, %v3112
        %v3114 = vadd.s32 %v3109, 1
        %vm3115 = vcmp.gt.s32.totalorder %v3114, 0
        %v3116 = vsel %vm3115, %v3114, 0
        %v3117 = vshrl.u32 %v3116, 5
        %v3118 = vand.u32 %v3116, 31
        %v3119 = vsub.s32 32, %v3118
        %v3120 = vshrl.u32 683565275, %v3119
        %v3121 = vshll.u32 683565275, %v3118
        %v3122 = vshrl.u32 2475754826, %v3119
        %v3123 = vor.u32 %v3121, %v3122
        %v3124 = vshll.u32 2475754826, %v3118
        %v3125 = vshrl.u32 2131351028, %v3119
        %v3126 = vor.u32 %v3124, %v3125
        %v3127 = vshll.u32 2131351028, %v3118
        %v3128 = vshrl.u32 2102212464, %v3119
        %v3129 = vor.u32 %v3127, %v3128
        %v3130 = vshll.u32 2102212464, %v3118
        %v3131 = vshrl.u32 920167782, %v3119
        %v3132 = vor.u32 %v3130, %v3131
        %v3133 = vshll.u32 920167782, %v3118
        %v3134 = vshrl.u32 1326507024, %v3119
        %v3135 = vor.u32 %v3133, %v3134
        %vm3136 = vcmp.lt.s32.totalorder %v3117, 1
        %vm3137 = vcmp.lt.s32.totalorder %v3117, 2
        %vm3138 = vcmp.lt.s32.totalorder %v3117, 3
        %vm3139 = vcmp.lt.s32.totalorder %v3117, 4
        %v3140 = vsel %vm3136, %v3120, %v3123
        %v3141 = vsel %vm3139, %v3129, 2102212464
        %v3142 = vsel %vm3138, %v3126, %v3141
        %v3143 = vsel %vm3137, %v3140, %v3142
        %v3144 = vsel %vm3136, %v3123, %v3126
        %v3145 = vsel %vm3139, %v3132, 920167782
        %v3146 = vsel %vm3138, %v3129, %v3145
        %v3147 = vsel %vm3137, %v3144, %v3146
        %v3148 = vsel %vm3136, %v3126, %v3129
        %v3149 = vsel %vm3139, %v3135, 1326507024
        %v3150 = vsel %vm3138, %v3132, %v3149
        %v3151 = vsel %vm3137, %v3148, %v3150
        %v3152 = vshll.u32 %v3112, 8
        %v3153 = vmul.u32.u64.compose %v3152, %v3151
        %v3154 = vextract.low.u32 %v3153
        %v3155 = vextract.high.u32 %v3153
        %v3156 = vmul.u32.u64.compose %v3152, %v3147
        %v3157 = vextract.low.u32 %v3156
        %v3158 = vextract.high.u32 %v3156
        %v3159 = vmul.u32 %v3152, %v3143
        %v3160 = vadd.s32 %v3155, %v3157
        %vm3161 = vc.u32 %v3155, %v3157
        %v3162 = vadd.s32 %v3158, 1
        %v3163 = vsel %vm3161, %v3162, %v3158
        %v3164 = vadd.s32 %v3159, %v3163
        %v3165 = vadd.s32 %v3164, 536870912
        %v3166 = vshrl.u32 %v3165, 30
        %v3167 = vshll.u32 %v3166, 30
        %v3168 = vsub.s32 %v3164, %v3167
        %vm3169 = vcmp.lt.s32.totalorder %v3168, 0
        %v3170 = vsub.s32 0, %v3168
        %v3171 = vsel %vm3169, %v3170, %v3168
        %v3172 = vclz %v3171
        %v3173 = vsub.s32 %v3172, 2
        %vm3174 = vcmp.gt.s32.totalorder 0, %v3173
        %v3175 = vsel %vm3174, 0, %v3173
        %v3176 = vsub.s32 32, %v3175
        %v3177 = vshll.u32 %v3168, %v3175
        %v3178 = vshrl.u32 %v3160, %v3176
        %v3179 = vor.u32 %v3177, %v3178
        %v3180 = vsub.s32 4294967266, %v3175
        %v3181 = vadd.s32 %v3180, 127
        %v3182 = vshll.u32 %v3181, 23
        %v3183 = vor.u32 4788187, %v3182
        %v3184 = vand.u32 2147483647, %v3183
        %v3186 = vcvt.s32.f32 %v3179
        %v3187 = vmul.f32 %v3186, %v3184
        %v3188 = vxor.u32 %v3187, 2147483648
        %v3189 = vsel %vm3106, %v3188, %v3187
        %v3190 = vsub.s32 4, %v3166
        %v3191 = vsel %vm3106, %v3190, %v3166
        %v3192 = vsel %vm3105, %v2777, %v3189
        %v3193 = vsel %vm3105, 0, %v3191
        %v3194 = vcosq.f32.pop %v3192
        %v3195 = vsinq.f32.pop %v3192
        %vm3196 = vweird.f32 %v2777
        %v3197 = vadd.s32 %v3193, 3
        %v3198 = vand.u32 %v3197, 3
        %vm3199 = vcmp.lt.s32.totalorder %v3198, 2
        %vm3200 = vcmp.eq.s32.totalorder %v3198, 0
        %v3201 = vxor.u32 %v3195, 2147483648
        %v3202 = vsel %vm3200, %v3194, %v3201
        %vm3203 = vcmp.eq.s32.totalorder %v3198, 2
        %v3204 = vxor.u32 %v3194, 2147483648
        %v3205 = vsel %vm3203, %v3204, %v3195
        %v3206 = vsel %vm3199, %v3202, %v3205
        %v3207 = vsel %vm3196, nan, %v3206
        %v3208 = vand.u32 2147483647, %v2778
        %vm3209 = vcmp.le.f32.partialorder %v3208, 0.7853982
        %vm3210 = vcmp.lt.s32.totalorder %v2778, 0
        %v3211 = vand.u32 %v2778, 2139095040
        %v3212 = vshrl.u32 %v3211, 23
        %v3213 = vsub.s32 %v3212, 127
        %v3214 = vand.u32 2147483647, %v2778
        %v3215 = vand.u32 %v3214, 8388607
        %v3216 = vor.u32 %v3215, 8388608
        %v3217 = vsub.s32 0, %v3216
        %v3218 = vadd.s32 %v3213, 1
        %vm3219 = vcmp.gt.s32.totalorder %v3218, 0
        %v3220 = vsel %vm3219, %v3218, 0
        %v3221 = vshrl.u32 %v3220, 5
        %v3222 = vand.u32 %v3220, 31
        %v3223 = vsub.s32 32, %v3222
        %v3224 = vshrl.u32 683565275, %v3223
        %v3225 = vshll.u32 683565275, %v3222
        %v3226 = vshrl.u32 2475754826, %v3223
        %v3227 = vor.u32 %v3225, %v3226
        %v3228 = vshll.u32 2475754826, %v3222
        %v3229 = vshrl.u32 2131351028, %v3223
        %v3230 = vor.u32 %v3228, %v3229
        %v3231 = vshll.u32 2131351028, %v3222
        %v3232 = vshrl.u32 2102212464, %v3223
        %v3233 = vor.u32 %v3231, %v3232
        %v3234 = vshll.u32 2102212464, %v3222
        %v3235 = vshrl.u32 920167782, %v3223
        %v3236 = vor.u32 %v3234, %v3235
        %v3237 = vshll.u32 920167782, %v3222
        %v3238 = vshrl.u32 1326507024, %v3223
        %v3239 = vor.u32 %v3237, %v3238
        %vm3240 = vcmp.lt.s32.totalorder %v3221, 1
        %vm3241 = vcmp.lt.s32.totalorder %v3221, 2
        %vm3242 = vcmp.lt.s32.totalorder %v3221, 3
        %vm3243 = vcmp.lt.s32.totalorder %v3221, 4
        %v3244 = vsel %vm3240, %v3224, %v3227
        %v3245 = vsel %vm3243, %v3233, 2102212464
        %v3246 = vsel %vm3242, %v3230, %v3245
        %v3247 = vsel %vm3241, %v3244, %v3246
        %v3248 = vsel %vm3240, %v3227, %v3230
        %v3249 = vsel %vm3243, %v3236, 920167782
        %v3250 = vsel %vm3242, %v3233, %v3249
        %v3251 = vsel %vm3241, %v3248, %v3250
        %v3252 = vsel %vm3240, %v3230, %v3233
        %v3253 = vsel %vm3243, %v3239, 1326507024
        %v3254 = vsel %vm3242, %v3236, %v3253
        %v3255 = vsel %vm3241, %v3252, %v3254
        %v3256 = vshll.u32 %v3216, 8
        %v3257 = vmul.u32.u64.compose %v3256, %v3255
        %v3258 = vextract.low.u32 %v3257
        %v3259 = vextract.high.u32 %v3257
        %v3260 = vmul.u32.u64.compose %v3256, %v3251
        %v3261 = vextract.low.u32 %v3260
        %v3262 = vextract.high.u32 %v3260
        %v3263 = vmul.u32 %v3256, %v3247
        %v3264 = vadd.s32 %v3259, %v3261
        %vm3265 = vc.u32 %v3259, %v3261
        %v3266 = vadd.s32 %v3262, 1
        %v3267 = vsel %vm3265, %v3266, %v3262
        %v3268 = vadd.s32 %v3263, %v3267
        %v3269 = vadd.s32 %v3268, 536870912
        %v3270 = vshrl.u32 %v3269, 30
        %v3271 = vshll.u32 %v3270, 30
        %v3272 = vsub.s32 %v3268, %v3271
        %vm3273 = vcmp.lt.s32.totalorder %v3272, 0
        %v3274 = vsub.s32 0, %v3272
        %v3275 = vsel %vm3273, %v3274, %v3272
        %v3276 = vclz %v3275
        %v3277 = vsub.s32 %v3276, 2
        %vm3278 = vcmp.gt.s32.totalorder 0, %v3277
        %v3279 = vsel %vm3278, 0, %v3277
        %v3280 = vsub.s32 32, %v3279
        %v3281 = vshll.u32 %v3272, %v3279
        %v3282 = vshrl.u32 %v3264, %v3280
        %v3283 = vor.u32 %v3281, %v3282
        %v3284 = vsub.s32 4294967266, %v3279
        %v3285 = vadd.s32 %v3284, 127
        %v3286 = vshll.u32 %v3285, 23
        %v3287 = vor.u32 4788187, %v3286
        %v3288 = vand.u32 2147483647, %v3287
        %v3290 = vcvt.s32.f32 %v3283
        %v3291 = vmul.f32 %v3290, %v3288
        %v3292 = vxor.u32 %v3291, 2147483648
        %v3293 = vsel %vm3210, %v3292, %v3291
        %v3294 = vsub.s32 4, %v3270
        %v3295 = vsel %vm3210, %v3294, %v3270
        %v3296 = vsel %vm3209, %v2778, %v3293
        %v3297 = vsel %vm3209, 0, %v3295
        %v3298 = vcosq.f32.pop %v3296
        %v3299 = vsinq.f32.pop %v3296
        %vm3300 = vweird.f32 %v2778
        %v3301 = vadd.s32 %v3297, 3
        %v3302 = vand.u32 %v3301, 3
        %vm3303 = vcmp.lt.s32.totalorder %v3302, 2
        %vm3304 = vcmp.eq.s32.totalorder %v3302, 0
        %v3305 = vxor.u32 %v3299, 2147483648
        %v3306 = vsel %vm3304, %v3298, %v3305
        %vm3307 = vcmp.eq.s32.totalorder %v3302, 2
        %v3308 = vxor.u32 %v3298, 2147483648
        %v3309 = vsel %vm3307, %v3308, %v3299
        %v3310 = vsel %vm3303, %v3306, %v3309
        %v3311 = vsel %vm3300, nan, %v3310
        %v3312 = vand.u32 2147483647, %v2779
        %vm3313 = vcmp.le.f32.partialorder %v3312, 0.7853982
        %vm3314 = vcmp.lt.s32.totalorder %v2779, 0
        %v3315 = vand.u32 %v2779, 2139095040
        %v3316 = vshrl.u32 %v3315, 23
        %v3317 = vsub.s32 %v3316, 127
        %v3318 = vand.u32 2147483647, %v2779
        %v3319 = vand.u32 %v3318, 8388607
        %v3320 = vor.u32 %v3319, 8388608
        %v3321 = vsub.s32 0, %v3320
        %v3322 = vadd.s32 %v3317, 1
        %vm3323 = vcmp.gt.s32.totalorder %v3322, 0
        %v3324 = vsel %vm3323, %v3322, 0
        %v3325 = vshrl.u32 %v3324, 5
        %v3326 = vand.u32 %v3324, 31
        %v3327 = vsub.s32 32, %v3326
        %v3328 = vshrl.u32 683565275, %v3327
        %v3329 = vshll.u32 683565275, %v3326
        %v3330 = vshrl.u32 2475754826, %v3327
        %v3331 = vor.u32 %v3329, %v3330
        %v3332 = vshll.u32 2475754826, %v3326
        %v3333 = vshrl.u32 2131351028, %v3327
        %v3334 = vor.u32 %v3332, %v3333
        %v3335 = vshll.u32 2131351028, %v3326
        %v3336 = vshrl.u32 2102212464, %v3327
        %v3337 = vor.u32 %v3335, %v3336
        %v3338 = vshll.u32 2102212464, %v3326
        %v3339 = vshrl.u32 920167782, %v3327
        %v3340 = vor.u32 %v3338, %v3339
        %v3341 = vshll.u32 920167782, %v3326
        %v3342 = vshrl.u32 1326507024, %v3327
        %v3343 = vor.u32 %v3341, %v3342
        %vm3344 = vcmp.lt.s32.totalorder %v3325, 1
        %vm3345 = vcmp.lt.s32.totalorder %v3325, 2
        %vm3346 = vcmp.lt.s32.totalorder %v3325, 3
        %vm3347 = vcmp.lt.s32.totalorder %v3325, 4
        %v3348 = vsel %vm3344, %v3328, %v3331
        %v3349 = vsel %vm3347, %v3337, 2102212464
        %v3350 = vsel %vm3346, %v3334, %v3349
        %v3351 = vsel %vm3345, %v3348, %v3350
        %v3352 = vsel %vm3344, %v3331, %v3334
        %v3353 = vsel %vm3347, %v3340, 920167782
        %v3354 = vsel %vm3346, %v3337, %v3353
        %v3355 = vsel %vm3345, %v3352, %v3354
        %v3356 = vsel %vm3344, %v3334, %v3337
        %v3357 = vsel %vm3347, %v3343, 1326507024
        %v3358 = vsel %vm3346, %v3340, %v3357
        %v3359 = vsel %vm3345, %v3356, %v3358
        %v3360 = vshll.u32 %v3320, 8
        %v3361 = vmul.u32.u64.compose %v3360, %v3359
        %v3362 = vextract.low.u32 %v3361
        %v3363 = vextract.high.u32 %v3361
        %v3364 = vmul.u32.u64.compose %v3360, %v3355
        %v3365 = vextract.low.u32 %v3364
        %v3366 = vextract.high.u32 %v3364
        %v3367 = vmul.u32 %v3360, %v3351
        %v3368 = vadd.s32 %v3363, %v3365
        %vm3369 = vc.u32 %v3363, %v3365
        %v3370 = vadd.s32 %v3366, 1
        %v3371 = vsel %vm3369, %v3370, %v3366
        %v3372 = vadd.s32 %v3367, %v3371
        %v3373 = vadd.s32 %v3372, 536870912
        %v3374 = vshrl.u32 %v3373, 30
        %v3375 = vshll.u32 %v3374, 30
        %v3376 = vsub.s32 %v3372, %v3375
        %vm3377 = vcmp.lt.s32.totalorder %v3376, 0
        %v3378 = vsub.s32 0, %v3376
        %v3379 = vsel %vm3377, %v3378, %v3376
        %v3380 = vclz %v3379
        %v3381 = vsub.s32 %v3380, 2
        %vm3382 = vcmp.gt.s32.totalorder 0, %v3381
        %v3383 = vsel %vm3382, 0, %v3381
        %v3384 = vsub.s32 32, %v3383
        %v3385 = vshll.u32 %v3376, %v3383
        %v3386 = vshrl.u32 %v3368, %v3384
        %v3387 = vor.u32 %v3385, %v3386
        %v3388 = vsub.s32 4294967266, %v3383
        %v3389 = vadd.s32 %v3388, 127
        %v3390 = vshll.u32 %v3389, 23
        %v3391 = vor.u32 4788187, %v3390
        %v3392 = vand.u32 2147483647, %v3391
        %v3394 = vcvt.s32.f32 %v3387
        %v3395 = vmul.f32 %v3394, %v3392
        %v3396 = vxor.u32 %v3395, 2147483648
        %v3397 = vsel %vm3314, %v3396, %v3395
        %v3398 = vsub.s32 4, %v3374
        %v3399 = vsel %vm3314, %v3398, %v3374
        %v3400 = vsel %vm3313, %v2779, %v3397
        %v3401 = vsel %vm3313, 0, %v3399
        %v3402 = vcosq.f32.pop %v3400
        %v3403 = vsinq.f32.pop %v3400
        %vm3404 = vweird.f32 %v2779
        %v3405 = vadd.s32 %v3401, 3
        %v3406 = vand.u32 %v3405, 3
        %vm3407 = vcmp.lt.s32.totalorder %v3406, 2
        %vm3408 = vcmp.eq.s32.totalorder %v3406, 0
        %v3409 = vxor.u32 %v3403, 2147483648
        %v3410 = vsel %vm3408, %v3402, %v3409
        %vm3411 = vcmp.eq.s32.totalorder %v3406, 2
        %v3412 = vxor.u32 %v3402, 2147483648
        %v3413 = vsel %vm3411, %v3412, %v3403
        %v3414 = vsel %vm3407, %v3410, %v3413
        %v3415 = vsel %vm3404, nan, %v3414
        %v3416 = vand.u32 2147483647, %v2780
        %vm3417 = vcmp.le.f32.partialorder %v3416, 0.7853982
        %vm3418 = vcmp.lt.s32.totalorder %v2780, 0
        %v3419 = vand.u32 %v2780, 2139095040
        %v3420 = vshrl.u32 %v3419, 23
        %v3421 = vsub.s32 %v3420, 127
        %v3422 = vand.u32 2147483647, %v2780
        %v3423 = vand.u32 %v3422, 8388607
        %v3424 = vor.u32 %v3423, 8388608
        %v3425 = vsub.s32 0, %v3424
        %v3426 = vadd.s32 %v3421, 1
        %vm3427 = vcmp.gt.s32.totalorder %v3426, 0
        %v3428 = vsel %vm3427, %v3426, 0
        %v3429 = vshrl.u32 %v3428, 5
        %v3430 = vand.u32 %v3428, 31
        %v3431 = vsub.s32 32, %v3430
        %v3432 = vshrl.u32 683565275, %v3431
        %v3433 = vshll.u32 683565275, %v3430
        %v3434 = vshrl.u32 2475754826, %v3431
        %v3435 = vor.u32 %v3433, %v3434
        %v3436 = vshll.u32 2475754826, %v3430
        %v3437 = vshrl.u32 2131351028, %v3431
        %v3438 = vor.u32 %v3436, %v3437
        %v3439 = vshll.u32 2131351028, %v3430
        %v3440 = vshrl.u32 2102212464, %v3431
        %v3441 = vor.u32 %v3439, %v3440
        %v3442 = vshll.u32 2102212464, %v3430
        %v3443 = vshrl.u32 920167782, %v3431
        %v3444 = vor.u32 %v3442, %v3443
        %v3445 = vshll.u32 920167782, %v3430
        %v3446 = vshrl.u32 1326507024, %v3431
        %v3447 = vor.u32 %v3445, %v3446
        %vm3448 = vcmp.lt.s32.totalorder %v3429, 1
        %vm3449 = vcmp.lt.s32.totalorder %v3429, 2
        %vm3450 = vcmp.lt.s32.totalorder %v3429, 3
        %vm3451 = vcmp.lt.s32.totalorder %v3429, 4
        %v3452 = vsel %vm3448, %v3432, %v3435
        %v3453 = vsel %vm3451, %v3441, 2102212464
        %v3454 = vsel %vm3450, %v3438, %v3453
        %v3455 = vsel %vm3449, %v3452, %v3454
        %v3456 = vsel %vm3448, %v3435, %v3438
        %v3457 = vsel %vm3451, %v3444, 920167782
        %v3458 = vsel %vm3450, %v3441, %v3457
        %v3459 = vsel %vm3449, %v3456, %v3458
        %v3460 = vsel %vm3448, %v3438, %v3441
        %v3461 = vsel %vm3451, %v3447, 1326507024
        %v3462 = vsel %vm3450, %v3444, %v3461
        %v3463 = vsel %vm3449, %v3460, %v3462
        %v3464 = vshll.u32 %v3424, 8
        %v3465 = vmul.u32.u64.compose %v3464, %v3463
        %v3466 = vextract.low.u32 %v3465
        %v3467 = vextract.high.u32 %v3465
        %v3468 = vmul.u32.u64.compose %v3464, %v3459
        %v3469 = vextract.low.u32 %v3468
        %v3470 = vextract.high.u32 %v3468
        %v3471 = vmul.u32 %v3464, %v3455
        %v3472 = vadd.s32 %v3467, %v3469
        %vm3473 = vc.u32 %v3467, %v3469
        %v3474 = vadd.s32 %v3470, 1
        %v3475 = vsel %vm3473, %v3474, %v3470
        %v3476 = vadd.s32 %v3471, %v3475
        %v3477 = vadd.s32 %v3476, 536870912
        %v3478 = vshrl.u32 %v3477, 30
        %v3479 = vshll.u32 %v3478, 30
        %v3480 = vsub.s32 %v3476, %v3479
        %vm3481 = vcmp.lt.s32.totalorder %v3480, 0
        %v3482 = vsub.s32 0, %v3480
        %v3483 = vsel %vm3481, %v3482, %v3480
        %v3484 = vclz %v3483
        %v3485 = vsub.s32 %v3484, 2
        %vm3486 = vcmp.gt.s32.totalorder 0, %v3485
        %v3487 = vsel %vm3486, 0, %v3485
        %v3488 = vsub.s32 32, %v3487
        %v3489 = vshll.u32 %v3480, %v3487
        %v3490 = vshrl.u32 %v3472, %v3488
        %v3491 = vor.u32 %v3489, %v3490
        %v3492 = vsub.s32 4294967266, %v3487
        %v3493 = vadd.s32 %v3492, 127
        %v3494 = vshll.u32 %v3493, 23
        %v3495 = vor.u32 4788187, %v3494
        %v3496 = vand.u32 2147483647, %v3495
        %v3498 = vcvt.s32.f32 %v3491
        %v3499 = vmul.f32 %v3498, %v3496
        %v3500 = vxor.u32 %v3499, 2147483648
        %v3501 = vsel %vm3418, %v3500, %v3499
        %v3502 = vsub.s32 4, %v3478
        %v3503 = vsel %vm3418, %v3502, %v3478
        %v3504 = vsel %vm3417, %v2780, %v3501
        %v3505 = vsel %vm3417, 0, %v3503
        %v3506 = vcosq.f32.pop %v3504
        %v3507 = vsinq.f32.pop %v3504
        %vm3508 = vweird.f32 %v2780
        %v3509 = vadd.s32 %v3505, 3
        %v3510 = vand.u32 %v3509, 3
        %vm3511 = vcmp.lt.s32.totalorder %v3510, 2
        %vm3512 = vcmp.eq.s32.totalorder %v3510, 0
        %v3513 = vxor.u32 %v3507, 2147483648
        %v3514 = vsel %vm3512, %v3506, %v3513
        %vm3515 = vcmp.eq.s32.totalorder %v3510, 2
        %v3516 = vxor.u32 %v3506, 2147483648
        %v3517 = vsel %vm3515, %v3516, %v3507
        %v3518 = vsel %vm3511, %v3514, %v3517
        %v3519 = vsel %vm3508, nan, %v3518
        %v3520 = vand.u32 2147483647, %v2781
        %vm3521 = vcmp.le.f32.partialorder %v3520, 0.7853982
        %vm3522 = vcmp.lt.s32.totalorder %v2781, 0
        %v3523 = vand.u32 %v2781, 2139095040
        %v3524 = vshrl.u32 %v3523, 23
        %v3525 = vsub.s32 %v3524, 127
        %v3526 = vand.u32 2147483647, %v2781
        %v3527 = vand.u32 %v3526, 8388607
        %v3528 = vor.u32 %v3527, 8388608
        %v3529 = vsub.s32 0, %v3528
        %v3530 = vadd.s32 %v3525, 1
        %vm3531 = vcmp.gt.s32.totalorder %v3530, 0
        %v3532 = vsel %vm3531, %v3530, 0
        %v3533 = vshrl.u32 %v3532, 5
        %v3534 = vand.u32 %v3532, 31
        %v3535 = vsub.s32 32, %v3534
        %v3536 = vshrl.u32 683565275, %v3535
        %v3537 = vshll.u32 683565275, %v3534
        %v3538 = vshrl.u32 2475754826, %v3535
        %v3539 = vor.u32 %v3537, %v3538
        %v3540 = vshll.u32 2475754826, %v3534
        %v3541 = vshrl.u32 2131351028, %v3535
        %v3542 = vor.u32 %v3540, %v3541
        %v3543 = vshll.u32 2131351028, %v3534
        %v3544 = vshrl.u32 2102212464, %v3535
        %v3545 = vor.u32 %v3543, %v3544
        %v3546 = vshll.u32 2102212464, %v3534
        %v3547 = vshrl.u32 920167782, %v3535
        %v3548 = vor.u32 %v3546, %v3547
        %v3549 = vshll.u32 920167782, %v3534
        %v3550 = vshrl.u32 1326507024, %v3535
        %v3551 = vor.u32 %v3549, %v3550
        %vm3552 = vcmp.lt.s32.totalorder %v3533, 1
        %vm3553 = vcmp.lt.s32.totalorder %v3533, 2
        %vm3554 = vcmp.lt.s32.totalorder %v3533, 3
        %vm3555 = vcmp.lt.s32.totalorder %v3533, 4
        %v3556 = vsel %vm3552, %v3536, %v3539
        %v3557 = vsel %vm3555, %v3545, 2102212464
        %v3558 = vsel %vm3554, %v3542, %v3557
        %v3559 = vsel %vm3553, %v3556, %v3558
        %v3560 = vsel %vm3552, %v3539, %v3542
        %v3561 = vsel %vm3555, %v3548, 920167782
        %v3562 = vsel %vm3554, %v3545, %v3561
        %v3563 = vsel %vm3553, %v3560, %v3562
        %v3564 = vsel %vm3552, %v3542, %v3545
        %v3565 = vsel %vm3555, %v3551, 1326507024
        %v3566 = vsel %vm3554, %v3548, %v3565
        %v3567 = vsel %vm3553, %v3564, %v3566
        %v3568 = vshll.u32 %v3528, 8
        %v3569 = vmul.u32.u64.compose %v3568, %v3567
        %v3570 = vextract.low.u32 %v3569
        %v3571 = vextract.high.u32 %v3569
        %v3572 = vmul.u32.u64.compose %v3568, %v3563
        %v3573 = vextract.low.u32 %v3572
        %v3574 = vextract.high.u32 %v3572
        %v3575 = vmul.u32 %v3568, %v3559
        %v3576 = vadd.s32 %v3571, %v3573
        %vm3577 = vc.u32 %v3571, %v3573
        %v3578 = vadd.s32 %v3574, 1
        %v3579 = vsel %vm3577, %v3578, %v3574
        %v3580 = vadd.s32 %v3575, %v3579
        %v3581 = vadd.s32 %v3580, 536870912
        %v3582 = vshrl.u32 %v3581, 30
        %v3583 = vshll.u32 %v3582, 30
        %v3584 = vsub.s32 %v3580, %v3583
        %vm3585 = vcmp.lt.s32.totalorder %v3584, 0
        %v3586 = vsub.s32 0, %v3584
        %v3587 = vsel %vm3585, %v3586, %v3584
        %v3588 = vclz %v3587
        %v3589 = vsub.s32 %v3588, 2
        %vm3590 = vcmp.gt.s32.totalorder 0, %v3589
        %v3591 = vsel %vm3590, 0, %v3589
        %v3592 = vsub.s32 32, %v3591
        %v3593 = vshll.u32 %v3584, %v3591
        %v3594 = vshrl.u32 %v3576, %v3592
        %v3595 = vor.u32 %v3593, %v3594
        %v3596 = vsub.s32 4294967266, %v3591
        %v3597 = vadd.s32 %v3596, 127
        %v3598 = vshll.u32 %v3597, 23
        %v3599 = vor.u32 4788187, %v3598
        %v3600 = vand.u32 2147483647, %v3599
        %v3602 = vcvt.s32.f32 %v3595
        %v3603 = vmul.f32 %v3602, %v3600
        %v3604 = vxor.u32 %v3603, 2147483648
        %v3605 = vsel %vm3522, %v3604, %v3603
        %v3606 = vsub.s32 4, %v3582
        %v3607 = vsel %vm3522, %v3606, %v3582
        %v3608 = vsel %vm3521, %v2781, %v3605
        %v3609 = vsel %vm3521, 0, %v3607
        %v3610 = vcosq.f32.pop %v3608
        %v3611 = vsinq.f32.pop %v3608
        %vm3612 = vweird.f32 %v2781
        %v3613 = vadd.s32 %v3609, 3
        %v3614 = vand.u32 %v3613, 3
        %vm3615 = vcmp.lt.s32.totalorder %v3614, 2
        %vm3616 = vcmp.eq.s32.totalorder %v3614, 0
        %v3617 = vxor.u32 %v3611, 2147483648
        %v3618 = vsel %vm3616, %v3610, %v3617
        %vm3619 = vcmp.eq.s32.totalorder %v3614, 2
        %v3620 = vxor.u32 %v3610, 2147483648
        %v3621 = vsel %vm3619, %v3620, %v3611
        %v3622 = vsel %vm3615, %v3618, %v3621
        %v3623 = vsel %vm3612, nan, %v3622
        %v3624 = vand.u32 2147483647, %v2782
        %vm3625 = vcmp.le.f32.partialorder %v3624, 0.7853982
        %vm3626 = vcmp.lt.s32.totalorder %v2782, 0
        %v3627 = vand.u32 %v2782, 2139095040
        %v3628 = vshrl.u32 %v3627, 23
        %v3629 = vsub.s32 %v3628, 127
        %v3630 = vand.u32 2147483647, %v2782
        %v3631 = vand.u32 %v3630, 8388607
        %v3632 = vor.u32 %v3631, 8388608
        %v3633 = vsub.s32 0, %v3632
        %v3634 = vadd.s32 %v3629, 1
        %vm3635 = vcmp.gt.s32.totalorder %v3634, 0
        %v3636 = vsel %vm3635, %v3634, 0
        %v3637 = vshrl.u32 %v3636, 5
        %v3638 = vand.u32 %v3636, 31
        %v3639 = vsub.s32 32, %v3638
        %v3640 = vshrl.u32 683565275, %v3639
        %v3641 = vshll.u32 683565275, %v3638
        %v3642 = vshrl.u32 2475754826, %v3639
        %v3643 = vor.u32 %v3641, %v3642
        %v3644 = vshll.u32 2475754826, %v3638
        %v3645 = vshrl.u32 2131351028, %v3639
        %v3646 = vor.u32 %v3644, %v3645
        %v3647 = vshll.u32 2131351028, %v3638
        %v3648 = vshrl.u32 2102212464, %v3639
        %v3649 = vor.u32 %v3647, %v3648
        %v3650 = vshll.u32 2102212464, %v3638
        %v3651 = vshrl.u32 920167782, %v3639
        %v3652 = vor.u32 %v3650, %v3651
        %v3653 = vshll.u32 920167782, %v3638
        %v3654 = vshrl.u32 1326507024, %v3639
        %v3655 = vor.u32 %v3653, %v3654
        %vm3656 = vcmp.lt.s32.totalorder %v3637, 1
        %vm3657 = vcmp.lt.s32.totalorder %v3637, 2
        %vm3658 = vcmp.lt.s32.totalorder %v3637, 3
        %vm3659 = vcmp.lt.s32.totalorder %v3637, 4
        %v3660 = vsel %vm3656, %v3640, %v3643
        %v3661 = vsel %vm3659, %v3649, 2102212464
        %v3662 = vsel %vm3658, %v3646, %v3661
        %v3663 = vsel %vm3657, %v3660, %v3662
        %v3664 = vsel %vm3656, %v3643, %v3646
        %v3665 = vsel %vm3659, %v3652, 920167782
        %v3666 = vsel %vm3658, %v3649, %v3665
        %v3667 = vsel %vm3657, %v3664, %v3666
        %v3668 = vsel %vm3656, %v3646, %v3649
        %v3669 = vsel %vm3659, %v3655, 1326507024
        %v3670 = vsel %vm3658, %v3652, %v3669
        %v3671 = vsel %vm3657, %v3668, %v3670
        %v3672 = vshll.u32 %v3632, 8
        %v3673 = vmul.u32.u64.compose %v3672, %v3671
        %v3674 = vextract.low.u32 %v3673
        %v3675 = vextract.high.u32 %v3673
        %v3676 = vmul.u32.u64.compose %v3672, %v3667
        %v3677 = vextract.low.u32 %v3676
        %v3678 = vextract.high.u32 %v3676
        %v3679 = vmul.u32 %v3672, %v3663
        %v3680 = vadd.s32 %v3675, %v3677
        %vm3681 = vc.u32 %v3675, %v3677
        %v3682 = vadd.s32 %v3678, 1
        %v3683 = vsel %vm3681, %v3682, %v3678
        %v3684 = vadd.s32 %v3679, %v3683
        %v3685 = vadd.s32 %v3684, 536870912
        %v3686 = vshrl.u32 %v3685, 30
        %v3687 = vshll.u32 %v3686, 30
        %v3688 = vsub.s32 %v3684, %v3687
        %vm3689 = vcmp.lt.s32.totalorder %v3688, 0
        %v3690 = vsub.s32 0, %v3688
        %v3691 = vsel %vm3689, %v3690, %v3688
        %v3692 = vclz %v3691
        %v3693 = vsub.s32 %v3692, 2
        %vm3694 = vcmp.gt.s32.totalorder 0, %v3693
        %v3695 = vsel %vm3694, 0, %v3693
        %v3696 = vsub.s32 32, %v3695
        %v3697 = vshll.u32 %v3688, %v3695
        %v3698 = vshrl.u32 %v3680, %v3696
        %v3699 = vor.u32 %v3697, %v3698
        %v3700 = vsub.s32 4294967266, %v3695
        %v3701 = vadd.s32 %v3700, 127
        %v3702 = vshll.u32 %v3701, 23
        %v3703 = vor.u32 4788187, %v3702
        %v3704 = vand.u32 2147483647, %v3703
        %v3706 = vcvt.s32.f32 %v3699
        %v3707 = vmul.f32 %v3706, %v3704
        %v3708 = vxor.u32 %v3707, 2147483648
        %v3709 = vsel %vm3626, %v3708, %v3707
        %v3710 = vsub.s32 4, %v3686
        %v3711 = vsel %vm3626, %v3710, %v3686
        %v3712 = vsel %vm3625, %v2782, %v3709
        %v3713 = vsel %vm3625, 0, %v3711
        %v3714 = vcosq.f32.pop %v3712
        %v3715 = vsinq.f32.pop %v3712
        %vm3716 = vweird.f32 %v2782
        %v3717 = vadd.s32 %v3713, 3
        %v3718 = vand.u32 %v3717, 3
        %vm3719 = vcmp.lt.s32.totalorder %v3718, 2
        %vm3720 = vcmp.eq.s32.totalorder %v3718, 0
        %v3721 = vxor.u32 %v3715, 2147483648
        %v3722 = vsel %vm3720, %v3714, %v3721
        %vm3723 = vcmp.eq.s32.totalorder %v3718, 2
        %v3724 = vxor.u32 %v3714, 2147483648
        %v3725 = vsel %vm3723, %v3724, %v3715
        %v3726 = vsel %vm3719, %v3722, %v3725
        %v3727 = vsel %vm3716, nan, %v3726
        %v3728 = vand.u32 2147483647, %v2783
        %vm3729 = vcmp.le.f32.partialorder %v3728, 0.7853982
        %vm3730 = vcmp.lt.s32.totalorder %v2783, 0
        %v3731 = vand.u32 %v2783, 2139095040
        %v3732 = vshrl.u32 %v3731, 23
        %v3733 = vsub.s32 %v3732, 127
        %v3734 = vand.u32 2147483647, %v2783
        %v3735 = vand.u32 %v3734, 8388607
        %v3736 = vor.u32 %v3735, 8388608
        %v3737 = vsub.s32 0, %v3736
        %v3738 = vadd.s32 %v3733, 1
        %vm3739 = vcmp.gt.s32.totalorder %v3738, 0
        %v3740 = vsel %vm3739, %v3738, 0
        %v3741 = vshrl.u32 %v3740, 5
        %v3742 = vand.u32 %v3740, 31
        %v3743 = vsub.s32 32, %v3742
        %v3744 = vshrl.u32 683565275, %v3743
        %v3745 = vshll.u32 683565275, %v3742
        %v3746 = vshrl.u32 2475754826, %v3743
        %v3747 = vor.u32 %v3745, %v3746
        %v3748 = vshll.u32 2475754826, %v3742
        %v3749 = vshrl.u32 2131351028, %v3743
        %v3750 = vor.u32 %v3748, %v3749
        %v3751 = vshll.u32 2131351028, %v3742
        %v3752 = vshrl.u32 2102212464, %v3743
        %v3753 = vor.u32 %v3751, %v3752
        %v3754 = vshll.u32 2102212464, %v3742
        %v3755 = vshrl.u32 920167782, %v3743
        %v3756 = vor.u32 %v3754, %v3755
        %v3757 = vshll.u32 920167782, %v3742
        %v3758 = vshrl.u32 1326507024, %v3743
        %v3759 = vor.u32 %v3757, %v3758
        %vm3760 = vcmp.lt.s32.totalorder %v3741, 1
        %vm3761 = vcmp.lt.s32.totalorder %v3741, 2
        %vm3762 = vcmp.lt.s32.totalorder %v3741, 3
        %vm3763 = vcmp.lt.s32.totalorder %v3741, 4
        %v3764 = vsel %vm3760, %v3744, %v3747
        %v3765 = vsel %vm3763, %v3753, 2102212464
        %v3766 = vsel %vm3762, %v3750, %v3765
        %v3767 = vsel %vm3761, %v3764, %v3766
        %v3768 = vsel %vm3760, %v3747, %v3750
        %v3769 = vsel %vm3763, %v3756, 920167782
        %v3770 = vsel %vm3762, %v3753, %v3769
        %v3771 = vsel %vm3761, %v3768, %v3770
        %v3772 = vsel %vm3760, %v3750, %v3753
        %v3773 = vsel %vm3763, %v3759, 1326507024
        %v3774 = vsel %vm3762, %v3756, %v3773
        %v3775 = vsel %vm3761, %v3772, %v3774
        %v3776 = vshll.u32 %v3736, 8
        %v3777 = vmul.u32.u64.compose %v3776, %v3775
        %v3778 = vextract.low.u32 %v3777
        %v3779 = vextract.high.u32 %v3777
        %v3780 = vmul.u32.u64.compose %v3776, %v3771
        %v3781 = vextract.low.u32 %v3780
        %v3782 = vextract.high.u32 %v3780
        %v3783 = vmul.u32 %v3776, %v3767
        %v3784 = vadd.s32 %v3779, %v3781
        %vm3785 = vc.u32 %v3779, %v3781
        %v3786 = vadd.s32 %v3782, 1
        %v3787 = vsel %vm3785, %v3786, %v3782
        %v3788 = vadd.s32 %v3783, %v3787
        %v3789 = vadd.s32 %v3788, 536870912
        %v3790 = vshrl.u32 %v3789, 30
        %v3791 = vshll.u32 %v3790, 30
        %v3792 = vsub.s32 %v3788, %v3791
        %vm3793 = vcmp.lt.s32.totalorder %v3792, 0
        %v3794 = vsub.s32 0, %v3792
        %v3795 = vsel %vm3793, %v3794, %v3792
        %v3796 = vclz %v3795
        %v3797 = vsub.s32 %v3796, 2
        %vm3798 = vcmp.gt.s32.totalorder 0, %v3797
        %v3799 = vsel %vm3798, 0, %v3797
        %v3800 = vsub.s32 32, %v3799
        %v3801 = vshll.u32 %v3792, %v3799
        %v3802 = vshrl.u32 %v3784, %v3800
        %v3803 = vor.u32 %v3801, %v3802
        %v3804 = vsub.s32 4294967266, %v3799
        %v3805 = vadd.s32 %v3804, 127
        %v3806 = vshll.u32 %v3805, 23
        %v3807 = vor.u32 4788187, %v3806
        %v3808 = vand.u32 2147483647, %v3807
        %v3810 = vcvt.s32.f32 %v3803
        %v3811 = vmul.f32 %v3810, %v3808
        %v3812 = vxor.u32 %v3811, 2147483648
        %v3813 = vsel %vm3730, %v3812, %v3811
        %v3814 = vsub.s32 4, %v3790
        %v3815 = vsel %vm3730, %v3814, %v3790
        %v3816 = vsel %vm3729, %v2783, %v3813
        %v3817 = vsel %vm3729, 0, %v3815
        %v3818 = vcosq.f32.pop %v3816
        %v3819 = vsinq.f32.pop %v3816
        %vm3820 = vweird.f32 %v2783
        %v3821 = vadd.s32 %v3817, 3
        %v3822 = vand.u32 %v3821, 3
        %vm3823 = vcmp.lt.s32.totalorder %v3822, 2
        %vm3824 = vcmp.eq.s32.totalorder %v3822, 0
        %v3825 = vxor.u32 %v3819, 2147483648
        %v3826 = vsel %vm3824, %v3818, %v3825
        %vm3827 = vcmp.eq.s32.totalorder %v3822, 2
        %v3828 = vxor.u32 %v3818, 2147483648
        %v3829 = vsel %vm3827, %v3828, %v3819
        %v3830 = vsel %vm3823, %v3826, %v3829
        %v3831 = vsel %vm3820, nan, %v3830
        %v3832 = vand.u32 2147483647, %v2784
        %vm3833 = vcmp.le.f32.partialorder %v3832, 0.7853982
        %vm3834 = vcmp.lt.s32.totalorder %v2784, 0
        %v3835 = vand.u32 %v2784, 2139095040
        %v3836 = vshrl.u32 %v3835, 23
        %v3837 = vsub.s32 %v3836, 127
        %v3838 = vand.u32 2147483647, %v2784
        %v3839 = vand.u32 %v3838, 8388607
        %v3840 = vor.u32 %v3839, 8388608
        %v3841 = vsub.s32 0, %v3840
        %v3842 = vadd.s32 %v3837, 1
        %vm3843 = vcmp.gt.s32.totalorder %v3842, 0
        %v3844 = vsel %vm3843, %v3842, 0
        %v3845 = vshrl.u32 %v3844, 5
        %v3846 = vand.u32 %v3844, 31
        %v3847 = vsub.s32 32, %v3846
        %v3848 = vshrl.u32 683565275, %v3847
        %v3849 = vshll.u32 683565275, %v3846
        %v3850 = vshrl.u32 2475754826, %v3847
        %v3851 = vor.u32 %v3849, %v3850
        %v3852 = vshll.u32 2475754826, %v3846
        %v3853 = vshrl.u32 2131351028, %v3847
        %v3854 = vor.u32 %v3852, %v3853
        %v3855 = vshll.u32 2131351028, %v3846
        %v3856 = vshrl.u32 2102212464, %v3847
        %v3857 = vor.u32 %v3855, %v3856
        %v3858 = vshll.u32 2102212464, %v3846
        %v3859 = vshrl.u32 920167782, %v3847
        %v3860 = vor.u32 %v3858, %v3859
        %v3861 = vshll.u32 920167782, %v3846
        %v3862 = vshrl.u32 1326507024, %v3847
        %v3863 = vor.u32 %v3861, %v3862
        %vm3864 = vcmp.lt.s32.totalorder %v3845, 1
        %vm3865 = vcmp.lt.s32.totalorder %v3845, 2
        %vm3866 = vcmp.lt.s32.totalorder %v3845, 3
        %vm3867 = vcmp.lt.s32.totalorder %v3845, 4
        %v3868 = vsel %vm3864, %v3848, %v3851
        %v3869 = vsel %vm3867, %v3857, 2102212464
        %v3870 = vsel %vm3866, %v3854, %v3869
        %v3871 = vsel %vm3865, %v3868, %v3870
        %v3872 = vsel %vm3864, %v3851, %v3854
        %v3873 = vsel %vm3867, %v3860, 920167782
        %v3874 = vsel %vm3866, %v3857, %v3873
        %v3875 = vsel %vm3865, %v3872, %v3874
        %v3876 = vsel %vm3864, %v3854, %v3857
        %v3877 = vsel %vm3867, %v3863, 1326507024
        %v3878 = vsel %vm3866, %v3860, %v3877
        %v3879 = vsel %vm3865, %v3876, %v3878
        %v3880 = vshll.u32 %v3840, 8
        %v3881 = vmul.u32.u64.compose %v3880, %v3879
        %v3882 = vextract.low.u32 %v3881
        %v3883 = vextract.high.u32 %v3881
        %v3884 = vmul.u32.u64.compose %v3880, %v3875
        %v3885 = vextract.low.u32 %v3884
        %v3886 = vextract.high.u32 %v3884
        %v3887 = vmul.u32 %v3880, %v3871
        %v3888 = vadd.s32 %v3883, %v3885
        %vm3889 = vc.u32 %v3883, %v3885
        %v3890 = vadd.s32 %v3886, 1
        %v3891 = vsel %vm3889, %v3890, %v3886
        %v3892 = vadd.s32 %v3887, %v3891
        %v3893 = vadd.s32 %v3892, 536870912
        %v3894 = vshrl.u32 %v3893, 30
        %v3895 = vshll.u32 %v3894, 30
        %v3896 = vsub.s32 %v3892, %v3895
        %vm3897 = vcmp.lt.s32.totalorder %v3896, 0
        %v3898 = vsub.s32 0, %v3896
        %v3899 = vsel %vm3897, %v3898, %v3896
        %v3900 = vclz %v3899
        %v3901 = vsub.s32 %v3900, 2
        %vm3902 = vcmp.gt.s32.totalorder 0, %v3901
        %v3903 = vsel %vm3902, 0, %v3901
        %v3904 = vsub.s32 32, %v3903
        %v3905 = vshll.u32 %v3896, %v3903
        %v3906 = vshrl.u32 %v3888, %v3904
        %v3907 = vor.u32 %v3905, %v3906
        %v3908 = vsub.s32 4294967266, %v3903
        %v3909 = vadd.s32 %v3908, 127
        %v3910 = vshll.u32 %v3909, 23
        %v3911 = vor.u32 4788187, %v3910
        %v3912 = vand.u32 2147483647, %v3911
        %v3914 = vcvt.s32.f32 %v3907
        %v3915 = vmul.f32 %v3914, %v3912
        %v3916 = vxor.u32 %v3915, 2147483648
        %v3917 = vsel %vm3834, %v3916, %v3915
        %v3918 = vsub.s32 4, %v3894
        %v3919 = vsel %vm3834, %v3918, %v3894
        %v3920 = vsel %vm3833, %v2784, %v3917
        %v3921 = vsel %vm3833, 0, %v3919
        %v3922 = vcosq.f32.pop %v3920
        %v3923 = vsinq.f32.pop %v3920
        %vm3924 = vweird.f32 %v2784
        %v3925 = vadd.s32 %v3921, 3
        %v3926 = vand.u32 %v3925, 3
        %vm3927 = vcmp.lt.s32.totalorder %v3926, 2
        %vm3928 = vcmp.eq.s32.totalorder %v3926, 0
        %v3929 = vxor.u32 %v3923, 2147483648
        %v3930 = vsel %vm3928, %v3922, %v3929
        %vm3931 = vcmp.eq.s32.totalorder %v3926, 2
        %v3932 = vxor.u32 %v3922, 2147483648
        %v3933 = vsel %vm3931, %v3932, %v3923
        %v3934 = vsel %vm3927, %v3930, %v3933
        %v3935 = vsel %vm3924, nan, %v3934
        %v3936 = vand.u32 2147483647, %v2785
        %vm3937 = vcmp.le.f32.partialorder %v3936, 0.7853982
        %vm3938 = vcmp.lt.s32.totalorder %v2785, 0
        %v3939 = vand.u32 %v2785, 2139095040
        %v3940 = vshrl.u32 %v3939, 23
        %v3941 = vsub.s32 %v3940, 127
        %v3942 = vand.u32 2147483647, %v2785
        %v3943 = vand.u32 %v3942, 8388607
        %v3944 = vor.u32 %v3943, 8388608
        %v3945 = vsub.s32 0, %v3944
        %v3946 = vadd.s32 %v3941, 1
        %vm3947 = vcmp.gt.s32.totalorder %v3946, 0
        %v3948 = vsel %vm3947, %v3946, 0
        %v3949 = vshrl.u32 %v3948, 5
        %v3950 = vand.u32 %v3948, 31
        %v3951 = vsub.s32 32, %v3950
        %v3952 = vshrl.u32 683565275, %v3951
        %v3953 = vshll.u32 683565275, %v3950
        %v3954 = vshrl.u32 2475754826, %v3951
        %v3955 = vor.u32 %v3953, %v3954
        %v3956 = vshll.u32 2475754826, %v3950
        %v3957 = vshrl.u32 2131351028, %v3951
        %v3958 = vor.u32 %v3956, %v3957
        %v3959 = vshll.u32 2131351028, %v3950
        %v3960 = vshrl.u32 2102212464, %v3951
        %v3961 = vor.u32 %v3959, %v3960
        %v3962 = vshll.u32 2102212464, %v3950
        %v3963 = vshrl.u32 920167782, %v3951
        %v3964 = vor.u32 %v3962, %v3963
        %v3965 = vshll.u32 920167782, %v3950
        %v3966 = vshrl.u32 1326507024, %v3951
        %v3967 = vor.u32 %v3965, %v3966
        %vm3968 = vcmp.lt.s32.totalorder %v3949, 1
        %vm3969 = vcmp.lt.s32.totalorder %v3949, 2
        %vm3970 = vcmp.lt.s32.totalorder %v3949, 3
        %vm3971 = vcmp.lt.s32.totalorder %v3949, 4
        %v3972 = vsel %vm3968, %v3952, %v3955
        %v3973 = vsel %vm3971, %v3961, 2102212464
        %v3974 = vsel %vm3970, %v3958, %v3973
        %v3975 = vsel %vm3969, %v3972, %v3974
        %v3976 = vsel %vm3968, %v3955, %v3958
        %v3977 = vsel %vm3971, %v3964, 920167782
        %v3978 = vsel %vm3970, %v3961, %v3977
        %v3979 = vsel %vm3969, %v3976, %v3978
        %v3980 = vsel %vm3968, %v3958, %v3961
        %v3981 = vsel %vm3971, %v3967, 1326507024
        %v3982 = vsel %vm3970, %v3964, %v3981
        %v3983 = vsel %vm3969, %v3980, %v3982
        %v3984 = vshll.u32 %v3944, 8
        %v3985 = vmul.u32.u64.compose %v3984, %v3983
        %v3986 = vextract.low.u32 %v3985
        %v3987 = vextract.high.u32 %v3985
        %v3988 = vmul.u32.u64.compose %v3984, %v3979
        %v3989 = vextract.low.u32 %v3988
        %v3990 = vextract.high.u32 %v3988
        %v3991 = vmul.u32 %v3984, %v3975
        %v3992 = vadd.s32 %v3987, %v3989
        %vm3993 = vc.u32 %v3987, %v3989
        %v3994 = vadd.s32 %v3990, 1
        %v3995 = vsel %vm3993, %v3994, %v3990
        %v3996 = vadd.s32 %v3991, %v3995
        %v3997 = vadd.s32 %v3996, 536870912
        %v3998 = vshrl.u32 %v3997, 30
        %v3999 = vshll.u32 %v3998, 30
        %v4000 = vsub.s32 %v3996, %v3999
        %vm4001 = vcmp.lt.s32.totalorder %v4000, 0
        %v4002 = vsub.s32 0, %v4000
        %v4003 = vsel %vm4001, %v4002, %v4000
        %v4004 = vclz %v4003
        %v4005 = vsub.s32 %v4004, 2
        %vm4006 = vcmp.gt.s32.totalorder 0, %v4005
        %v4007 = vsel %vm4006, 0, %v4005
        %v4008 = vsub.s32 32, %v4007
        %v4009 = vshll.u32 %v4000, %v4007
        %v4010 = vshrl.u32 %v3992, %v4008
        %v4011 = vor.u32 %v4009, %v4010
        %v4012 = vsub.s32 4294967266, %v4007
        %v4013 = vadd.s32 %v4012, 127
        %v4014 = vshll.u32 %v4013, 23
        %v4015 = vor.u32 4788187, %v4014
        %v4016 = vand.u32 2147483647, %v4015
        %v4018 = vcvt.s32.f32 %v4011
        %v4019 = vmul.f32 %v4018, %v4016
        %v4020 = vxor.u32 %v4019, 2147483648
        %v4021 = vsel %vm3938, %v4020, %v4019
        %v4022 = vsub.s32 4, %v3998
        %v4023 = vsel %vm3938, %v4022, %v3998
        %v4024 = vsel %vm3937, %v2785, %v4021
        %v4025 = vsel %vm3937, 0, %v4023
        %v4026 = vcosq.f32.pop %v4024
        %v4027 = vsinq.f32.pop %v4024
        %vm4028 = vweird.f32 %v2785
        %v4029 = vadd.s32 %v4025, 3
        %v4030 = vand.u32 %v4029, 3
        %vm4031 = vcmp.lt.s32.totalorder %v4030, 2
        %vm4032 = vcmp.eq.s32.totalorder %v4030, 0
        %v4033 = vxor.u32 %v4027, 2147483648
        %v4034 = vsel %vm4032, %v4026, %v4033
        %vm4035 = vcmp.eq.s32.totalorder %v4030, 2
        %v4036 = vxor.u32 %v4026, 2147483648
        %v4037 = vsel %vm4035, %v4036, %v4027
        %v4038 = vsel %vm4031, %v4034, %v4037
        %v4039 = vsel %vm4028, nan, %v4038
        %v4040 = vand.u32 2147483647, %v2786
        %vm4041 = vcmp.le.f32.partialorder %v4040, 0.7853982
        %vm4042 = vcmp.lt.s32.totalorder %v2786, 0
        %v4043 = vand.u32 %v2786, 2139095040
        %v4044 = vshrl.u32 %v4043, 23
        %v4045 = vsub.s32 %v4044, 127
        %v4046 = vand.u32 2147483647, %v2786
        %v4047 = vand.u32 %v4046, 8388607
        %v4048 = vor.u32 %v4047, 8388608
        %v4049 = vsub.s32 0, %v4048
        %v4050 = vadd.s32 %v4045, 1
        %vm4051 = vcmp.gt.s32.totalorder %v4050, 0
        %v4052 = vsel %vm4051, %v4050, 0
        %v4053 = vshrl.u32 %v4052, 5
        %v4054 = vand.u32 %v4052, 31
        %v4055 = vsub.s32 32, %v4054
        %v4056 = vshrl.u32 683565275, %v4055
        %v4057 = vshll.u32 683565275, %v4054
        %v4058 = vshrl.u32 2475754826, %v4055
        %v4059 = vor.u32 %v4057, %v4058
        %v4060 = vshll.u32 2475754826, %v4054
        %v4061 = vshrl.u32 2131351028, %v4055
        %v4062 = vor.u32 %v4060, %v4061
        %v4063 = vshll.u32 2131351028, %v4054
        %v4064 = vshrl.u32 2102212464, %v4055
        %v4065 = vor.u32 %v4063, %v4064
        %v4066 = vshll.u32 2102212464, %v4054
        %v4067 = vshrl.u32 920167782, %v4055
        %v4068 = vor.u32 %v4066, %v4067
        %v4069 = vshll.u32 920167782, %v4054
        %v4070 = vshrl.u32 1326507024, %v4055
        %v4071 = vor.u32 %v4069, %v4070
        %vm4072 = vcmp.lt.s32.totalorder %v4053, 1
        %vm4073 = vcmp.lt.s32.totalorder %v4053, 2
        %vm4074 = vcmp.lt.s32.totalorder %v4053, 3
        %vm4075 = vcmp.lt.s32.totalorder %v4053, 4
        %v4076 = vsel %vm4072, %v4056, %v4059
        %v4077 = vsel %vm4075, %v4065, 2102212464
        %v4078 = vsel %vm4074, %v4062, %v4077
        %v4079 = vsel %vm4073, %v4076, %v4078
        %v4080 = vsel %vm4072, %v4059, %v4062
        %v4081 = vsel %vm4075, %v4068, 920167782
        %v4082 = vsel %vm4074, %v4065, %v4081
        %v4083 = vsel %vm4073, %v4080, %v4082
        %v4084 = vsel %vm4072, %v4062, %v4065
        %v4085 = vsel %vm4075, %v4071, 1326507024
        %v4086 = vsel %vm4074, %v4068, %v4085
        %v4087 = vsel %vm4073, %v4084, %v4086
        %v4088 = vshll.u32 %v4048, 8
        %v4089 = vmul.u32.u64.compose %v4088, %v4087
        %v4090 = vextract.low.u32 %v4089
        %v4091 = vextract.high.u32 %v4089
        %v4092 = vmul.u32.u64.compose %v4088, %v4083
        %v4093 = vextract.low.u32 %v4092
        %v4094 = vextract.high.u32 %v4092
        %v4095 = vmul.u32 %v4088, %v4079
        %v4096 = vadd.s32 %v4091, %v4093
        %vm4097 = vc.u32 %v4091, %v4093
        %v4098 = vadd.s32 %v4094, 1
        %v4099 = vsel %vm4097, %v4098, %v4094
        %v4100 = vadd.s32 %v4095, %v4099
        %v4101 = vadd.s32 %v4100, 536870912
        %v4102 = vshrl.u32 %v4101, 30
        %v4103 = vshll.u32 %v4102, 30
        %v4104 = vsub.s32 %v4100, %v4103
        %vm4105 = vcmp.lt.s32.totalorder %v4104, 0
        %v4106 = vsub.s32 0, %v4104
        %v4107 = vsel %vm4105, %v4106, %v4104
        %v4108 = vclz %v4107
        %v4109 = vsub.s32 %v4108, 2
        %vm4110 = vcmp.gt.s32.totalorder 0, %v4109
        %v4111 = vsel %vm4110, 0, %v4109
        %v4112 = vsub.s32 32, %v4111
        %v4113 = vshll.u32 %v4104, %v4111
        %v4114 = vshrl.u32 %v4096, %v4112
        %v4115 = vor.u32 %v4113, %v4114
        %v4116 = vsub.s32 4294967266, %v4111
        %v4117 = vadd.s32 %v4116, 127
        %v4118 = vshll.u32 %v4117, 23
        %v4119 = vor.u32 4788187, %v4118
        %v4120 = vand.u32 2147483647, %v4119
        %v4122 = vcvt.s32.f32 %v4115
        %v4123 = vmul.f32 %v4122, %v4120
        %v4124 = vxor.u32 %v4123, 2147483648
        %v4125 = vsel %vm4042, %v4124, %v4123
        %v4126 = vsub.s32 4, %v4102
        %v4127 = vsel %vm4042, %v4126, %v4102
        %v4128 = vsel %vm4041, %v2786, %v4125
        %v4129 = vsel %vm4041, 0, %v4127
        %v4130 = vcosq.f32.pop %v4128
        %v4131 = vsinq.f32.pop %v4128
        %vm4132 = vweird.f32 %v2786
        %v4133 = vadd.s32 %v4129, 3
        %v4134 = vand.u32 %v4133, 3
        %vm4135 = vcmp.lt.s32.totalorder %v4134, 2
        %vm4136 = vcmp.eq.s32.totalorder %v4134, 0
        %v4137 = vxor.u32 %v4131, 2147483648
        %v4138 = vsel %vm4136, %v4130, %v4137
        %vm4139 = vcmp.eq.s32.totalorder %v4134, 2
        %v4140 = vxor.u32 %v4130, 2147483648
        %v4141 = vsel %vm4139, %v4140, %v4131
        %v4142 = vsel %vm4135, %v4138, %v4141
        %v4143 = vsel %vm4132, nan, %v4142
        %v4144 = vand.u32 2147483647, %v2787
        %vm4145 = vcmp.le.f32.partialorder %v4144, 0.7853982
        %vm4146 = vcmp.lt.s32.totalorder %v2787, 0
        %v4147 = vand.u32 %v2787, 2139095040
        %v4148 = vshrl.u32 %v4147, 23
        %v4149 = vsub.s32 %v4148, 127
        %v4150 = vand.u32 2147483647, %v2787
        %v4151 = vand.u32 %v4150, 8388607
        %v4152 = vor.u32 %v4151, 8388608
        %v4153 = vsub.s32 0, %v4152
        %v4154 = vadd.s32 %v4149, 1
        %vm4155 = vcmp.gt.s32.totalorder %v4154, 0
        %v4156 = vsel %vm4155, %v4154, 0
        %v4157 = vshrl.u32 %v4156, 5
        %v4158 = vand.u32 %v4156, 31
        %v4159 = vsub.s32 32, %v4158
        %v4160 = vshrl.u32 683565275, %v4159
        %v4161 = vshll.u32 683565275, %v4158
        %v4162 = vshrl.u32 2475754826, %v4159
        %v4163 = vor.u32 %v4161, %v4162
        %v4164 = vshll.u32 2475754826, %v4158
        %v4165 = vshrl.u32 2131351028, %v4159
        %v4166 = vor.u32 %v4164, %v4165
        %v4167 = vshll.u32 2131351028, %v4158
        %v4168 = vshrl.u32 2102212464, %v4159
        %v4169 = vor.u32 %v4167, %v4168
        %v4170 = vshll.u32 2102212464, %v4158
        %v4171 = vshrl.u32 920167782, %v4159
        %v4172 = vor.u32 %v4170, %v4171
        %v4173 = vshll.u32 920167782, %v4158
        %v4174 = vshrl.u32 1326507024, %v4159
        %v4175 = vor.u32 %v4173, %v4174
        %vm4176 = vcmp.lt.s32.totalorder %v4157, 1
        %vm4177 = vcmp.lt.s32.totalorder %v4157, 2
        %vm4178 = vcmp.lt.s32.totalorder %v4157, 3
        %vm4179 = vcmp.lt.s32.totalorder %v4157, 4
        %v4180 = vsel %vm4176, %v4160, %v4163
        %v4181 = vsel %vm4179, %v4169, 2102212464
        %v4182 = vsel %vm4178, %v4166, %v4181
        %v4183 = vsel %vm4177, %v4180, %v4182
        %v4184 = vsel %vm4176, %v4163, %v4166
        %v4185 = vsel %vm4179, %v4172, 920167782
        %v4186 = vsel %vm4178, %v4169, %v4185
        %v4187 = vsel %vm4177, %v4184, %v4186
        %v4188 = vsel %vm4176, %v4166, %v4169
        %v4189 = vsel %vm4179, %v4175, 1326507024
        %v4190 = vsel %vm4178, %v4172, %v4189
        %v4191 = vsel %vm4177, %v4188, %v4190
        %v4192 = vshll.u32 %v4152, 8
        %v4193 = vmul.u32.u64.compose %v4192, %v4191
        %v4194 = vextract.low.u32 %v4193
        %v4195 = vextract.high.u32 %v4193
        %v4196 = vmul.u32.u64.compose %v4192, %v4187
        %v4197 = vextract.low.u32 %v4196
        %v4198 = vextract.high.u32 %v4196
        %v4199 = vmul.u32 %v4192, %v4183
        %v4200 = vadd.s32 %v4195, %v4197
        %vm4201 = vc.u32 %v4195, %v4197
        %v4202 = vadd.s32 %v4198, 1
        %v4203 = vsel %vm4201, %v4202, %v4198
        %v4204 = vadd.s32 %v4199, %v4203
        %v4205 = vadd.s32 %v4204, 536870912
        %v4206 = vshrl.u32 %v4205, 30
        %v4207 = vshll.u32 %v4206, 30
        %v4208 = vsub.s32 %v4204, %v4207
        %vm4209 = vcmp.lt.s32.totalorder %v4208, 0
        %v4210 = vsub.s32 0, %v4208
        %v4211 = vsel %vm4209, %v4210, %v4208
        %v4212 = vclz %v4211
        %v4213 = vsub.s32 %v4212, 2
        %vm4214 = vcmp.gt.s32.totalorder 0, %v4213
        %v4215 = vsel %vm4214, 0, %v4213
        %v4216 = vsub.s32 32, %v4215
        %v4217 = vshll.u32 %v4208, %v4215
        %v4218 = vshrl.u32 %v4200, %v4216
        %v4219 = vor.u32 %v4217, %v4218
        %v4220 = vsub.s32 4294967266, %v4215
        %v4221 = vadd.s32 %v4220, 127
        %v4222 = vshll.u32 %v4221, 23
        %v4223 = vor.u32 4788187, %v4222
        %v4224 = vand.u32 2147483647, %v4223
        %v4226 = vcvt.s32.f32 %v4219
        %v4227 = vmul.f32 %v4226, %v4224
        %v4228 = vxor.u32 %v4227, 2147483648
        %v4229 = vsel %vm4146, %v4228, %v4227
        %v4230 = vsub.s32 4, %v4206
        %v4231 = vsel %vm4146, %v4230, %v4206
        %v4232 = vsel %vm4145, %v2787, %v4229
        %v4233 = vsel %vm4145, 0, %v4231
        %v4234 = vcosq.f32.pop %v4232
        %v4235 = vsinq.f32.pop %v4232
        %vm4236 = vweird.f32 %v2787
        %v4237 = vadd.s32 %v4233, 3
        %v4238 = vand.u32 %v4237, 3
        %vm4239 = vcmp.lt.s32.totalorder %v4238, 2
        %vm4240 = vcmp.eq.s32.totalorder %v4238, 0
        %v4241 = vxor.u32 %v4235, 2147483648
        %v4242 = vsel %vm4240, %v4234, %v4241
        %vm4243 = vcmp.eq.s32.totalorder %v4238, 2
        %v4244 = vxor.u32 %v4234, 2147483648
        %v4245 = vsel %vm4243, %v4244, %v4235
        %v4246 = vsel %vm4239, %v4242, %v4245
        %v4247 = vsel %vm4236, nan, %v4246
        %v4248 = vand.u32 2147483647, %v2788
        %vm4249 = vcmp.le.f32.partialorder %v4248, 0.7853982
        %vm4250 = vcmp.lt.s32.totalorder %v2788, 0
        %v4251 = vand.u32 %v2788, 2139095040
        %v4252 = vshrl.u32 %v4251, 23
        %v4253 = vsub.s32 %v4252, 127
        %v4254 = vand.u32 2147483647, %v2788
        %v4255 = vand.u32 %v4254, 8388607
        %v4256 = vor.u32 %v4255, 8388608
        %v4257 = vsub.s32 0, %v4256
        %v4258 = vadd.s32 %v4253, 1
        %vm4259 = vcmp.gt.s32.totalorder %v4258, 0
        %v4260 = vsel %vm4259, %v4258, 0
        %v4261 = vshrl.u32 %v4260, 5
        %v4262 = vand.u32 %v4260, 31
        %v4263 = vsub.s32 32, %v4262
        %v4264 = vshrl.u32 683565275, %v4263
        %v4265 = vshll.u32 683565275, %v4262
        %v4266 = vshrl.u32 2475754826, %v4263
        %v4267 = vor.u32 %v4265, %v4266
        %v4268 = vshll.u32 2475754826, %v4262
        %v4269 = vshrl.u32 2131351028, %v4263
        %v4270 = vor.u32 %v4268, %v4269
        %v4271 = vshll.u32 2131351028, %v4262
        %v4272 = vshrl.u32 2102212464, %v4263
        %v4273 = vor.u32 %v4271, %v4272
        %v4274 = vshll.u32 2102212464, %v4262
        %v4275 = vshrl.u32 920167782, %v4263
        %v4276 = vor.u32 %v4274, %v4275
        %v4277 = vshll.u32 920167782, %v4262
        %v4278 = vshrl.u32 1326507024, %v4263
        %v4279 = vor.u32 %v4277, %v4278
        %vm4280 = vcmp.lt.s32.totalorder %v4261, 1
        %vm4281 = vcmp.lt.s32.totalorder %v4261, 2
        %vm4282 = vcmp.lt.s32.totalorder %v4261, 3
        %vm4283 = vcmp.lt.s32.totalorder %v4261, 4
        %v4284 = vsel %vm4280, %v4264, %v4267
        %v4285 = vsel %vm4283, %v4273, 2102212464
        %v4286 = vsel %vm4282, %v4270, %v4285
        %v4287 = vsel %vm4281, %v4284, %v4286
        %v4288 = vsel %vm4280, %v4267, %v4270
        %v4289 = vsel %vm4283, %v4276, 920167782
        %v4290 = vsel %vm4282, %v4273, %v4289
        %v4291 = vsel %vm4281, %v4288, %v4290
        %v4292 = vsel %vm4280, %v4270, %v4273
        %v4293 = vsel %vm4283, %v4279, 1326507024
        %v4294 = vsel %vm4282, %v4276, %v4293
        %v4295 = vsel %vm4281, %v4292, %v4294
        %v4296 = vshll.u32 %v4256, 8
        %v4297 = vmul.u32.u64.compose %v4296, %v4295
        %v4298 = vextract.low.u32 %v4297
        %v4299 = vextract.high.u32 %v4297
        %v4300 = vmul.u32.u64.compose %v4296, %v4291
        %v4301 = vextract.low.u32 %v4300
        %v4302 = vextract.high.u32 %v4300
        %v4303 = vmul.u32 %v4296, %v4287
        %v4304 = vadd.s32 %v4299, %v4301
        %vm4305 = vc.u32 %v4299, %v4301
        %v4306 = vadd.s32 %v4302, 1
        %v4307 = vsel %vm4305, %v4306, %v4302
        %v4308 = vadd.s32 %v4303, %v4307
        %v4309 = vadd.s32 %v4308, 536870912
        %v4310 = vshrl.u32 %v4309, 30
        %v4311 = vshll.u32 %v4310, 30
        %v4312 = vsub.s32 %v4308, %v4311
        %vm4313 = vcmp.lt.s32.totalorder %v4312, 0
        %v4314 = vsub.s32 0, %v4312
        %v4315 = vsel %vm4313, %v4314, %v4312
        %v4316 = vclz %v4315
        %v4317 = vsub.s32 %v4316, 2
        %vm4318 = vcmp.gt.s32.totalorder 0, %v4317
        %v4319 = vsel %vm4318, 0, %v4317
        %v4320 = vsub.s32 32, %v4319
        %v4321 = vshll.u32 %v4312, %v4319
        %v4322 = vshrl.u32 %v4304, %v4320
        %v4323 = vor.u32 %v4321, %v4322
        %v4324 = vsub.s32 4294967266, %v4319
        %v4325 = vadd.s32 %v4324, 127
        %v4326 = vshll.u32 %v4325, 23
        %v4327 = vor.u32 4788187, %v4326
        %v4328 = vand.u32 2147483647, %v4327
        %v4330 = vcvt.s32.f32 %v4323
        %v4331 = vmul.f32 %v4330, %v4328
        %v4332 = vxor.u32 %v4331, 2147483648
        %v4333 = vsel %vm4250, %v4332, %v4331
        %v4334 = vsub.s32 4, %v4310
        %v4335 = vsel %vm4250, %v4334, %v4310
        %v4336 = vsel %vm4249, %v2788, %v4333
        %v4337 = vsel %vm4249, 0, %v4335
        %v4338 = vcosq.f32.pop %v4336
        %v4339 = vsinq.f32.pop %v4336
        %vm4340 = vweird.f32 %v2788
        %v4341 = vadd.s32 %v4337, 3
        %v4342 = vand.u32 %v4341, 3
        %vm4343 = vcmp.lt.s32.totalorder %v4342, 2
        %vm4344 = vcmp.eq.s32.totalorder %v4342, 0
        %v4345 = vxor.u32 %v4339, 2147483648
        %v4346 = vsel %vm4344, %v4338, %v4345
        %vm4347 = vcmp.eq.s32.totalorder %v4342, 2
        %v4348 = vxor.u32 %v4338, 2147483648
        %v4349 = vsel %vm4347, %v4348, %v4339
        %v4350 = vsel %vm4343, %v4346, %v4349
        %v4351 = vsel %vm4340, nan, %v4350
        %v4352 = vand.u32 2147483647, %v2789
        %vm4353 = vcmp.le.f32.partialorder %v4352, 0.7853982
        %vm4354 = vcmp.lt.s32.totalorder %v2789, 0
        %v4355 = vand.u32 %v2789, 2139095040
        %v4356 = vshrl.u32 %v4355, 23
        %v4357 = vsub.s32 %v4356, 127
        %v4358 = vand.u32 2147483647, %v2789
        %v4359 = vand.u32 %v4358, 8388607
        %v4360 = vor.u32 %v4359, 8388608
        %v4361 = vsub.s32 0, %v4360
        %v4362 = vadd.s32 %v4357, 1
        %vm4363 = vcmp.gt.s32.totalorder %v4362, 0
        %v4364 = vsel %vm4363, %v4362, 0
        %v4365 = vshrl.u32 %v4364, 5
        %v4366 = vand.u32 %v4364, 31
        %v4367 = vsub.s32 32, %v4366
        %v4368 = vshrl.u32 683565275, %v4367
        %v4369 = vshll.u32 683565275, %v4366
        %v4370 = vshrl.u32 2475754826, %v4367
        %v4371 = vor.u32 %v4369, %v4370
        %v4372 = vshll.u32 2475754826, %v4366
        %v4373 = vshrl.u32 2131351028, %v4367
        %v4374 = vor.u32 %v4372, %v4373
        %v4375 = vshll.u32 2131351028, %v4366
        %v4376 = vshrl.u32 2102212464, %v4367
        %v4377 = vor.u32 %v4375, %v4376
        %v4378 = vshll.u32 2102212464, %v4366
        %v4379 = vshrl.u32 920167782, %v4367
        %v4380 = vor.u32 %v4378, %v4379
        %v4381 = vshll.u32 920167782, %v4366
        %v4382 = vshrl.u32 1326507024, %v4367
        %v4383 = vor.u32 %v4381, %v4382
        %vm4384 = vcmp.lt.s32.totalorder %v4365, 1
        %vm4385 = vcmp.lt.s32.totalorder %v4365, 2
        %vm4386 = vcmp.lt.s32.totalorder %v4365, 3
        %vm4387 = vcmp.lt.s32.totalorder %v4365, 4
        %v4388 = vsel %vm4384, %v4368, %v4371
        %v4389 = vsel %vm4387, %v4377, 2102212464
        %v4390 = vsel %vm4386, %v4374, %v4389
        %v4391 = vsel %vm4385, %v4388, %v4390
        %v4392 = vsel %vm4384, %v4371, %v4374
        %v4393 = vsel %vm4387, %v4380, 920167782
        %v4394 = vsel %vm4386, %v4377, %v4393
        %v4395 = vsel %vm4385, %v4392, %v4394
        %v4396 = vsel %vm4384, %v4374, %v4377
        %v4397 = vsel %vm4387, %v4383, 1326507024
        %v4398 = vsel %vm4386, %v4380, %v4397
        %v4399 = vsel %vm4385, %v4396, %v4398
        %v4400 = vshll.u32 %v4360, 8
        %v4401 = vmul.u32.u64.compose %v4400, %v4399
        %v4402 = vextract.low.u32 %v4401
        %v4403 = vextract.high.u32 %v4401
        %v4404 = vmul.u32.u64.compose %v4400, %v4395
        %v4405 = vextract.low.u32 %v4404
        %v4406 = vextract.high.u32 %v4404
        %v4407 = vmul.u32 %v4400, %v4391
        %v4408 = vadd.s32 %v4403, %v4405
        %vm4409 = vc.u32 %v4403, %v4405
        %v4410 = vadd.s32 %v4406, 1
        %v4411 = vsel %vm4409, %v4410, %v4406
        %v4412 = vadd.s32 %v4407, %v4411
        %v4413 = vadd.s32 %v4412, 536870912
        %v4414 = vshrl.u32 %v4413, 30
        %v4415 = vshll.u32 %v4414, 30
        %v4416 = vsub.s32 %v4412, %v4415
        %vm4417 = vcmp.lt.s32.totalorder %v4416, 0
        %v4418 = vsub.s32 0, %v4416
        %v4419 = vsel %vm4417, %v4418, %v4416
        %v4420 = vclz %v4419
        %v4421 = vsub.s32 %v4420, 2
        %vm4422 = vcmp.gt.s32.totalorder 0, %v4421
        %v4423 = vsel %vm4422, 0, %v4421
        %v4424 = vsub.s32 32, %v4423
        %v4425 = vshll.u32 %v4416, %v4423
        %v4426 = vshrl.u32 %v4408, %v4424
        %v4427 = vor.u32 %v4425, %v4426
        %v4428 = vsub.s32 4294967266, %v4423
        %v4429 = vadd.s32 %v4428, 127
        %v4430 = vshll.u32 %v4429, 23
        %v4431 = vor.u32 4788187, %v4430
        %v4432 = vand.u32 2147483647, %v4431
        %v4434 = vcvt.s32.f32 %v4427
        %v4435 = vmul.f32 %v4434, %v4432
        %v4436 = vxor.u32 %v4435, 2147483648
        %v4437 = vsel %vm4354, %v4436, %v4435
        %v4438 = vsub.s32 4, %v4414
        %v4439 = vsel %vm4354, %v4438, %v4414
        %v4440 = vsel %vm4353, %v2789, %v4437
        %v4441 = vsel %vm4353, 0, %v4439
        %v4442 = vcosq.f32.pop %v4440
        %v4443 = vsinq.f32.pop %v4440
        %vm4444 = vweird.f32 %v2789
        %v4445 = vadd.s32 %v4441, 3
        %v4446 = vand.u32 %v4445, 3
        %vm4447 = vcmp.lt.s32.totalorder %v4446, 2
        %vm4448 = vcmp.eq.s32.totalorder %v4446, 0
        %v4449 = vxor.u32 %v4443, 2147483648
        %v4450 = vsel %vm4448, %v4442, %v4449
        %vm4451 = vcmp.eq.s32.totalorder %v4446, 2
        %v4452 = vxor.u32 %v4442, 2147483648
        %v4453 = vsel %vm4451, %v4452, %v4443
        %v4454 = vsel %vm4447, %v4450, %v4453
        %v4455 = vsel %vm4444, nan, %v4454
        %v4456 = vand.u32 2147483647, %v2790
        %vm4457 = vcmp.le.f32.partialorder %v4456, 0.7853982
        %vm4458 = vcmp.lt.s32.totalorder %v2790, 0
        %v4459 = vand.u32 %v2790, 2139095040
        %v4460 = vshrl.u32 %v4459, 23
        %v4461 = vsub.s32 %v4460, 127
        %v4462 = vand.u32 2147483647, %v2790
        %v4463 = vand.u32 %v4462, 8388607
        %v4464 = vor.u32 %v4463, 8388608
        %v4465 = vsub.s32 0, %v4464
        %v4466 = vadd.s32 %v4461, 1
        %vm4467 = vcmp.gt.s32.totalorder %v4466, 0
        %v4468 = vsel %vm4467, %v4466, 0
        %v4469 = vshrl.u32 %v4468, 5
        %v4470 = vand.u32 %v4468, 31
        %v4471 = vsub.s32 32, %v4470
        %v4472 = vshrl.u32 683565275, %v4471
        %v4473 = vshll.u32 683565275, %v4470
        %v4474 = vshrl.u32 2475754826, %v4471
        %v4475 = vor.u32 %v4473, %v4474
        %v4476 = vshll.u32 2475754826, %v4470
        %v4477 = vshrl.u32 2131351028, %v4471
        %v4478 = vor.u32 %v4476, %v4477
        %v4479 = vshll.u32 2131351028, %v4470
        %v4480 = vshrl.u32 2102212464, %v4471
        %v4481 = vor.u32 %v4479, %v4480
        %v4482 = vshll.u32 2102212464, %v4470
        %v4483 = vshrl.u32 920167782, %v4471
        %v4484 = vor.u32 %v4482, %v4483
        %v4485 = vshll.u32 920167782, %v4470
        %v4486 = vshrl.u32 1326507024, %v4471
        %v4487 = vor.u32 %v4485, %v4486
        %vm4488 = vcmp.lt.s32.totalorder %v4469, 1
        %vm4489 = vcmp.lt.s32.totalorder %v4469, 2
        %vm4490 = vcmp.lt.s32.totalorder %v4469, 3
        %vm4491 = vcmp.lt.s32.totalorder %v4469, 4
        %v4492 = vsel %vm4488, %v4472, %v4475
        %v4493 = vsel %vm4491, %v4481, 2102212464
        %v4494 = vsel %vm4490, %v4478, %v4493
        %v4495 = vsel %vm4489, %v4492, %v4494
        %v4496 = vsel %vm4488, %v4475, %v4478
        %v4497 = vsel %vm4491, %v4484, 920167782
        %v4498 = vsel %vm4490, %v4481, %v4497
        %v4499 = vsel %vm4489, %v4496, %v4498
        %v4500 = vsel %vm4488, %v4478, %v4481
        %v4501 = vsel %vm4491, %v4487, 1326507024
        %v4502 = vsel %vm4490, %v4484, %v4501
        %v4503 = vsel %vm4489, %v4500, %v4502
        %v4504 = vshll.u32 %v4464, 8
        %v4505 = vmul.u32.u64.compose %v4504, %v4503
        %v4506 = vextract.low.u32 %v4505
        %v4507 = vextract.high.u32 %v4505
        %v4508 = vmul.u32.u64.compose %v4504, %v4499
        %v4509 = vextract.low.u32 %v4508
        %v4510 = vextract.high.u32 %v4508
        %v4511 = vmul.u32 %v4504, %v4495
        %v4512 = vadd.s32 %v4507, %v4509
        %vm4513 = vc.u32 %v4507, %v4509
        %v4514 = vadd.s32 %v4510, 1
        %v4515 = vsel %vm4513, %v4514, %v4510
        %v4516 = vadd.s32 %v4511, %v4515
        %v4517 = vadd.s32 %v4516, 536870912
        %v4518 = vshrl.u32 %v4517, 30
        %v4519 = vshll.u32 %v4518, 30
        %v4520 = vsub.s32 %v4516, %v4519
        %vm4521 = vcmp.lt.s32.totalorder %v4520, 0
        %v4522 = vsub.s32 0, %v4520
        %v4523 = vsel %vm4521, %v4522, %v4520
        %v4524 = vclz %v4523
        %v4525 = vsub.s32 %v4524, 2
        %vm4526 = vcmp.gt.s32.totalorder 0, %v4525
        %v4527 = vsel %vm4526, 0, %v4525
        %v4528 = vsub.s32 32, %v4527
        %v4529 = vshll.u32 %v4520, %v4527
        %v4530 = vshrl.u32 %v4512, %v4528
        %v4531 = vor.u32 %v4529, %v4530
        %v4532 = vsub.s32 4294967266, %v4527
        %v4533 = vadd.s32 %v4532, 127
        %v4534 = vshll.u32 %v4533, 23
        %v4535 = vor.u32 4788187, %v4534
        %v4536 = vand.u32 2147483647, %v4535
        %v4538 = vcvt.s32.f32 %v4531
        %v4539 = vmul.f32 %v4538, %v4536
        %v4540 = vxor.u32 %v4539, 2147483648
        %v4541 = vsel %vm4458, %v4540, %v4539
        %v4542 = vsub.s32 4, %v4518
        %v4543 = vsel %vm4458, %v4542, %v4518
        %v4544 = vsel %vm4457, %v2790, %v4541
        %v4545 = vsel %vm4457, 0, %v4543
        %v4546 = vcosq.f32.pop %v4544
        %v4547 = vsinq.f32.pop %v4544
        %vm4548 = vweird.f32 %v2790
        %v4549 = vadd.s32 %v4545, 3
        %v4550 = vand.u32 %v4549, 3
        %vm4551 = vcmp.lt.s32.totalorder %v4550, 2
        %vm4552 = vcmp.eq.s32.totalorder %v4550, 0
        %v4553 = vxor.u32 %v4547, 2147483648
        %v4554 = vsel %vm4552, %v4546, %v4553
        %vm4555 = vcmp.eq.s32.totalorder %v4550, 2
        %v4556 = vxor.u32 %v4546, 2147483648
        %v4557 = vsel %vm4555, %v4556, %v4547
        %v4558 = vsel %vm4551, %v4554, %v4557
        %v4559 = vsel %vm4548, nan, %v4558
        %v4560 = vand.u32 2147483647, %v2791
        %vm4561 = vcmp.le.f32.partialorder %v4560, 0.7853982
        %vm4562 = vcmp.lt.s32.totalorder %v2791, 0
        %v4563 = vand.u32 %v2791, 2139095040
        %v4564 = vshrl.u32 %v4563, 23
        %v4565 = vsub.s32 %v4564, 127
        %v4566 = vand.u32 2147483647, %v2791
        %v4567 = vand.u32 %v4566, 8388607
        %v4568 = vor.u32 %v4567, 8388608
        %v4569 = vsub.s32 0, %v4568
        %v4570 = vadd.s32 %v4565, 1
        %vm4571 = vcmp.gt.s32.totalorder %v4570, 0
        %v4572 = vsel %vm4571, %v4570, 0
        %v4573 = vshrl.u32 %v4572, 5
        %v4574 = vand.u32 %v4572, 31
        %v4575 = vsub.s32 32, %v4574
        %v4576 = vshrl.u32 683565275, %v4575
        %v4577 = vshll.u32 683565275, %v4574
        %v4578 = vshrl.u32 2475754826, %v4575
        %v4579 = vor.u32 %v4577, %v4578
        %v4580 = vshll.u32 2475754826, %v4574
        %v4581 = vshrl.u32 2131351028, %v4575
        %v4582 = vor.u32 %v4580, %v4581
        %v4583 = vshll.u32 2131351028, %v4574
        %v4584 = vshrl.u32 2102212464, %v4575
        %v4585 = vor.u32 %v4583, %v4584
        %v4586 = vshll.u32 2102212464, %v4574
        %v4587 = vshrl.u32 920167782, %v4575
        %v4588 = vor.u32 %v4586, %v4587
        %v4589 = vshll.u32 920167782, %v4574
        %v4590 = vshrl.u32 1326507024, %v4575
        %v4591 = vor.u32 %v4589, %v4590
        %vm4592 = vcmp.lt.s32.totalorder %v4573, 1
        %vm4593 = vcmp.lt.s32.totalorder %v4573, 2
        %vm4594 = vcmp.lt.s32.totalorder %v4573, 3
        %vm4595 = vcmp.lt.s32.totalorder %v4573, 4
        %v4596 = vsel %vm4592, %v4576, %v4579
        %v4597 = vsel %vm4595, %v4585, 2102212464
        %v4598 = vsel %vm4594, %v4582, %v4597
        %v4599 = vsel %vm4593, %v4596, %v4598
        %v4600 = vsel %vm4592, %v4579, %v4582
        %v4601 = vsel %vm4595, %v4588, 920167782
        %v4602 = vsel %vm4594, %v4585, %v4601
        %v4603 = vsel %vm4593, %v4600, %v4602
        %v4604 = vsel %vm4592, %v4582, %v4585
        %v4605 = vsel %vm4595, %v4591, 1326507024
        %v4606 = vsel %vm4594, %v4588, %v4605
        %v4607 = vsel %vm4593, %v4604, %v4606
        %v4608 = vshll.u32 %v4568, 8
        %v4609 = vmul.u32.u64.compose %v4608, %v4607
        %v4610 = vextract.low.u32 %v4609
        %v4611 = vextract.high.u32 %v4609
        %v4612 = vmul.u32.u64.compose %v4608, %v4603
        %v4613 = vextract.low.u32 %v4612
        %v4614 = vextract.high.u32 %v4612
        %v4615 = vmul.u32 %v4608, %v4599
        %v4616 = vadd.s32 %v4611, %v4613
        %vm4617 = vc.u32 %v4611, %v4613
        %v4618 = vadd.s32 %v4614, 1
        %v4619 = vsel %vm4617, %v4618, %v4614
        %v4620 = vadd.s32 %v4615, %v4619
        %v4621 = vadd.s32 %v4620, 536870912
        %v4622 = vshrl.u32 %v4621, 30
        %v4623 = vshll.u32 %v4622, 30
        %v4624 = vsub.s32 %v4620, %v4623
        %vm4625 = vcmp.lt.s32.totalorder %v4624, 0
        %v4626 = vsub.s32 0, %v4624
        %v4627 = vsel %vm4625, %v4626, %v4624
        %v4628 = vclz %v4627
        %v4629 = vsub.s32 %v4628, 2
        %vm4630 = vcmp.gt.s32.totalorder 0, %v4629
        %v4631 = vsel %vm4630, 0, %v4629
        %v4632 = vsub.s32 32, %v4631
        %v4633 = vshll.u32 %v4624, %v4631
        %v4634 = vshrl.u32 %v4616, %v4632
        %v4635 = vor.u32 %v4633, %v4634
        %v4636 = vsub.s32 4294967266, %v4631
        %v4637 = vadd.s32 %v4636, 127
        %v4638 = vshll.u32 %v4637, 23
        %v4639 = vor.u32 4788187, %v4638
        %v4640 = vand.u32 2147483647, %v4639
        %v4642 = vcvt.s32.f32 %v4635
        %v4643 = vmul.f32 %v4642, %v4640
        %v4644 = vxor.u32 %v4643, 2147483648
        %v4645 = vsel %vm4562, %v4644, %v4643
        %v4646 = vsub.s32 4, %v4622
        %v4647 = vsel %vm4562, %v4646, %v4622
        %v4648 = vsel %vm4561, %v2791, %v4645
        %v4649 = vsel %vm4561, 0, %v4647
        %v4650 = vcosq.f32.pop %v4648
        %v4651 = vsinq.f32.pop %v4648
        %vm4652 = vweird.f32 %v2791
        %v4653 = vadd.s32 %v4649, 3
        %v4654 = vand.u32 %v4653, 3
        %vm4655 = vcmp.lt.s32.totalorder %v4654, 2
        %vm4656 = vcmp.eq.s32.totalorder %v4654, 0
        %v4657 = vxor.u32 %v4651, 2147483648
        %v4658 = vsel %vm4656, %v4650, %v4657
        %vm4659 = vcmp.eq.s32.totalorder %v4654, 2
        %v4660 = vxor.u32 %v4650, 2147483648
        %v4661 = vsel %vm4659, %v4660, %v4651
        %v4662 = vsel %vm4655, %v4658, %v4661
        %v4663 = vsel %vm4652, nan, %v4662
        %v4664 = vpack.c.bf16 %v2999, %v2895
        %v4665 = vpack.c.bf16 %v3207, %v3103
        %v4666 = vpack.c.bf16 %v3415, %v3311
        %v4667 = vpack.c.bf16 %v3623, %v3519
        %v4668 = vpack.c.bf16 %v3831, %v3727
        %v4669 = vpack.c.bf16 %v4039, %v3935
        %v4670 = vpack.c.bf16 %v4247, %v4143
        %v4671 = vpack.c.bf16 %v4455, %v4351
        %v4672 = vpack.c.bf16 %v4663, %v4559
        %v4673 = vld [vmem:[%s4] sm:$0xf]
        %v4674 = vld [vmem:[%s4 + $0x4] sm:$0xf]
        %v4675 = vld [vmem:[%s4 + $0x8] sm:$0xf]
        %v4676 = vld [vmem:[%s4 + $0xc] sm:$0xf]
        %v4677 = vld [vmem:[%s5] sm:$0x1]
        %v4679 = vlaneseq
        %v4680 = vshrl.u32 %v4679, 7
        %v4681 = vsub.s32 0, %v4680
        %v4682 = vrot.slane %v4677, %v4681
        %v4688 = vunpack.c.l.b16 %v4673
        %v4689 = vunpack.c.l.b16 %v4674
        %v4690 = vunpack.c.l.b16 %v4675
        %v4691 = vunpack.c.l.b16 %v4676
        %v4692 = vpack.c.b16 %v4689, %v4688
        %v4693 = vpack.c.b16 %v4691, %v4690
        %v4697 = vsel %vm2443, %v4664, 0
        %v4700 = vsel %vm2443, %v4665, 0
        %v4703 = vsel %vm2443, %v4666, 0
        %v4706 = vsel %vm2443, %v4667, 0
        %v4709 = vsel %vm2443, %v4668, 0
        %v4712 = vsel %vm2443, %v4669, 0
        %v4715 = vsel %vm2443, %v4670, 0
        %v4718 = vsel %vm2443, %v4671, 0
        %v4721 = vsel %vm2443, %v4672, 0
        %4723 = vmatprep.subr.bf16.mxu0 0
        %4724 = vmatpush1.bf16.msra.mxu0 %v4692
        %4725 = vmatprep.subr.bf16.mxu0 0
        %4726 = vmatpush1.bf16.msra.mxu0 %v4693
        %4727 = vmatprep.subr.bf16.mxu0 0
        %4728 = vmatpush1.bf16.msra.mxu0 0
        %4729 = vmatprep.subr.bf16.mxu0 0
        %4730 = vmatpush1.bf16.msra.mxu0 0
        %4731 = vmatprep.subr.bf16.mxu0 0
        %4732 = vmatpush1.bf16.msra.mxu0 0
        %4733 = vmatprep.subr.bf16.mxu0 0
        %4734 = vmatpush1.bf16.msra.mxu0 0
        %4735 = vmatprep.subr.bf16.mxu0 0
        %4736 = vmatpush1.bf16.msra.mxu0 0
        %4737 = vmatprep.subr.bf16.mxu0 0
        %4738 = vmatpush1.bf16.msra.mxu0 0
        %4739 = vmatprep.subr.bf16.mxu0 0
        %4740 = vmatpush1.bf16.msra.mxu0 0
        %4741 = vmatprep.subr.bf16.mxu0 0
        %4742 = vmatpush1.bf16.msra.mxu0 0
        %4743 = vmatprep.subr.bf16.mxu0 0
        %4744 = vmatpush1.bf16.msra.mxu0 0
        %4745 = vmatprep.subr.bf16.mxu0 0
        %4746 = vmatpush1.bf16.msra.mxu0 0
        %4747 = vmatprep.subr.bf16.mxu0 0
        %4748 = vmatpush1.bf16.msra.mxu0 0
        %4749 = vmatprep.subr.bf16.mxu0 0
        %4750 = vmatpush1.bf16.msra.mxu0 0
        %4751 = vmatprep.subr.bf16.mxu0 0
        %4752 = vmatpush1.bf16.msra.mxu0 0
        %4753 = vmatprep.subr.bf16.mxu0 0
        %4754 = vmatpush1.bf16.msra.mxu0 0
        %4755 = vmatprep.mubr.bf16.mxu0 0
        %4756 = vmatmul.mubr.bf16.gmra.mrb[0].mxu0 %v4697
        %v4757 = vpop.f32.mrb[0].mxu0
        %v4758 = vadd.f32 %v4682, %v4757
        %v4759 = vpop.f32.mrb[0].mxu0
        %v4760 = vpop.f32.mrb[0].mxu0
        %v4761 = vadd.f32 %v4682, %v4760
        %v4762 = vpop.f32.mrb[0].mxu0
        %4763 = vmatprep.mubr.bf16.mxu0 0
        %4764 = vmatmul.mubr.bf16.gmra.mrb[0].mxu0 %v4700
        %v4765 = vpop.f32.mrb[0].mxu0
        %v4766 = vadd.f32 %v4682, %v4765
        %v4767 = vpop.f32.mrb[0].mxu0
        %v4768 = vpop.f32.mrb[0].mxu0
        %v4769 = vadd.f32 %v4682, %v4768
        %v4770 = vpop.f32.mrb[0].mxu0
        %4771 = vmatprep.mubr.bf16.mxu0 0
        %4772 = vmatmul.mubr.bf16.gmra.mrb[0].mxu0 %v4703
        %v4773 = vpop.f32.mrb[0].mxu0
        %v4774 = vadd.f32 %v4682, %v4773
        %v4775 = vpop.f32.mrb[0].mxu0
        %v4776 = vpop.f32.mrb[0].mxu0
        %v4777 = vadd.f32 %v4682, %v4776
        %v4778 = vpop.f32.mrb[0].mxu0
        %4779 = vmatprep.mubr.bf16.mxu0 0
        %4780 = vmatmul.mubr.bf16.gmra.mrb[0].mxu0 %v4706
        %v4781 = vpop.f32.mrb[0].mxu0
        %v4782 = vadd.f32 %v4682, %v4781
        %v4783 = vpop.f32.mrb[0].mxu0
        %v4784 = vpop.f32.mrb[0].mxu0
        %v4785 = vadd.f32 %v4682, %v4784
        %v4786 = vpop.f32.mrb[0].mxu0
        %4787 = vmatprep.mubr.bf16.mxu0 0
        %4788 = vmatmul.mubr.bf16.gmra.mrb[0].mxu0 %v4709
        %v4789 = vpop.f32.mrb[0].mxu0
        %v4790 = vadd.f32 %v4682, %v4789
        %v4791 = vpop.f32.mrb[0].mxu0
        %v4792 = vpop.f32.mrb[0].mxu0
        %v4793 = vadd.f32 %v4682, %v4792
        %v4794 = vpop.f32.mrb[0].mxu0
        %4795 = vmatprep.mubr.bf16.mxu0 0
        %4796 = vmatmul.mubr.bf16.gmra.mrb[0].mxu0 %v4712
        %v4797 = vpop.f32.mrb[0].mxu0
        %v4798 = vadd.f32 %v4682, %v4797
        %v4799 = vpop.f32.mrb[0].mxu0
        %v4800 = vpop.f32.mrb[0].mxu0
        %v4801 = vadd.f32 %v4682, %v4800
        %v4802 = vpop.f32.mrb[0].mxu0
        %4803 = vmatprep.mubr.bf16.mxu0 0
        %4804 = vmatmul.mubr.bf16.gmra.mrb[0].mxu0 %v4715
        %v4805 = vpop.f32.mrb[0].mxu0
        %v4806 = vadd.f32 %v4682, %v4805
        %v4807 = vpop.f32.mrb[0].mxu0
        %v4808 = vpop.f32.mrb[0].mxu0
        %v4809 = vadd.f32 %v4682, %v4808
        %v4810 = vpop.f32.mrb[0].mxu0
        %4811 = vmatprep.mubr.bf16.mxu0 0
        %4812 = vmatmul.mubr.bf16.gmra.mrb[0].mxu0 %v4718
        %v4813 = vpop.f32.mrb[0].mxu0
        %v4814 = vadd.f32 %v4682, %v4813
        %v4815 = vpop.f32.mrb[0].mxu0
        %v4816 = vpop.f32.mrb[0].mxu0
        %v4817 = vadd.f32 %v4682, %v4816
        %v4818 = vpop.f32.mrb[0].mxu0
        %4819 = vmatprep.mubr.bf16.mxu0 0
        %4820 = vmatmul.mubr.bf16.gmra.mrb[0].mxu0 %v4721
        %v4821 = vpop.f32.mrb[0].mxu0
        %v4822 = vadd.f32 %v4682, %v4821
        %v4823 = vpop.f32.mrb[0].mxu0
        %v4824 = vpop.f32.mrb[0].mxu0
        %v4825 = vadd.f32 %v4682, %v4824
        %v4826 = vpop.f32.mrb[0].mxu0
        %4827 = vdwg.mxu0
        %v4828 = vld [vmem:[#allocation2] sm:$0xff]
        %v4829 = vld [vmem:[#allocation2 + $0x8] sm:$0xff]
        %v4830 = vld [vmem:[#allocation2 + $0x10] sm:$0xff]
        %v4831 = vld [vmem:[#allocation2 + $0x18] sm:$0xff]
        %v4832 = vld [vmem:[#allocation2 + $0x20] sm:$0xff]
        %v4833 = vld [vmem:[#allocation2 + $0x28] sm:$0xff]
        %v4834 = vld [vmem:[#allocation2 + $0x30] sm:$0xff]
        %v4835 = vld [vmem:[#allocation2 + $0x38] sm:$0xff]
        %v4836 = vld [vmem:[#allocation2 + $0x40] sm:$0xff]
        %v4837 = vld [vmem:[#allocation2 + $0x48] sm:$0xff]
        %v4838 = vld [vmem:[#allocation2 + $0x50] sm:$0xff]
        %v4839 = vld [vmem:[#allocation2 + $0x58] sm:$0xff]
        %v4840 = vld [vmem:[#allocation2 + $0x60] sm:$0xff]
        %v4841 = vld [vmem:[#allocation2 + $0x68] sm:$0xff]
        %v4842 = vld [vmem:[#allocation2 + $0x70] sm:$0xff]
        %v4843 = vld [vmem:[#allocation2 + $0x78] sm:$0xff]
        %v4844 = vld [vmem:[#allocation2 + $0x80] sm:$0xff]
        %v4845 = vld [vmem:[#allocation2 + $0x88] sm:$0xff]
        %v4846 = vadd.f32 %v4758, %v4828
        %v4847 = vadd.f32 %v4761, %v4829
        %v4848 = vadd.f32 %v4766, %v4830
        %v4849 = vadd.f32 %v4769, %v4831
        %v4850 = vadd.f32 %v4774, %v4832
        %v4851 = vadd.f32 %v4777, %v4833
        %v4852 = vadd.f32 %v4782, %v4834
        %v4853 = vadd.f32 %v4785, %v4835
        %v4854 = vadd.f32 %v4790, %v4836
        %v4855 = vadd.f32 %v4793, %v4837
        %v4856 = vadd.f32 %v4798, %v4838
        %v4857 = vadd.f32 %v4801, %v4839
        %v4858 = vadd.f32 %v4806, %v4840
        %v4859 = vadd.f32 %v4809, %v4841
        %v4860 = vadd.f32 %v4814, %v4842
        %v4861 = vadd.f32 %v4817, %v4843
        %v4862 = vadd.f32 %v4822, %v4844
        %v4863 = vadd.f32 %v4825, %v4845
        %v4864 = vpack.c.bf16 %v4847, %v4846
        %v4865 = vpack.c.bf16 %v4849, %v4848
        %v4866 = vpack.c.bf16 %v4851, %v4850
        %v4867 = vpack.c.bf16 %v4853, %v4852
        %v4868 = vpack.c.bf16 %v4855, %v4854
        %v4869 = vpack.c.bf16 %v4857, %v4856
        %v4870 = vpack.c.bf16 %v4859, %v4858
        %v4871 = vpack.c.bf16 %v4861, %v4860
        %v4872 = vpack.c.bf16 %v4863, %v4862
        %v4882 = vunpack.c.l.b16 %v4864
        %v4883 = vunpack.c.h.b16 %v4864
        %v4884 = vunpack.c.l.b16 %v4865
        %v4885 = vunpack.c.h.b16 %v4865
        %v4886 = vunpack.c.l.b16 %v4866
        %v4887 = vunpack.c.h.b16 %v4866
        %v4888 = vunpack.c.l.b16 %v4867
        %v4889 = vunpack.c.h.b16 %v4867
        %v4890 = vunpack.c.l.b16 %v4868
        %v4891 = vunpack.c.h.b16 %v4868
        %v4892 = vunpack.c.l.b16 %v4869
        %v4893 = vunpack.c.h.b16 %v4869
        %v4894 = vunpack.c.l.b16 %v4870
        %v4895 = vunpack.c.h.b16 %v4870
        %v4896 = vunpack.c.l.b16 %v4871
        %v4897 = vunpack.c.h.b16 %v4871
        %v4898 = vunpack.c.l.b16 %v4872
        %v4899 = vunpack.c.h.b16 %v4872
        %v4900 = vpack.c.b16 %v4882, %v4882
        %v4901 = vpack.c.b16 %v4883, %v4883
        %v4902 = vpack.c.b16 %v4884, %v4884
        %v4903 = vpack.c.b16 %v4885, %v4885
        %v4904 = vpack.c.b16 %v4886, %v4886
        %v4905 = vpack.c.b16 %v4887, %v4887
        %v4906 = vpack.c.b16 %v4888, %v4888
        %v4907 = vpack.c.b16 %v4889, %v4889
        %v4908 = vpack.c.b16 %v4890, %v4890
        %v4909 = vpack.c.b16 %v4891, %v4891
        %v4910 = vpack.c.b16 %v4892, %v4892
        %v4911 = vpack.c.b16 %v4893, %v4893
        %v4912 = vpack.c.b16 %v4894, %v4894
        %v4913 = vpack.c.b16 %v4895, %v4895
        %v4914 = vpack.c.b16 %v4896, %v4896
        %v4915 = vpack.c.b16 %v4897, %v4897
        %v4916 = vpack.c.b16 %v4898, %v4898
        %v4917 = vpack.c.b16 %v4899, %v4899
        %vm4936 = vcmask 257024
        %4937 = vst.msk [vmem:[%s355] sm:$0xf] %vm4936, %v4900
        %4938 = vst.msk [vmem:[%s355 + $0x4] sm:$0xf] %vm4936, %v4901
        %4939 = vst.msk [vmem:[%s355 + $0x8] sm:$0xf] %vm4936, %v4902
        %4940 = vst.msk [vmem:[%s355 + $0xc] sm:$0xf] %vm4936, %v4903
        %4941 = vst.msk [vmem:[%s355 + $0x10] sm:$0xf] %vm4936, %v4904
        %4942 = vst.msk [vmem:[%s355 + $0x14] sm:$0xf] %vm4936, %v4905
        %4943 = vst.msk [vmem:[%s355 + $0x18] sm:$0xf] %vm4936, %v4906
        %4944 = vst.msk [vmem:[%s355 + $0x1c] sm:$0xf] %vm4936, %v4907
        %4945 = vst.msk [vmem:[%s355 + $0x20] sm:$0xf] %vm4936, %v4908
        %4946 = vst.msk [vmem:[%s355 + $0x24] sm:$0xf] %vm4936, %v4909
        %4947 = vst.msk [vmem:[%s355 + $0x28] sm:$0xf] %vm4936, %v4910
        %4948 = vst.msk [vmem:[%s355 + $0x2c] sm:$0xf] %vm4936, %v4911
        %4949 = vst.msk [vmem:[%s355 + $0x30] sm:$0xf] %vm4936, %v4912
        %4950 = vst.msk [vmem:[%s355 + $0x34] sm:$0xf] %vm4936, %v4913
        %4951 = vst.msk [vmem:[%s355 + $0x38] sm:$0xf] %vm4936, %v4914
        %4952 = vst.msk [vmem:[%s355 + $0x3c] sm:$0xf] %vm4936, %v4915
        %4953 = vst.msk [vmem:[%s355 + $0x40] sm:$0xf] %vm4936, %v4916
        %4954 = vst.msk [vmem:[%s355 + $0x44] sm:$0xf] %vm4936, %v4917
      $region60: #{tpu_custom_call.1} parent=51 // pred_fallthru
        _
      %s4955 = smul.u32 18, %s23
      %p4956 = scmp.lt.s32.totalorder %s4955, 17
      %s4957 = scalar_select %p4956, %s4955, 17
      %s4958 = smul.addr %s4957, 4
      %s4959 = scalar_lea.vmem %s8, %s4958
      // Predicated region
      $region61: #{tpu_custom_call.1} parent=51 // pred_check
        %p4960 = pneg %p229
      $region62: #{tpu_custom_call.1} parent=51 // pred_check_branch
        %4962 = sbr.rel (%p4960) target = $region64
      $region63: #{tpu_custom_call.1} parent=51 // pred_region
        %s4963 = smul.u32 18, %s23
      $region64: #{tpu_custom_call.1} parent=51 // pred_fallthru
        _
      // Predicated region
      $region65: #{tpu_custom_call.1} parent=51 // pred_check
        %p4964 = pneg %p229
      $region66: #{tpu_custom_call.1} parent=51 // pred_check_branch
        %4966 = sbr.rel (%p4964) target = $region68
      $region67: #{tpu_custom_call.1} parent=51 // pred_region
        %s4967 = smul.u32 18, %s23
        %p4968 = scmp.lt.s32.totalorder %s4967, 17
        %s4969 = scalar_select %p4968, %s4967, 17
        %s4970 = smul.addr %s4969, 4
        %s4971 = scalar_lea.vmem %s8, %s4970
      $region68: #{tpu_custom_call.1} parent=51 // pred_fallthru
        _
    $region52: #{tpu_custom_call.1} parent=5 // pred_fallthru
      _
    %p4972 = scmp.le.s32.totalorder 2, %s14
    // Predicated region
    $region69: #{tpu_custom_call.1} parent=5 // pred_check
      %p4973 = pneg %p4972
    $region70: #{tpu_custom_call.1} parent=5 // pred_check_branch
      %4975 = sbr.rel (%p4973) target = $region72
    $region71: #{tpu_custom_call.1} parent=5 // pred_region
      %s4976 = ssub.s32 %s14, 2
    $region72: #{tpu_custom_call.1} parent=5 // pred_fallthru
      _
  $region6: #{tpu_custom_call.1} parent=0 // loop_footer
    %s18 = sadd.s32 1, %s14
  $region7: #{tpu_custom_call.1} parent=0 // loop_footer_branch
    %13 = sbr.rel target = $region3
  $region8: #{tpu_custom_call.1} parent=0 // loop_exit
    _

</llo_original>
